<compile_context>
chip_gen: v5e
topology: v5e:2x2
jax: 0.10.0
libtpu: 0.0.40
codegen_flags: <defaults>
</compile_context>

<pallas_src>
import jax
import jax.numpy as jnp
from jax.experimental import pallas as pl
from jax.experimental.pallas import tpu as pltpu

EPS = 1e-5


def dense_block_kernel(x_ref, a1_ref, b1_ref, w1_ref, b2_ref, w2_ref,
                       out_ref, ysh_ref):
    """Fused BN1+ReLU -> conv1x1 -> (+b2,ReLU) -> conv3x3(pad=1) -> concat([x, fx])."""
    _, cin, hw = x_ref.shape
    _, cout, _ = out_ref.shape
    growth = cout - cin
    _, hp, w, planes = ysh_ref.shape           # (3, H+2, W, planes)
    h = hp - 2

    # ---- concat part 1: pass the original input channels straight through ----
    xc = x_ref[0]                                              # (Cin, H*W) f32
    out_ref[0, 0:cin, :] = xc.astype(out_ref.dtype)

    # ---- BN1 (folded affine) + ReLU in f32 ----
    xb = jnp.maximum(xc * a1_ref[...] + b1_ref[...], 0.0)      # (Cin, H*W)

    # ---- 1x1 conv (BN2 scale pre-folded into w1): output is pixel-major ----
    # Transpose only the small (Cin, HW) slab; MXU matmul in f32.
    y = jnp.dot(xb.T, w1_ref[...],
                preferred_element_type=jnp.float32)            # (H*W, planes)
    y = jnp.maximum(y + b2_ref[...], 0.0)                      # +b2, ReLU
    y_hwc = y.reshape(h, w, planes)                            # (H, W, planes)

    # ---- zero ONLY the halo cells that are read but never overwritten ----
    # (rows 0 and h+1 of all copies; col 0 of copy 0; col w-1 of copy 2)
    zrow = jnp.zeros((1, w, planes), jnp.float32)
    for c in range(3):
        ysh_ref[c, 0:1, :, :] = zrow
        ysh_ref[c, h + 1:h + 2, :, :] = zrow
    zcol = jnp.zeros((h, 1, planes), jnp.float32)
    ysh_ref[0, 1:h + 1, 0:1, :] = zcol
    ysh_ref[2, 1:h + 1, w - 1:w, :] = zcol

    # ---- three W-shifted copies of the zero-padded intermediate, in VMEM ----
    # ysh[kw, i, j, :] == y_padded[i, j + kw, :].  Only two stores carry a
    # sublane (W) offset; the nine tap reads below slice only the untiled H
    # axis, avoiding per-tap (8,128) relayout copies.
    ysh_ref[1, 1:h + 1, :, :] = y_hwc
    ysh_ref[0, 1:h + 1, 1:w, :] = y_hwc[:, :w - 1, :]
    ysh_ref[2, 1:h + 1, 0:w - 1, :] = y_hwc[:, 1:, :]

    # ---- 3x3 conv (padding=1): 9 accumulated MXU dots, no im2col concat ----
    fx = jnp.zeros((hw, growth), jnp.float32)
    for kh in range(3):
        for kw in range(3):
            tap = ysh_ref[kw, kh:kh + h, :, :].reshape(hw, planes)
            fx = fx + jnp.dot(tap, w2_ref[kh * 3 + kw],
                              preferred_element_type=jnp.float32)

    # ---- concat part 2: only the real growth channels are transposed ----
    out_ref[0, cin:cout, :] = fx.T.astype(out_ref.dtype)


def dense_block_forward(x_nchw, params, growth):
    n, cin, h, w = x_nchw.shape
    w1 = params["w1"]                       # (Cin, planes) f32, BN2 scale folded
    planes = w1.shape[1]
    w2 = params["w2"]                       # (9, planes, growth) f32
    cout = cin + growth
    hw = h * w

    x_flat = x_nchw.reshape(n, cin, hw)     # contiguous reshape: free

    out_flat = pl.pallas_call(
        dense_block_kernel,
        out_shape=jax.ShapeDtypeStruct((n, cout, hw), x_nchw.dtype),
        grid=(n,),
        in_specs=[
            pl.BlockSpec((1, cin, hw), lambda i: (i, 0, 0)),       # x (flat spatial)
            pl.BlockSpec((cin, 1), lambda i: (0, 0)),              # BN1 scale
            pl.BlockSpec((cin, 1), lambda i: (0, 0)),              # BN1 shift
            pl.BlockSpec((cin, planes), lambda i: (0, 0)),         # conv1 weight (s2 folded)
            pl.BlockSpec((1, planes), lambda i: (0, 0)),           # BN2 shift
            pl.BlockSpec((9, planes, growth), lambda i: (0, 0, 0)),  # conv2 taps
        ],
        out_specs=pl.BlockSpec((1, cout, hw), lambda i: (i, 0, 0)),
        scratch_shapes=[pltpu.VMEM((3, h + 2, w, planes), jnp.float32)],
        compiler_params=pltpu.CompilerParams(
            dimension_semantics=("parallel",)),
    )(x_flat, params["a1"], params["b1"], w1, params["b2"], w2)

    return out_flat.reshape(n, cout, h, w)  # contiguous reshape back: free


def init_params(key, inplanes, growth_rate):
    """Synthetic parameters; BN folded to per-channel affine; BN2 scale folded
    into the 1x1 weight (f32 fold).  No channel padding - the kernel works on
    the exact Cin/planes/growth sizes."""
    planes = growth_rate * 4                # expansion = 4
    ks = jax.random.split(key, 10)

    # BN1 (gamma, beta, running_mean, running_var)
    g1 = 1.0 + 0.1 * jax.random.normal(ks[0], (inplanes,), jnp.float32)
    be1 = 0.1 * jax.random.normal(ks[1], (inplanes,), jnp.float32)
    m1 = 0.1 * jax.random.normal(ks[2], (inplanes,), jnp.float32)
    v1 = 0.9 + 0.1 * jnp.abs(jax.random.normal(ks[3], (inplanes,), jnp.float32))
    # conv1: torch weight (planes, inplanes, 1, 1), bias=False
    w1_t = jax.random.normal(ks[4], (planes, inplanes), jnp.float32) / jnp.sqrt(inplanes)
    # BN2
    g2 = 1.0 + 0.1 * jax.random.normal(ks[5], (planes,), jnp.float32)
    be2 = 0.1 * jax.random.normal(ks[6], (planes,), jnp.float32)
    m2 = 0.1 * jax.random.normal(ks[7], (planes,), jnp.float32)
    v2 = 0.9 + 0.1 * jnp.abs(jax.random.normal(ks[8], (planes,), jnp.float32))
    # conv2: torch weight (growth_rate, planes, 3, 3), bias=False
    w2_t = jax.random.normal(ks[9], (growth_rate, planes, 3, 3),
                             jnp.float32) / jnp.sqrt(9.0 * planes)

    s1 = g1 / jnp.sqrt(v1 + EPS)
    s2 = g2 / jnp.sqrt(v2 + EPS)

    # 1x1 weight stored (Cin, planes) with the BN2 scale folded in (f32),
    # so the in-kernel matmul output is already pixel-major and BN2 reduces
    # to a shift + ReLU.
    w1_folded = (w1_t * s2[:, None]).T                          # (Cin, planes)

    # 3x3 weight: (growth, planes, 3, 3) -> (3, 3, planes, growth) -> (9, P, G)
    # tap index = kh*3 + kw, matching the kernel's accumulation order.
    w2_taps = jnp.transpose(w2_t, (2, 3, 1, 0)).reshape(9, planes, growth_rate)

    return {
        "a1": s1.reshape(inplanes, 1),
        "b1": (be1 - m1 * s1).reshape(inplanes, 1),
        "w1": w1_folded,                                        # (Cin, planes) f32
        "b2": (be2 - m2 * s2).reshape(1, planes),               # (1, planes) f32
        "w2": w2_taps,                                          # (9, planes, growth) f32
    }


def reference_forward(x_nchw, params, growth):
    """Pure-JAX mirror of the kernel math (same f32 fold points)."""
    n, cin, h, w = x_nchw.shape
    a1 = params["a1"].reshape(1, cin, 1, 1)
    b1 = params["b1"].reshape(1, cin, 1, 1)
    w1 = params["w1"]                                # (Cin, planes), s2 folded
    planes = w1.shape[1]
    b2 = params["b2"].reshape(1, 1, 1, planes)
    w2 = params["w2"]                                # (9, planes, growth)

    xb = jnp.maximum(x_nchw * a1 + b1, 0.0)
    y = jnp.einsum("nchw,cp->nhwp", xb, w1, preferred_element_type=jnp.float32)
    y = jnp.maximum(y + b2, 0.0)
    yp = jnp.pad(y, ((0, 0), (1, 1), (1, 1), (0, 0)))
    fx = jnp.zeros((n, h, w, growth), jnp.float32)
    for kh in range(3):
        for kw in range(3):
            fx = fx + jnp.einsum("nhwp,pg->nhwg",
                                 yp[:, kh:kh + h, kw:kw + w, :],
                                 w2[kh * 3 + kw],
                                 preferred_element_type=jnp.float32)
    return jnp.concatenate([x_nchw, jnp.transpose(fx, (0, 3, 1, 2))], axis=1)


if __name__ == "__main__":
    key = jax.random.PRNGKey(0)
    kx, kp = jax.random.split(key)

    N, inplanes, H, W = 2, 16, 16, 16
    growth_rate = 8

    x = jax.random.normal(kx, (N, inplanes, H, W), jnp.float32)   # NCHW like PyTorch
    params = init_params(kp, inplanes, growth_rate)

    out = jax.block_until_ready(dense_block_forward(x, params, growth_rate))
    assert out.shape == (N, inplanes + growth_rate, H, W), out.shape

    ref = jax.block_until_ready(reference_forward(x, params, growth_rate))
    err = float(jnp.max(jnp.abs(out - ref)))
    assert jnp.allclose(out, ref, atol=1e-3, rtol=1e-3), err

    print("KERNEL_OK")
</pallas_src>

<mosaic_0001>
module attributes {stable_mosaic.version = 11 : i64} {
  func.func @dense_block_kernel(%arg0: i32, %arg1: memref<1x16x256xf32, #tpu.memory_space<vmem>>, %arg2: memref<16x1xf32, #tpu.memory_space<vmem>>, %arg3: memref<16x1xf32, #tpu.memory_space<vmem>>, %arg4: memref<16x32xf32, #tpu.memory_space<vmem>>, %arg5: memref<1x32xf32, #tpu.memory_space<vmem>>, %arg6: memref<9x32x8xf32, #tpu.memory_space<vmem>>, %arg7: memref<1x24x256xf32, #tpu.memory_space<vmem>>, %arg8: memref<3x18x16x32xf32, #tpu.memory_space<vmem>>) attributes {dimension_semantics = [#tpu.dimension_semantics<parallel>], iteration_bounds = array<i64: 2>, scalar_prefetch = 0 : i64, scratch_operands = 1 : i64, tpu.core_type = #tpu.core_type<tc>, window_params = [{transform_indices = @transform_0, window_bounds = array<i64: 1, 16, 256>}, {pipeline_mode = #tpu.pipeline_mode<synchronous>, transform_indices = @transform_1, window_bounds = array<i64: 16, 1>}, {pipeline_mode = #tpu.pipeline_mode<synchronous>, transform_indices = @transform_2, window_bounds = array<i64: 16, 1>}, {pipeline_mode = #tpu.pipeline_mode<synchronous>, transform_indices = @transform_3, window_bounds = array<i64: 16, 32>}, {pipeline_mode = #tpu.pipeline_mode<synchronous>, transform_indices = @transform_4, window_bounds = array<i64: 1, 32>}, {pipeline_mode = #tpu.pipeline_mode<synchronous>, transform_indices = @transform_5, window_bounds = array<i64: 9, 32, 8>}, {transform_indices = @transform_6, window_bounds = array<i64: 1, 24, 256>}]} {
    %c0 = arith.constant 0 : index
    %c0_0 = arith.constant 0 : index
    %c0_1 = arith.constant 0 : index
    %0 = vector.load %arg1[%c0, %c0_0, %c0_1] : memref<1x16x256xf32, #tpu.memory_space<vmem>>, vector<1x16x256xf32>
    %1 = vector.shape_cast %0 : vector<1x16x256xf32> to vector<16x256xf32>
    %c0_2 = arith.constant 0 : index
    %c0_3 = arith.constant 0 : index
    %c0_4 = arith.constant 0 : index
    %2 = vector.load %arg7[%c0_2, %c0_3, %c0_4] : memref<1x24x256xf32, #tpu.memory_space<vmem>>, vector<1x16x256xf32>
    %3 = vector.shape_cast %2 : vector<1x16x256xf32> to vector<16x256xf32>
    %4 = vector.shape_cast %1 : vector<16x256xf32> to vector<1x16x256xf32>
    tpu.vector_store %arg7[%c0_2, %c0_3, %c0_4], %4 {strides = array<i32>} : memref<1x24x256xf32, #tpu.memory_space<vmem>>, vector<1x16x256xf32>,
    %c0_5 = arith.constant 0 : index
    %c0_6 = arith.constant 0 : index
    %5 = vector.load %arg2[%c0_5, %c0_6] : memref<16x1xf32, #tpu.memory_space<vmem>>, vector<16x1xf32>
    %6 = vector.broadcast %5 : vector<16x1xf32> to vector<16x256xf32>
    %7 = arith.mulf %1, %6 : vector<16x256xf32>
    %c0_7 = arith.constant 0 : index
    %c0_8 = arith.constant 0 : index
    %8 = vector.load %arg3[%c0_7, %c0_8] : memref<16x1xf32, #tpu.memory_space<vmem>>, vector<16x1xf32>
    %9 = vector.broadcast %8 : vector<16x1xf32> to vector<16x256xf32>
    %10 = arith.addf %7, %9 : vector<16x256xf32>
    %cst = arith.constant 0.000000e+00 : f32
    %11 = vector.broadcast %cst : f32 to vector<16x256xf32>
    %12 = arith.maximumf %10, %11 : vector<16x256xf32>
    %13 = tpu.transpose %12, [1, 0] : vector<16x256xf32> -> vector<256x16xf32>
    %c0_9 = arith.constant 0 : index
    %c0_10 = arith.constant 0 : index
    %14 = vector.load %arg4[%c0_9, %c0_10] : memref<16x32xf32, #tpu.memory_space<vmem>>, vector<16x32xf32>
    %cst_11 = arith.constant dense<0.000000e+00> : vector<256x32xf32>
    %15 = tpu.matmul %13, %14, %cst_11 {dimension_numbers = #tpu.dot_dimension_numbers<[1], [0], [0], [1], [0, 0, 1, 1], [], []>} : vector<256x16xf32>, vector<16x32xf32>, vector<256x32xf32> -> vector<256x32xf32>
    %c0_12 = arith.constant 0 : index
    %c0_13 = arith.constant 0 : index
    %16 = vector.load %arg5[%c0_12, %c0_13] : memref<1x32xf32, #tpu.memory_space<vmem>>, vector<1x32xf32>
    %17 = vector.broadcast %16 : vector<1x32xf32> to vector<256x32xf32>
    %18 = arith.addf %15, %17 : vector<256x32xf32>
    %cst_14 = arith.constant 0.000000e+00 : f32
    %19 = vector.broadcast %cst_14 : f32 to vector<256x32xf32>
    %20 = arith.maximumf %18, %19 : vector<256x32xf32>
    %21 = vector.shape_cast %20 : vector<256x32xf32> to vector<16x16x32xf32>
    %cst_15 = arith.constant 0.000000e+00 : f32
    %22 = vector.broadcast %cst_15 : f32 to vector<1x16x32xf32>
    %c0_16 = arith.constant 0 : index
    %c0_17 = arith.constant 0 : index
    %c0_18 = arith.constant 0 : index
    %c0_19 = arith.constant 0 : index
    %23 = vector.load %arg8[%c0_16, %c0_17, %c0_18, %c0_19] : memref<3x18x16x32xf32, #tpu.memory_space<vmem>>, vector<1x1x16x32xf32>
    %24 = vector.shape_cast %23 : vector<1x1x16x32xf32> to vector<1x16x32xf32>
    %25 = vector.shape_cast %22 : vector<1x16x32xf32> to vector<1x1x16x32xf32>
    tpu.vector_store %arg8[%c0_16, %c0_17, %c0_18, %c0_19], %25 {strides = array<i32>} : memref<3x18x16x32xf32, #tpu.memory_space<vmem>>, vector<1x1x16x32xf32>,
    %c0_20 = arith.constant 0 : index
    %c17 = arith.constant 17 : index
    %c0_21 = arith.constant 0 : index
    %c0_22 = arith.constant 0 : index
    %26 = vector.load %arg8[%c0_20, %c17, %c0_21, %c0_22] : memref<3x18x16x32xf32, #tpu.memory_space<vmem>>, vector<1x1x16x32xf32>
    %27 = vector.shape_cast %26 : vector<1x1x16x32xf32> to vector<1x16x32xf32>
    %28 = vector.shape_cast %22 : vector<1x16x32xf32> to vector<1x1x16x32xf32>
    tpu.vector_store %arg8[%c0_20, %c17, %c0_21, %c0_22], %28 {strides = array<i32>} : memref<3x18x16x32xf32, #tpu.memory_space<vmem>>, vector<1x1x16x32xf32>,
    %c1 = arith.constant 1 : index
    %c0_23 = arith.constant 0 : index
    %c0_24 = arith.constant 0 : index
    %c0_25 = arith.constant 0 : index
    %29 = vector.load %arg8[%c1, %c0_23, %c0_24, %c0_25] : memref<3x18x16x32xf32, #tpu.memory_space<vmem>>, vector<1x1x16x32xf32>
    %30 = vector.shape_cast %29 : vector<1x1x16x32xf32> to vector<1x16x32xf32>
    %31 = vector.shape_cast %22 : vector<1x16x32xf32> to vector<1x1x16x32xf32>
    tpu.vector_store %arg8[%c1, %c0_23, %c0_24, %c0_25], %31 {strides = array<i32>} : memref<3x18x16x32xf32, #tpu.memory_space<vmem>>, vector<1x1x16x32xf32>,
    %c1_26 = arith.constant 1 : index
    %c17_27 = arith.constant 17 : index
    %c0_28 = arith.constant 0 : index
    %c0_29 = arith.constant 0 : index
    %32 = vector.load %arg8[%c1_26, %c17_27, %c0_28, %c0_29] : memref<3x18x16x32xf32, #tpu.memory_space<vmem>>, vector<1x1x16x32xf32>
    %33 = vector.shape_cast %32 : vector<1x1x16x32xf32> to vector<1x16x32xf32>
    %34 = vector.shape_cast %22 : vector<1x16x32xf32> to vector<1x1x16x32xf32>
    tpu.vector_store %arg8[%c1_26, %c17_27, %c0_28, %c0_29], %34 {strides = array<i32>} : memref<3x18x16x32xf32, #tpu.memory_space<vmem>>, vector<1x1x16x32xf32>,
    %c2 = arith.constant 2 : index
    %c0_30 = arith.constant 0 : index
    %c0_31 = arith.constant 0 : index
    %c0_32 = arith.constant 0 : index
    %35 = vector.load %arg8[%c2, %c0_30, %c0_31, %c0_32] : memref<3x18x16x32xf32, #tpu.memory_space<vmem>>, vector<1x1x16x32xf32>
    %36 = vector.shape_cast %35 : vector<1x1x16x32xf32> to vector<1x16x32xf32>
    %37 = vector.shape_cast %22 : vector<1x16x32xf32> to vector<1x1x16x32xf32>
    tpu.vector_store %arg8[%c2, %c0_30, %c0_31, %c0_32], %37 {strides = array<i32>} : memref<3x18x16x32xf32, #tpu.memory_space<vmem>>, vector<1x1x16x32xf32>,
    %c2_33 = arith.constant 2 : index
    %c17_34 = arith.constant 17 : index
    %c0_35 = arith.constant 0 : index
    %c0_36 = arith.constant 0 : index
    %38 = vector.load %arg8[%c2_33, %c17_34, %c0_35, %c0_36] : memref<3x18x16x32xf32, #tpu.memory_space<vmem>>, vector<1x1x16x32xf32>
    %39 = vector.shape_cast %38 : vector<1x1x16x32xf32> to vector<1x16x32xf32>
    %40 = vector.shape_cast %22 : vector<1x16x32xf32> to vector<1x1x16x32xf32>
    tpu.vector_store %arg8[%c2_33, %c17_34, %c0_35, %c0_36], %40 {strides = array<i32>} : memref<3x18x16x32xf32, #tpu.memory_space<vmem>>, vector<1x1x16x32xf32>,
    %cst_37 = arith.constant 0.000000e+00 : f32
    %41 = vector.broadcast %cst_37 : f32 to vector<16x1x32xf32>
    %c0_38 = arith.constant 0 : index
    %c1_39 = arith.constant 1 : index
    %c0_40 = arith.constant 0 : index
    %c0_41 = arith.constant 0 : index
    %42 = vector.load %arg8[%c0_38, %c1_39, %c0_40, %c0_41] : memref<3x18x16x32xf32, #tpu.memory_space<vmem>>, vector<1x16x1x32xf32>
    %43 = vector.shape_cast %42 : vector<1x16x1x32xf32> to vector<16x1x32xf32>
    %44 = vector.shape_cast %41 : vector<16x1x32xf32> to vector<1x16x1x32xf32>
    tpu.vector_store %arg8[%c0_38, %c1_39, %c0_40, %c0_41], %44 {strides = array<i32>} : memref<3x18x16x32xf32, #tpu.memory_space<vmem>>, vector<1x16x1x32xf32>,
    %c2_42 = arith.constant 2 : index
    %c1_43 = arith.constant 1 : index
    %c15 = arith.constant 15 : index
    %c0_44 = arith.constant 0 : index
    %45 = vector.load %arg8[%c2_42, %c1_43, %c15, %c0_44] : memref<3x18x16x32xf32, #tpu.memory_space<vmem>>, vector<1x16x1x32xf32>
    %46 = vector.shape_cast %45 : vector<1x16x1x32xf32> to vector<16x1x32xf32>
    %47 = vector.shape_cast %41 : vector<16x1x32xf32> to vector<1x16x1x32xf32>
    tpu.vector_store %arg8[%c2_42, %c1_43, %c15, %c0_44], %47 {strides = array<i32>} : memref<3x18x16x32xf32, #tpu.memory_space<vmem>>, vector<1x16x1x32xf32>,
    %c1_45 = arith.constant 1 : index
    %c1_46 = arith.constant 1 : index
    %c0_47 = arith.constant 0 : index
    %c0_48 = arith.constant 0 : index
    %48 = vector.load %arg8[%c1_45, %c1_46, %c0_47, %c0_48] : memref<3x18x16x32xf32, #tpu.memory_space<vmem>>, vector<1x16x16x32xf32>
    %49 = vector.shape_cast %48 : vector<1x16x16x32xf32> to vector<16x16x32xf32>
    %50 = vector.shape_cast %21 : vector<16x16x32xf32> to vector<1x16x16x32xf32>
    tpu.vector_store %arg8[%c1_45, %c1_46, %c0_47, %c0_48], %50 {strides = array<i32>} : memref<3x18x16x32xf32, #tpu.memory_space<vmem>>, vector<1x16x16x32xf32>,
    %51 = vector.extract_strided_slice %21 {offsets = [0, 0, 0], sizes = [16, 15, 32], strides = [1, 1, 1]} : vector<16x16x32xf32> to vector<16x15x32xf32>
    %c0_49 = arith.constant 0 : index
    %c1_50 = arith.constant 1 : index
    %c1_51 = arith.constant 1 : index
    %c0_52 = arith.constant 0 : index
    %52 = vector.load %arg8[%c0_49, %c1_50, %c1_51, %c0_52] : memref<3x18x16x32xf32, #tpu.memory_space<vmem>>, vector<1x16x15x32xf32>
    %53 = vector.shape_cast %52 : vector<1x16x15x32xf32> to vector<16x15x32xf32>
    %54 = vector.shape_cast %51 : vector<16x15x32xf32> to vector<1x16x15x32xf32>
    tpu.vector_store %arg8[%c0_49, %c1_50, %c1_51, %c0_52], %54 {strides = array<i32>} : memref<3x18x16x32xf32, #tpu.memory_space<vmem>>, vector<1x16x15x32xf32>,
    %55 = vector.extract_strided_slice %21 {offsets = [0, 1, 0], sizes = [16, 15, 32], strides = [1, 1, 1]} : vector<16x16x32xf32> to vector<16x15x32xf32>
    %c2_53 = arith.constant 2 : index
    %c1_54 = arith.constant 1 : index
    %c0_55 = arith.constant 0 : index
    %c0_56 = arith.constant 0 : index
    %56 = vector.load %arg8[%c2_53, %c1_54, %c0_55, %c0_56] : memref<3x18x16x32xf32, #tpu.memory_space<vmem>>, vector<1x16x15x32xf32>
    %57 = vector.shape_cast %56 : vector<1x16x15x32xf32> to vector<16x15x32xf32>
    %58 = vector.shape_cast %55 : vector<16x15x32xf32> to vector<1x16x15x32xf32>
    tpu.vector_store %arg8[%c2_53, %c1_54, %c0_55, %c0_56], %58 {strides = array<i32>} : memref<3x18x16x32xf32, #tpu.memory_space<vmem>>, vector<1x16x15x32xf32>,
    %cst_57 = arith.constant 0.000000e+00 : f32
    %59 = vector.broadcast %cst_57 : f32 to vector<256x8xf32>
    %c0_58 = arith.constant 0 : index
    %c0_59 = arith.constant 0 : index
    %c0_60 = arith.constant 0 : index
    %c0_61 = arith.constant 0 : index
    %60 = vector.load %arg8[%c0_58, %c0_59, %c0_60, %c0_61] : memref<3x18x16x32xf32, #tpu.memory_space<vmem>>, vector<1x16x16x32xf32>
    %61 = vector.shape_cast %60 : vector<1x16x16x32xf32> to vector<16x16x32xf32>
    %62 = vector.shape_cast %61 : vector<16x16x32xf32> to vector<256x32xf32>
    %c0_62 = arith.constant 0 : index
    %c0_63 = arith.constant 0 : index
    %c0_64 = arith.constant 0 : index
    %63 = vector.load %arg6[%c0_62, %c0_63, %c0_64] : memref<9x32x8xf32, #tpu.memory_space<vmem>>, vector<1x32x8xf32>
    %64 = vector.shape_cast %63 : vector<1x32x8xf32> to vector<32x8xf32>
    %cst_65 = arith.constant dense<0.000000e+00> : vector<256x8xf32>
    %65 = tpu.matmul %62, %64, %cst_65 {dimension_numbers = #tpu.dot_dimension_numbers<[1], [0], [0], [1], [0, 0, 1, 1], [], []>} : vector<256x32xf32>, vector<32x8xf32>, vector<256x8xf32> -> vector<256x8xf32>
    %66 = arith.addf %59, %65 : vector<256x8xf32>
    %c1_66 = arith.constant 1 : index
    %c0_67 = arith.constant 0 : index
    %c0_68 = arith.constant 0 : index
    %c0_69 = arith.constant 0 : index
    %67 = vector.load %arg8[%c1_66, %c0_67, %c0_68, %c0_69] : memref<3x18x16x32xf32, #tpu.memory_space<vmem>>, vector<1x16x16x32xf32>
    %68 = vector.shape_cast %67 : vector<1x16x16x32xf32> to vector<16x16x32xf32>
    %69 = vector.shape_cast %68 : vector<16x16x32xf32> to vector<256x32xf32>
    %c1_70 = arith.constant 1 : index
    %c0_71 = arith.constant 0 : index
    %c0_72 = arith.constant 0 : index
    %70 = vector.load %arg6[%c1_70, %c0_71, %c0_72] : memref<9x32x8xf32, #tpu.memory_space<vmem>>, vector<1x32x8xf32>
    %71 = vector.shape_cast %70 : vector<1x32x8xf32> to vector<32x8xf32>
    %cst_73 = arith.constant dense<0.000000e+00> : vector<256x8xf32>
    %72 = tpu.matmul %69, %71, %cst_73 {dimension_numbers = #tpu.dot_dimension_numbers<[1], [0], [0], [1], [0, 0, 1, 1], [], []>} : vector<256x32xf32>, vector<32x8xf32>, vector<256x8xf32> -> vector<256x8xf32>
    %73 = arith.addf %66, %72 : vector<256x8xf32>
    %c2_74 = arith.constant 2 : index
    %c0_75 = arith.constant 0 : index
    %c0_76 = arith.constant 0 : index
    %c0_77 = arith.constant 0 : index
    %74 = vector.load %arg8[%c2_74, %c0_75, %c0_76, %c0_77] : memref<3x18x16x32xf32, #tpu.memory_space<vmem>>, vector<1x16x16x32xf32>
    %75 = vector.shape_cast %74 : vector<1x16x16x32xf32> to vector<16x16x32xf32>
    %76 = vector.shape_cast %75 : vector<16x16x32xf32> to vector<256x32xf32>
    %c2_78 = arith.constant 2 : index
    %c0_79 = arith.constant 0 : index
    %c0_80 = arith.constant 0 : index
    %77 = vector.load %arg6[%c2_78, %c0_79, %c0_80] : memref<9x32x8xf32, #tpu.memory_space<vmem>>, vector<1x32x8xf32>
    %78 = vector.shape_cast %77 : vector<1x32x8xf32> to vector<32x8xf32>
    %cst_81 = arith.constant dense<0.000000e+00> : vector<256x8xf32>
    %79 = tpu.matmul %76, %78, %cst_81 {dimension_numbers = #tpu.dot_dimension_numbers<[1], [0], [0], [1], [0, 0, 1, 1], [], []>} : vector<256x32xf32>, vector<32x8xf32>, vector<256x8xf32> -> vector<256x8xf32>
    %80 = arith.addf %73, %79 : vector<256x8xf32>
    %c0_82 = arith.constant 0 : index
    %c1_83 = arith.constant 1 : index
    %c0_84 = arith.constant 0 : index
    %c0_85 = arith.constant 0 : index
    %81 = vector.load %arg8[%c0_82, %c1_83, %c0_84, %c0_85] : memref<3x18x16x32xf32, #tpu.memory_space<vmem>>, vector<1x16x16x32xf32>
    %82 = vector.shape_cast %81 : vector<1x16x16x32xf32> to vector<16x16x32xf32>
    %83 = vector.shape_cast %82 : vector<16x16x32xf32> to vector<256x32xf32>
    %c3 = arith.constant 3 : index
    %c0_86 = arith.constant 0 : index
    %c0_87 = arith.constant 0 : index
    %84 = vector.load %arg6[%c3, %c0_86, %c0_87] : memref<9x32x8xf32, #tpu.memory_space<vmem>>, vector<1x32x8xf32>
    %85 = vector.shape_cast %84 : vector<1x32x8xf32> to vector<32x8xf32>
    %cst_88 = arith.constant dense<0.000000e+00> : vector<256x8xf32>
    %86 = tpu.matmul %83, %85, %cst_88 {dimension_numbers = #tpu.dot_dimension_numbers<[1], [0], [0], [1], [0, 0, 1, 1], [], []>} : vector<256x32xf32>, vector<32x8xf32>, vector<256x8xf32> -> vector<256x8xf32>
    %87 = arith.addf %80, %86 : vector<256x8xf32>
    %c1_89 = arith.constant 1 : index
    %c1_90 = arith.constant 1 : index
    %c0_91 = arith.constant 0 : index
    %c0_92 = arith.constant 0 : index
    %88 = vector.load %arg8[%c1_89, %c1_90, %c0_91, %c0_92] : memref<3x18x16x32xf32, #tpu.memory_space<vmem>>, vector<1x16x16x32xf32>
    %89 = vector.shape_cast %88 : vector<1x16x16x32xf32> to vector<16x16x32xf32>
    %90 = vector.shape_cast %89 : vector<16x16x32xf32> to vector<256x32xf32>
    %c4 = arith.constant 4 : index
    %c0_93 = arith.constant 0 : index
    %c0_94 = arith.constant 0 : index
    %91 = vector.load %arg6[%c4, %c0_93, %c0_94] : memref<9x32x8xf32, #tpu.memory_space<vmem>>, vector<1x32x8xf32>
    %92 = vector.shape_cast %91 : vector<1x32x8xf32> to vector<32x8xf32>
    %cst_95 = arith.constant dense<0.000000e+00> : vector<256x8xf32>
    %93 = tpu.matmul %90, %92, %cst_95 {dimension_numbers = #tpu.dot_dimension_numbers<[1], [0], [0], [1], [0, 0, 1, 1], [], []>} : vector<256x32xf32>, vector<32x8xf32>, vector<256x8xf32> -> vector<256x8xf32>
    %94 = arith.addf %87, %93 : vector<256x8xf32>
    %c2_96 = arith.constant 2 : index
    %c1_97 = arith.constant 1 : index
    %c0_98 = arith.constant 0 : index
    %c0_99 = arith.constant 0 : index
    %95 = vector.load %arg8[%c2_96, %c1_97, %c0_98, %c0_99] : memref<3x18x16x32xf32, #tpu.memory_space<vmem>>, vector<1x16x16x32xf32>
    %96 = vector.shape_cast %95 : vector<1x16x16x32xf32> to vector<16x16x32xf32>
    %97 = vector.shape_cast %96 : vector<16x16x32xf32> to vector<256x32xf32>
    %c5 = arith.constant 5 : index
    %c0_100 = arith.constant 0 : index
    %c0_101 = arith.constant 0 : index
    %98 = vector.load %arg6[%c5, %c0_100, %c0_101] : memref<9x32x8xf32, #tpu.memory_space<vmem>>, vector<1x32x8xf32>
    %99 = vector.shape_cast %98 : vector<1x32x8xf32> to vector<32x8xf32>
    %cst_102 = arith.constant dense<0.000000e+00> : vector<256x8xf32>
    %100 = tpu.matmul %97, %99, %cst_102 {dimension_numbers = #tpu.dot_dimension_numbers<[1], [0], [0], [1], [0, 0, 1, 1], [], []>} : vector<256x32xf32>, vector<32x8xf32>, vector<256x8xf32> -> vector<256x8xf32>
    %101 = arith.addf %94, %100 : vector<256x8xf32>
    %c0_103 = arith.constant 0 : index
    %c2_104 = arith.constant 2 : index
    %c0_105 = arith.constant 0 : index
    %c0_106 = arith.constant 0 : index
    %102 = vector.load %arg8[%c0_103, %c2_104, %c0_105, %c0_106] : memref<3x18x16x32xf32, #tpu.memory_space<vmem>>, vector<1x16x16x32xf32>
    %103 = vector.shape_cast %102 : vector<1x16x16x32xf32> to vector<16x16x32xf32>
    %104 = vector.shape_cast %103 : vector<16x16x32xf32> to vector<256x32xf32>
    %c6 = arith.constant 6 : index
    %c0_107 = arith.constant 0 : index
    %c0_108 = arith.constant 0 : index
    %105 = vector.load %arg6[%c6, %c0_107, %c0_108] : memref<9x32x8xf32, #tpu.memory_space<vmem>>, vector<1x32x8xf32>
    %106 = vector.shape_cast %105 : vector<1x32x8xf32> to vector<32x8xf32>
    %cst_109 = arith.constant dense<0.000000e+00> : vector<256x8xf32>
    %107 = tpu.matmul %104, %106, %cst_109 {dimension_numbers = #tpu.dot_dimension_numbers<[1], [0], [0], [1], [0, 0, 1, 1], [], []>} : vector<256x32xf32>, vector<32x8xf32>, vector<256x8xf32> -> vector<256x8xf32>
    %108 = arith.addf %101, %107 : vector<256x8xf32>
    %c1_110 = arith.constant 1 : index
    %c2_111 = arith.constant 2 : index
    %c0_112 = arith.constant 0 : index
    %c0_113 = arith.constant 0 : index
    %109 = vector.load %arg8[%c1_110, %c2_111, %c0_112, %c0_113] : memref<3x18x16x32xf32, #tpu.memory_space<vmem>>, vector<1x16x16x32xf32>
    %110 = vector.shape_cast %109 : vector<1x16x16x32xf32> to vector<16x16x32xf32>
    %111 = vector.shape_cast %110 : vector<16x16x32xf32> to vector<256x32xf32>
    %c7 = arith.constant 7 : index
    %c0_114 = arith.constant 0 : index
    %c0_115 = arith.constant 0 : index
    %112 = vector.load %arg6[%c7, %c0_114, %c0_115] : memref<9x32x8xf32, #tpu.memory_space<vmem>>, vector<1x32x8xf32>
    %113 = vector.shape_cast %112 : vector<1x32x8xf32> to vector<32x8xf32>
    %cst_116 = arith.constant dense<0.000000e+00> : vector<256x8xf32>
    %114 = tpu.matmul %111, %113, %cst_116 {dimension_numbers = #tpu.dot_dimension_numbers<[1], [0], [0], [1], [0, 0, 1, 1], [], []>} : vector<256x32xf32>, vector<32x8xf32>, vector<256x8xf32> -> vector<256x8xf32>
    %115 = arith.addf %108, %114 : vector<256x8xf32>
    %c2_117 = arith.constant 2 : index
    %c2_118 = arith.constant 2 : index
    %c0_119 = arith.constant 0 : index
    %c0_120 = arith.constant 0 : index
    %116 = vector.load %arg8[%c2_117, %c2_118, %c0_119, %c0_120] : memref<3x18x16x32xf32, #tpu.memory_space<vmem>>, vector<1x16x16x32xf32>
    %117 = vector.shape_cast %116 : vector<1x16x16x32xf32> to vector<16x16x32xf32>
    %118 = vector.shape_cast %117 : vector<16x16x32xf32> to vector<256x32xf32>
    %c8 = arith.constant 8 : index
    %c0_121 = arith.constant 0 : index
    %c0_122 = arith.constant 0 : index
    %119 = vector.load %arg6[%c8, %c0_121, %c0_122] : memref<9x32x8xf32, #tpu.memory_space<vmem>>, vector<1x32x8xf32>
    %120 = vector.shape_cast %119 : vector<1x32x8xf32> to vector<32x8xf32>
    %cst_123 = arith.constant dense<0.000000e+00> : vector<256x8xf32>
    %121 = tpu.matmul %118, %120, %cst_123 {dimension_numbers = #tpu.dot_dimension_numbers<[1], [0], [0], [1], [0, 0, 1, 1], [], []>} : vector<256x32xf32>, vector<32x8xf32>, vector<256x8xf32> -> vector<256x8xf32>
    %122 = arith.addf %115, %121 : vector<256x8xf32>
    %123 = tpu.transpose %122, [1, 0] : vector<256x8xf32> -> vector<8x256xf32>
    %c0_124 = arith.constant 0 : index
    %c16 = arith.constant 16 : index
    %c0_125 = arith.constant 0 : index
    %124 = vector.load %arg7[%c0_124, %c16, %c0_125] : memref<1x24x256xf32, #tpu.memory_space<vmem>>, vector<1x8x256xf32>
    %125 = vector.shape_cast %124 : vector<1x8x256xf32> to vector<8x256xf32>
    %126 = vector.shape_cast %123 : vector<8x256xf32> to vector<1x8x256xf32>
    tpu.vector_store %arg7[%c0_124, %c16, %c0_125], %126 {strides = array<i32>} : memref<1x24x256xf32, #tpu.memory_space<vmem>>, vector<1x8x256xf32>,
    return
  }
  func.func @transform_0(%arg0: i32) -> (i32, i32, i32) {
    %c0_i32 = arith.constant 0 : i32
    %c0_i32_0 = arith.constant 0 : i32
    %c0_i32_1 = arith.constant 0 : i32
    return %arg0, %c0_i32, %c0_i32_0 : i32, i32, i32
  }
  func.func @transform_1(%arg0: i32) -> (i32, i32) {
    %c0_i32 = arith.constant 0 : i32
    %c0_i32_0 = arith.constant 0 : i32
    %c0_i32_1 = arith.constant 0 : i32
    return %c0_i32, %c0_i32_0 : i32, i32
  }
  func.func @transform_2(%arg0: i32) -> (i32, i32) {
    %c0_i32 = arith.constant 0 : i32
    %c0_i32_0 = arith.constant 0 : i32
    %c0_i32_1 = arith.constant 0 : i32
    return %c0_i32, %c0_i32_0 : i32, i32
  }
  func.func @transform_3(%arg0: i32) -> (i32, i32) {
    %c0_i32 = arith.constant 0 : i32
    %c0_i32_0 = arith.constant 0 : i32
    %c0_i32_1 = arith.constant 0 : i32
    return %c0_i32, %c0_i32_0 : i32, i32
  }
  func.func @transform_4(%arg0: i32) -> (i32, i32) {
    %c0_i32 = arith.constant 0 : i32
    %c0_i32_0 = arith.constant 0 : i32
    %c0_i32_1 = arith.constant 0 : i32
    return %c0_i32, %c0_i32_0 : i32, i32
  }
  func.func @transform_5(%arg0: i32) -> (i32, i32, i32) {
    %c0_i32 = arith.constant 0 : i32
    %c0_i32_0 = arith.constant 0 : i32
    %c0_i32_1 = arith.constant 0 : i32
    %c0_i32_2 = arith.constant 0 : i32
    return %c0_i32, %c0_i32_0, %c0_i32_1 : i32, i32, i32
  }
  func.func @transform_6(%arg0: i32) -> (i32, i32, i32) {
    %c0_i32 = arith.constant 0 : i32
    %c0_i32_0 = arith.constant 0 : i32
    %c0_i32_1 = arith.constant 0 : i32
    return %arg0, %c0_i32, %c0_i32_0 : i32, i32, i32
  }
}

</mosaic_0001>

<llo_original>
// kernel: tpu_custom_call.1
$region0: #{tpu_custom_call.1}
  #allocation0 [shape = 'u32[]', space=smem, size = 0x4, offset = 0x4, fixed_abs, tag = 'smem constant byte address 0x4 - core index']
  #allocation1 [shape = 'u32[72,128]{1,0:T(1,128)}', space=vmem, size = 0x9000, scoped, tag = 'internal scratch']
  #allocation2 [shape = 'f32[3,18,16,32]{3,2,1,0:T(8,128)}', space=vmem, size = 0x6c000, scoped, tag = 'scratch operand']
  %s0 = inlined_call_operand.vmem [shape: f32[2,16,256], index: 0, kind: input, shape index: {}]
  %s1 = inlined_call_operand.vmem [shape: f32[16,1], index: 1, kind: input, shape index: {}]
  %s2 = inlined_call_operand.vmem [shape: f32[16,1], index: 2, kind: input, shape index: {}]
  %s3 = inlined_call_operand.vmem [shape: f32[16,32], index: 3, kind: input, shape index: {}]
  %s4 = inlined_call_operand.vmem [shape: f32[1,32], index: 4, kind: input, shape index: {}]
  %s5 = inlined_call_operand.vmem [shape: f32[9,32,8], index: 5, kind: input, shape index: {}]
  %s6 = inlined_call_operand.hbm [shape: f32[2,24,256], index: 6, kind: output, shape index: {}]
  %s7 = sld [smem:[#allocation0]]
  $region57: #{tpu_custom_call.1} parent=0
    _
  %s9 = ssub.s32 1, %s7
  %s10 = scalar_select 0, %s9, %s7
  $region1: #{tpu_custom_call.1} parent=0
    #allocation3 [shape = 'u8[49152]{0}', space=vmem, size = 0xc000, scoped, tag = 'output window, operand 0']
    #allocation4 [shape = 's32[2]{0}', space=sflag, size = 0x8, scoped, tag = 'scoped memory for tpu_custom_call.1']
    %11 = vsyncpa [#allocation4], 0
    %s12 = scalar_lea.sflag [#allocation4], 1
    %13 = vsyncpa %s12, 0
    loop: start=0, step=1, limit=4
    $region2: #{tpu_custom_call.1} parent=1 // loop_pre_header
      _
    $region3: #{tpu_custom_call.1} parent=1 // loop_header
      %s15 = sphi 0, %s19
      %p16 = scmp.ge.s32.totalorder %s15, 4
      %s25 = sphi 0, %s27
      %s28 = sphi 0, %s25
      %s29 = sphi 0, %s28
      %s45 = sphi 0, %s29
      %s49 = sphi 0, %s49
      %s51 = sphi 0, %s49
      %s52 = sphi 0, %s51
      %s66 = sphi 0, %s52
      %s70 = sphi 0, %s70
      %s72 = sphi 0, %s70
      %s73 = sphi 0, %s72
      %s87 = sphi 0, %s73
      %s91 = sphi 0, %s91
      %s93 = sphi 0, %s91
      %s94 = sphi 0, %s93
      %s108 = sphi 0, %s94
      %s112 = sphi 0, %s112
      %s114 = sphi 0, %s112
      %s115 = sphi 0, %s114
      %s129 = sphi 0, %s115
      %s133 = sphi 0, %s133
      %s135 = sphi 0, %s133
      %s136 = sphi 0, %s135
      %s150 = sphi 0, %s136
      %s156 = sphi 0, %s158
      %s159 = sphi 0, %s156
      %s160 = sphi 0, %s159
      %s176 = sphi 0, %s160
    $region4: #{tpu_custom_call.1} parent=1 // loop_header_branch
      %18 = sbr.rel (%p16) target = $region8
    $region5: #{tpu_custom_call.1} parent=1 // loop_body
      %s20 = ssub.s32 %s15, 1
      %s21 = ssub.s32 %s15, 2
      %s22 = sadd.s32 %s15, 1
      %s23 = ssub.s32 %s15, %s22
      %p24 = scmp.eq.s32.totalorder %s23, 0
      %s26 = sadd.s32 %s25, 1
      %s27 = scalar_select %p24, %s25, %s26
      %p30 = pneg %p24
      %p31 = scmp.eq.s32.totalorder %s15, 1
      %p32 = por %p30, %p31
      %p33 = scmp.ne.s32.totalorder %s25, %s28
      %p34 = scmp.eq.s32.totalorder %s15, 0
      %p35 = por %p33, %p34
      %p36 = scmp.ne.s32.totalorder %s25, %s28
      %p37 = scmp.eq.s32.totalorder %s20, 1
      %p38 = por %p36, %p37
      %p39 = scmp.ne.s32.totalorder %s28, %s29
      %p40 = scmp.eq.s32.totalorder %s20, 0
      %p41 = por %p39, %p40
      %p42 = scmp.ne.s32.totalorder %s28, %s29
      %p43 = scmp.eq.s32.totalorder %s21, 1
      %p44 = por %p42, %p43
      %p46 = scmp.ne.s32.totalorder %s29, %s45
      %p47 = scmp.eq.s32.totalorder %s21, 0
      %p48 = por %p46, %p47
      %s50 = sadd.s32 %s49, 1
      %p53 = scmp.eq.s32.totalorder %s15, 1
      %p54 = scmp.ne.s32.totalorder %s49, %s51
      %p55 = scmp.eq.s32.totalorder %s15, 0
      %p56 = por %p54, %p55
      %p57 = scmp.ne.s32.totalorder %s49, %s51
      %p58 = scmp.eq.s32.totalorder %s20, 1
      %p59 = por %p57, %p58
      %p60 = scmp.ne.s32.totalorder %s51, %s52
      %p61 = scmp.eq.s32.totalorder %s20, 0
      %p62 = por %p60, %p61
      %p63 = scmp.ne.s32.totalorder %s51, %s52
      %p64 = scmp.eq.s32.totalorder %s21, 1
      %p65 = por %p63, %p64
      %p67 = scmp.ne.s32.totalorder %s52, %s66
      %p68 = scmp.eq.s32.totalorder %s21, 0
      %p69 = por %p67, %p68
      %s71 = sadd.s32 %s70, 1
      %p74 = scmp.eq.s32.totalorder %s15, 1
      %p75 = scmp.ne.s32.totalorder %s70, %s72
      %p76 = scmp.eq.s32.totalorder %s15, 0
      %p77 = por %p75, %p76
      %p78 = scmp.ne.s32.totalorder %s70, %s72
      %p79 = scmp.eq.s32.totalorder %s20, 1
      %p80 = por %p78, %p79
      %p81 = scmp.ne.s32.totalorder %s72, %s73
      %p82 = scmp.eq.s32.totalorder %s20, 0
      %p83 = por %p81, %p82
      %p84 = scmp.ne.s32.totalorder %s72, %s73
      %p85 = scmp.eq.s32.totalorder %s21, 1
      %p86 = por %p84, %p85
      %p88 = scmp.ne.s32.totalorder %s73, %s87
      %p89 = scmp.eq.s32.totalorder %s21, 0
      %p90 = por %p88, %p89
      %s92 = sadd.s32 %s91, 1
      %p95 = scmp.eq.s32.totalorder %s15, 1
      %p96 = scmp.ne.s32.totalorder %s91, %s93
      %p97 = scmp.eq.s32.totalorder %s15, 0
      %p98 = por %p96, %p97
      %p99 = scmp.ne.s32.totalorder %s91, %s93
      %p100 = scmp.eq.s32.totalorder %s20, 1
      %p101 = por %p99, %p100
      %p102 = scmp.ne.s32.totalorder %s93, %s94
      %p103 = scmp.eq.s32.totalorder %s20, 0
      %p104 = por %p102, %p103
      %p105 = scmp.ne.s32.totalorder %s93, %s94
      %p106 = scmp.eq.s32.totalorder %s21, 1
      %p107 = por %p105, %p106
      %p109 = scmp.ne.s32.totalorder %s94, %s108
      %p110 = scmp.eq.s32.totalorder %s21, 0
      %p111 = por %p109, %p110
      %s113 = sadd.s32 %s112, 1
      %p116 = scmp.eq.s32.totalorder %s15, 1
      %p117 = scmp.ne.s32.totalorder %s112, %s114
      %p118 = scmp.eq.s32.totalorder %s15, 0
      %p119 = por %p117, %p118
      %p120 = scmp.ne.s32.totalorder %s112, %s114
      %p121 = scmp.eq.s32.totalorder %s20, 1
      %p122 = por %p120, %p121
      %p123 = scmp.ne.s32.totalorder %s114, %s115
      %p124 = scmp.eq.s32.totalorder %s20, 0
      %p125 = por %p123, %p124
      %p126 = scmp.ne.s32.totalorder %s114, %s115
      %p127 = scmp.eq.s32.totalorder %s21, 1
      %p128 = por %p126, %p127
      %p130 = scmp.ne.s32.totalorder %s115, %s129
      %p131 = scmp.eq.s32.totalorder %s21, 0
      %p132 = por %p130, %p131
      %s134 = sadd.s32 %s133, 1
      %p137 = scmp.eq.s32.totalorder %s15, 1
      %p138 = scmp.ne.s32.totalorder %s133, %s135
      %p139 = scmp.eq.s32.totalorder %s15, 0
      %p140 = por %p138, %p139
      %p141 = scmp.ne.s32.totalorder %s133, %s135
      %p142 = scmp.eq.s32.totalorder %s20, 1
      %p143 = por %p141, %p142
      %p144 = scmp.ne.s32.totalorder %s135, %s136
      %p145 = scmp.eq.s32.totalorder %s20, 0
      %p146 = por %p144, %p145
      %p147 = scmp.ne.s32.totalorder %s135, %s136
      %p148 = scmp.eq.s32.totalorder %s21, 1
      %p149 = por %p147, %p148
      %p151 = scmp.ne.s32.totalorder %s136, %s150
      %p152 = scmp.eq.s32.totalorder %s21, 0
      %p153 = por %p151, %p152
      %s154 = ssub.s32 %s15, %s22
      %p155 = scmp.eq.s32.totalorder %s154, 0
      %s157 = sadd.s32 %s156, 1
      %s158 = scalar_select %p155, %s156, %s157
      %p161 = pneg %p155
      %p162 = scmp.eq.s32.totalorder %s15, 1
      %p163 = por %p161, %p162
      %p164 = scmp.ne.s32.totalorder %s156, %s159
      %p165 = scmp.eq.s32.totalorder %s15, 0
      %p166 = por %p164, %p165
      %p167 = scmp.ne.s32.totalorder %s156, %s159
      %p168 = scmp.eq.s32.totalorder %s20, 1
      %p169 = por %p167, %p168
      %p170 = scmp.ne.s32.totalorder %s159, %s160
      %p171 = scmp.eq.s32.totalorder %s20, 0
      %p172 = por %p170, %p171
      %p173 = scmp.ne.s32.totalorder %s159, %s160
      %p174 = scmp.eq.s32.totalorder %s21, 1
      %p175 = por %p173, %p174
      %p177 = scmp.ne.s32.totalorder %s160, %s176
      %p178 = scmp.eq.s32.totalorder %s21, 0
      %p179 = por %p177, %p178
      %p180 = scmp.le.s32.totalorder 1, %s15
      %p181 = scmp.lt.s32.totalorder %s15, 3
      %p182 = pnand %p180, %p181
      %p183 = pneg %p182
      // Predicated region
      $region9: #{tpu_custom_call.1} parent=5 // pred_check
        _
      $region10: #{tpu_custom_call.1} parent=5 // pred_check_branch
        %185 = sbr.rel (%p182) target = $region12
      $region11: #{tpu_custom_call.1} parent=5 // pred_region
        %s186 = ssub.s32 %s15, 1
        // Predicated region
        $region13: #{tpu_custom_call.1} parent=11 // pred_check
          %p187 = pneg %p62
        $region14: #{tpu_custom_call.1} parent=11 // pred_check_branch
          %189 = sbr.rel (%p187) target = $region16
        $region15: #{tpu_custom_call.1} parent=11 // pred_region
          _
        $region16: #{tpu_custom_call.1} parent=11 // pred_fallthru
          _
        // Predicated region
        $region17: #{tpu_custom_call.1} parent=11 // pred_check
          %p190 = pneg %p83
        $region18: #{tpu_custom_call.1} parent=11 // pred_check_branch
          %192 = sbr.rel (%p190) target = $region20
        $region19: #{tpu_custom_call.1} parent=11 // pred_region
          _
        $region20: #{tpu_custom_call.1} parent=11 // pred_fallthru
          _
        // Predicated region
        $region21: #{tpu_custom_call.1} parent=11 // pred_check
          %p193 = pneg %p104
        $region22: #{tpu_custom_call.1} parent=11 // pred_check_branch
          %195 = sbr.rel (%p193) target = $region24
        $region23: #{tpu_custom_call.1} parent=11 // pred_region
          _
        $region24: #{tpu_custom_call.1} parent=11 // pred_fallthru
          _
        // Predicated region
        $region25: #{tpu_custom_call.1} parent=11 // pred_check
          %p196 = pneg %p125
        $region26: #{tpu_custom_call.1} parent=11 // pred_check_branch
          %198 = sbr.rel (%p196) target = $region28
        $region27: #{tpu_custom_call.1} parent=11 // pred_region
          _
        $region28: #{tpu_custom_call.1} parent=11 // pred_fallthru
          _
        // Predicated region
        $region29: #{tpu_custom_call.1} parent=11 // pred_check
          %p199 = pneg %p146
        $region30: #{tpu_custom_call.1} parent=11 // pred_check_branch
          %201 = sbr.rel (%p199) target = $region32
        $region31: #{tpu_custom_call.1} parent=11 // pred_region
          _
        $region32: #{tpu_custom_call.1} parent=11 // pred_fallthru
          _
      $region12: #{tpu_custom_call.1} parent=5 // pred_fallthru
        _
      %p202 = scmp.lt.s32.totalorder %s15, 2
      // Predicated region
      $region33: #{tpu_custom_call.1} parent=5 // pred_check
        %p203 = pneg %p202
      $region34: #{tpu_custom_call.1} parent=5 // pred_check_branch
        %205 = sbr.rel (%p203) target = $region36
      $region35: #{tpu_custom_call.1} parent=5 // pred_region
        // Predicated region
        $region37: #{tpu_custom_call.1} parent=35 // pred_check
          %p206 = pneg %p35
        $region38: #{tpu_custom_call.1} parent=35 // pred_check_branch
          %208 = sbr.rel (%p206) target = $region40
        $region39: #{tpu_custom_call.1} parent=35 // pred_region
          %p209 = scmp.lt.s32.totalorder %s15, 1
          %s210 = scalar_select %p209, %s15, 1
          %s211 = smul.addr %s210, 4
          %s212 = smul.addr %s211, 8
          %s213 = scalar_lea.vmem %s0, %s212
        $region40: #{tpu_custom_call.1} parent=35 // pred_fallthru
          _
      $region36: #{tpu_custom_call.1} parent=5 // pred_fallthru
        _
      %p214 = scmp.le.s32.totalorder 1, %s15
      %p215 = scmp.lt.s32.totalorder %s15, 3
      %p216 = pnand %p214, %p215
      %p217 = pneg %p216
      // Predicated region
      $region41: #{tpu_custom_call.1} parent=5 // pred_check
        _
      $region42: #{tpu_custom_call.1} parent=5 // pred_check_branch
        %219 = sbr.rel (%p216) target = $region44
      $region43: #{tpu_custom_call.1} parent=5 // pred_region
        %s220 = ssub.s32 %s15, 1
        %p221 = scmp.lt.s32.totalorder %s20, 1
        %s222 = scalar_select %p221, %s20, 1
        %s223 = smul.addr %s222, 4
        %s224 = smul.addr %s223, 8
        %s225 = scalar_lea.vmem %s0, %s224
        %p226 = pneg %p41
        %p227 = pneg %p38
        %p228 = pneg %p62
        %p229 = pneg %p59
        %p230 = pneg %p83
        %p231 = pneg %p80
        %p232 = pneg %p104
        %p233 = pneg %p101
        %p234 = pneg %p125
        %p235 = pneg %p122
        %p236 = pneg %p146
        %p237 = pneg %p143
        %p238 = pneg %p172
        %p239 = pneg %p169
        %s240 = sand.u32 %s159, 1
        %s241 = scalar_lea.sflag [#allocation4], %s240
        %s242 = sand.u32 %s159, 1
        %s243 = smul.addr %s242, 48
        %s244 = scalar_lea.vmem [#allocation3], %s243
        %p245 = scmp.lt.s32.totalorder %s20, 1
        %s246 = scalar_select %p245, %s20, 1
        %s247 = smul.addr %s246, 4
        %s248 = smul.addr %s247, 8
        %s249 = scalar_lea.vmem %s0, %s248
        %v250 = vld [vmem:[%s249] sm:$0xff]
        %v251 = vld [vmem:[%s249 + $0x8] sm:$0xff]
        %v252 = vld [vmem:[%s249 + $0x10] sm:$0xff]
        %v253 = vld [vmem:[%s249 + $0x18] sm:$0xff]
        %254 = vst [vmem:[%s244] sm:$0xff] %v250
        %255 = vst [vmem:[%s244 + $0x8] sm:$0xff] %v251
        %256 = vst [vmem:[%s244 + $0x10] sm:$0xff] %v252
        %257 = vst [vmem:[%s244 + $0x18] sm:$0xff] %v253
        %v258 = vld [vmem:[%s1] sm:$0xff]
        %v259 = vld [vmem:[%s1 + $0x8] sm:$0xff]
        %261 = vset.pattern.permute.xlu0 0
        %262 = vperm.xlu0 %261, %v258
        %v263 = vpop.permute.xlu0 %262
        %266 = vset.pattern.permute.xlu0 0
        %267 = vperm.xlu0 %266, %v259
        %v268 = vpop.permute.xlu0 %267
        %v270 = vmul.f32 %v250, %v263
        %v271 = vmul.f32 %v251, %v263
        %v272 = vmul.f32 %v252, %v268
        %v273 = vmul.f32 %v253, %v268
        %v274 = vld [vmem:[%s2] sm:$0xff]
        %v275 = vld [vmem:[%s2 + $0x8] sm:$0xff]
        %277 = vset.pattern.permute.xlu0 0
        %278 = vperm.xlu0 %277, %v274
        %v279 = vpop.permute.xlu0 %278
        %282 = vset.pattern.permute.xlu0 0
        %283 = vperm.xlu0 %282, %v275
        %v284 = vpop.permute.xlu0 %283
        %v286 = vadd.f32 %v270, %v279
        %v287 = vadd.f32 %v271, %v279
        %v288 = vadd.f32 %v272, %v284
        %v289 = vadd.f32 %v273, %v284
        %v290 = vmax.f32 %v286, 0.0
        %v291 = vmax.f32 %v287, 0.0
        %v292 = vmax.f32 %v288, 0.0
        %v293 = vmax.f32 %v289, 0.0
        %294 = vxpose.xlu0.b32.start [1/16] %v290, 128
        %295 = vxpose.xlu0.b32.cont [2/16] %v292, 128
        %296 = vxpose.xlu0.b32.cont [3/16] 0.0, 128
        %297 = vxpose.xlu0.b32.cont [4/16] 0.0, 128
        %298 = vxpose.xlu0.b32.cont [5/16] 0.0, 128
        %299 = vxpose.xlu0.b32.cont [6/16] 0.0, 128
        %300 = vxpose.xlu0.b32.cont [7/16] 0.0, 128
        %301 = vxpose.xlu0.b32.cont [8/16] 0.0, 128
        %302 = vxpose.xlu0.b32.cont [9/16] 0.0, 128
        %303 = vxpose.xlu0.b32.cont [10/16] 0.0, 128
        %304 = vxpose.xlu0.b32.cont [11/16] 0.0, 128
        %305 = vxpose.xlu0.b32.cont [12/16] 0.0, 128
        %306 = vxpose.xlu0.b32.cont [13/16] 0.0, 128
        %307 = vxpose.xlu0.b32.cont [14/16] 0.0, 128
        %308 = vxpose.xlu0.b32.cont [15/16] 0.0, 128
        %309 = vxpose.xlu0.b32.end [16/16] 0.0, 128
        %v310 = vpop.trf.xlu0
        %v311 = vpop.trf.xlu0
        %v312 = vpop.trf.xlu0
        %v313 = vpop.trf.xlu0
        %v314 = vpop.trf.xlu0
        %v315 = vpop.trf.xlu0
        %v316 = vpop.trf.xlu0
        %v317 = vpop.trf.xlu0
        %v318 = vpop.trf.xlu0
        %v319 = vpop.trf.xlu0
        %v320 = vpop.trf.xlu0
        %v321 = vpop.trf.xlu0
        %v322 = vpop.trf.xlu0
        %v323 = vpop.trf.xlu0
        %v324 = vpop.trf.xlu0
        %v325 = vpop.trf.xlu0
        %326 = vxpose.xlu0.b32.start [1/16] %v291, 128
        %327 = vxpose.xlu0.b32.cont [2/16] %v293, 128
        %328 = vxpose.xlu0.b32.cont [3/16] 0.0, 128
        %329 = vxpose.xlu0.b32.cont [4/16] 0.0, 128
        %330 = vxpose.xlu0.b32.cont [5/16] 0.0, 128
        %331 = vxpose.xlu0.b32.cont [6/16] 0.0, 128
        %332 = vxpose.xlu0.b32.cont [7/16] 0.0, 128
        %333 = vxpose.xlu0.b32.cont [8/16] 0.0, 128
        %334 = vxpose.xlu0.b32.cont [9/16] 0.0, 128
        %335 = vxpose.xlu0.b32.cont [10/16] 0.0, 128
        %336 = vxpose.xlu0.b32.cont [11/16] 0.0, 128
        %337 = vxpose.xlu0.b32.cont [12/16] 0.0, 128
        %338 = vxpose.xlu0.b32.cont [13/16] 0.0, 128
        %339 = vxpose.xlu0.b32.cont [14/16] 0.0, 128
        %340 = vxpose.xlu0.b32.cont [15/16] 0.0, 128
        %341 = vxpose.xlu0.b32.end [16/16] 0.0, 128
        %v342 = vpop.trf.xlu0
        %v343 = vpop.trf.xlu0
        %v344 = vpop.trf.xlu0
        %v345 = vpop.trf.xlu0
        %v346 = vpop.trf.xlu0
        %v347 = vpop.trf.xlu0
        %v348 = vpop.trf.xlu0
        %v349 = vpop.trf.xlu0
        %v350 = vpop.trf.xlu0
        %v351 = vpop.trf.xlu0
        %v352 = vpop.trf.xlu0
        %v353 = vpop.trf.xlu0
        %v354 = vpop.trf.xlu0
        %v355 = vpop.trf.xlu0
        %v356 = vpop.trf.xlu0
        %v357 = vpop.trf.xlu0
        %v358 = vld [vmem:[%s3] sm:$0xff]
        %v359 = vld [vmem:[%s3 + $0x8] sm:$0xff]
        %v360 = vld [vmem:[%s4] sm:$0x1]
        %v362 = vperm.slane %v360, 0
        %vm364 = vcmask 130048
        %v366 = vsel %vm364, %v310, 0
        %v369 = vsel %vm364, %v311, 0
        %v372 = vsel %vm364, %v312, 0
        %v375 = vsel %vm364, %v313, 0
        %v378 = vsel %vm364, %v314, 0
        %v381 = vsel %vm364, %v315, 0
        %v384 = vsel %vm364, %v316, 0
        %v387 = vsel %vm364, %v317, 0
        %v390 = vsel %vm364, %v318, 0
        %v393 = vsel %vm364, %v319, 0
        %v396 = vsel %vm364, %v320, 0
        %v399 = vsel %vm364, %v321, 0
        %v402 = vsel %vm364, %v322, 0
        %v405 = vsel %vm364, %v323, 0
        %v408 = vsel %vm364, %v324, 0
        %v411 = vsel %vm364, %v325, 0
        %v414 = vsel %vm364, %v342, 0
        %v417 = vsel %vm364, %v343, 0
        %v420 = vsel %vm364, %v344, 0
        %v423 = vsel %vm364, %v345, 0
        %v426 = vsel %vm364, %v346, 0
        %v429 = vsel %vm364, %v347, 0
        %v432 = vsel %vm364, %v348, 0
        %v435 = vsel %vm364, %v349, 0
        %v438 = vsel %vm364, %v350, 0
        %v441 = vsel %vm364, %v351, 0
        %v444 = vsel %vm364, %v352, 0
        %v447 = vsel %vm364, %v353, 0
        %v450 = vsel %vm364, %v354, 0
        %v453 = vsel %vm364, %v355, 0
        %v456 = vsel %vm364, %v356, 0
        %v459 = vsel %vm364, %v357, 0
        %461 = vmatpush.msra.mxu0 0.0
        %462 = vmatpush.msra.mxu0 0.0
        %463 = vmatpush.msra.mxu0 0.0
        %464 = vmatpush.msra.mxu0 0.0
        %465 = vmatpush.msra.mxu0 0.0
        %466 = vmatpush.msra.mxu0 0.0
        %467 = vmatpush.msra.mxu0 0.0
        %468 = vmatpush.msra.mxu0 0.0
        %469 = vmatpush.msra.mxu0 0.0
        %470 = vmatpush.msra.mxu0 0.0
        %471 = vmatpush.msra.mxu0 0.0
        %472 = vmatpush.msra.mxu0 0.0
        %473 = vmatpush.msra.mxu0 0.0
        %474 = vmatpush.msra.mxu0 0.0
        %475 = vmatpush.msra.mxu0 %v359
        %476 = vmatpush.msra.mxu0 %v358
        %477 = vmatmul.f32.gmra.mxu0 %v366
        %v478 = vpop.f32.mrf.mxu0
        %v479 = vadd.f32 %v362, %v478
        %480 = vmatmul.f32.gmra.mxu0 %v369
        %v481 = vpop.f32.mrf.mxu0
        %v482 = vadd.f32 %v362, %v481
        %483 = vmatmul.f32.gmra.mxu0 %v372
        %v484 = vpop.f32.mrf.mxu0
        %v485 = vadd.f32 %v362, %v484
        %486 = vmatmul.f32.gmra.mxu0 %v375
        %v487 = vpop.f32.mrf.mxu0
        %v488 = vadd.f32 %v362, %v487
        %489 = vmatmul.f32.gmra.mxu0 %v378
        %v490 = vpop.f32.mrf.mxu0
        %v491 = vadd.f32 %v362, %v490
        %492 = vmatmul.f32.gmra.mxu0 %v381
        %v493 = vpop.f32.mrf.mxu0
        %v494 = vadd.f32 %v362, %v493
        %495 = vmatmul.f32.gmra.mxu0 %v384
        %v496 = vpop.f32.mrf.mxu0
        %v497 = vadd.f32 %v362, %v496
        %498 = vmatmul.f32.gmra.mxu0 %v387
        %v499 = vpop.f32.mrf.mxu0
        %v500 = vadd.f32 %v362, %v499
        %501 = vmatmul.f32.gmra.mxu0 %v390
        %v502 = vpop.f32.mrf.mxu0
        %v503 = vadd.f32 %v362, %v502
        %504 = vmatmul.f32.gmra.mxu0 %v393
        %v505 = vpop.f32.mrf.mxu0
        %v506 = vadd.f32 %v362, %v505
        %507 = vmatmul.f32.gmra.mxu0 %v396
        %v508 = vpop.f32.mrf.mxu0
        %v509 = vadd.f32 %v362, %v508
        %510 = vmatmul.f32.gmra.mxu0 %v399
        %v511 = vpop.f32.mrf.mxu0
        %v512 = vadd.f32 %v362, %v511
        %513 = vmatmul.f32.gmra.mxu0 %v402
        %v514 = vpop.f32.mrf.mxu0
        %v515 = vadd.f32 %v362, %v514
        %516 = vmatmul.f32.gmra.mxu0 %v405
        %v517 = vpop.f32.mrf.mxu0
        %v518 = vadd.f32 %v362, %v517
        %519 = vmatmul.f32.gmra.mxu0 %v408
        %v520 = vpop.f32.mrf.mxu0
        %v521 = vadd.f32 %v362, %v520
        %522 = vmatmul.f32.gmra.mxu0 %v411
        %v523 = vpop.f32.mrf.mxu0
        %v524 = vadd.f32 %v362, %v523
        %525 = vmatmul.f32.gmra.mxu0 %v414
        %v526 = vpop.f32.mrf.mxu0
        %v527 = vadd.f32 %v362, %v526
        %528 = vmatmul.f32.gmra.mxu0 %v417
        %v529 = vpop.f32.mrf.mxu0
        %v530 = vadd.f32 %v362, %v529
        %531 = vmatmul.f32.gmra.mxu0 %v420
        %v532 = vpop.f32.mrf.mxu0
        %v533 = vadd.f32 %v362, %v532
        %534 = vmatmul.f32.gmra.mxu0 %v423
        %v535 = vpop.f32.mrf.mxu0
        %v536 = vadd.f32 %v362, %v535
        %537 = vmatmul.f32.gmra.mxu0 %v426
        %v538 = vpop.f32.mrf.mxu0
        %v539 = vadd.f32 %v362, %v538
        %540 = vmatmul.f32.gmra.mxu0 %v429
        %v541 = vpop.f32.mrf.mxu0
        %v542 = vadd.f32 %v362, %v541
        %543 = vmatmul.f32.gmra.mxu0 %v432
        %v544 = vpop.f32.mrf.mxu0
        %v545 = vadd.f32 %v362, %v544
        %546 = vmatmul.f32.gmra.mxu0 %v435
        %v547 = vpop.f32.mrf.mxu0
        %v548 = vadd.f32 %v362, %v547
        %549 = vmatmul.f32.gmra.mxu0 %v438
        %v550 = vpop.f32.mrf.mxu0
        %v551 = vadd.f32 %v362, %v550
        %552 = vmatmul.f32.gmra.mxu0 %v441
        %v553 = vpop.f32.mrf.mxu0
        %v554 = vadd.f32 %v362, %v553
        %555 = vmatmul.f32.gmra.mxu0 %v444
        %v556 = vpop.f32.mrf.mxu0
        %v557 = vadd.f32 %v362, %v556
        %558 = vmatmul.f32.gmra.mxu0 %v447
        %v559 = vpop.f32.mrf.mxu0
        %v560 = vadd.f32 %v362, %v559
        %561 = vmatmul.f32.gmra.mxu0 %v450
        %v562 = vpop.f32.mrf.mxu0
        %v563 = vadd.f32 %v362, %v562
        %564 = vmatmul.f32.gmra.mxu0 %v453
        %v565 = vpop.f32.mrf.mxu0
        %v566 = vadd.f32 %v362, %v565
        %567 = vmatmul.f32.gmra.mxu0 %v456
        %v568 = vpop.f32.mrf.mxu0
        %v569 = vadd.f32 %v362, %v568
        %570 = vmatmul.f32.gmra.mxu0 %v459
        %v571 = vpop.f32.mrf.mxu0
        %v572 = vadd.f32 %v362, %v571
        %573 = vdwg.mxu0
        %v574 = vmax.f32 %v479, 0.0
        %v575 = vmax.f32 %v482, 0.0
        %v576 = vmax.f32 %v485, 0.0
        %v577 = vmax.f32 %v488, 0.0
        %v578 = vmax.f32 %v491, 0.0
        %v579 = vmax.f32 %v494, 0.0
        %v580 = vmax.f32 %v497, 0.0
        %v581 = vmax.f32 %v500, 0.0
        %v582 = vmax.f32 %v503, 0.0
        %v583 = vmax.f32 %v506, 0.0
        %v584 = vmax.f32 %v509, 0.0
        %v585 = vmax.f32 %v512, 0.0
        %v586 = vmax.f32 %v515, 0.0
        %v587 = vmax.f32 %v518, 0.0
        %v588 = vmax.f32 %v521, 0.0
        %v589 = vmax.f32 %v524, 0.0
        %v590 = vmax.f32 %v527, 0.0
        %v591 = vmax.f32 %v530, 0.0
        %v592 = vmax.f32 %v533, 0.0
        %v593 = vmax.f32 %v536, 0.0
        %v594 = vmax.f32 %v539, 0.0
        %v595 = vmax.f32 %v542, 0.0
        %v596 = vmax.f32 %v545, 0.0
        %v597 = vmax.f32 %v548, 0.0
        %v598 = vmax.f32 %v551, 0.0
        %v599 = vmax.f32 %v554, 0.0
        %v600 = vmax.f32 %v557, 0.0
        %v601 = vmax.f32 %v560, 0.0
        %v602 = vmax.f32 %v563, 0.0
        %v603 = vmax.f32 %v566, 0.0
        %v604 = vmax.f32 %v569, 0.0
        %v605 = vmax.f32 %v572, 0.0
        %vm606 = vcmask 261120
        %607 = vst.msk [vmem:[#allocation2] sm:$0xff] %vm606, 0.0
        %608 = vst.msk [vmem:[#allocation2 + $0x8] sm:$0xff] %vm606, 0.0
        %s609 = scalar_lea.vmem [#allocation2], 272
        %610 = vst.msk [vmem:[%s609] sm:$0xff] %vm606, 0.0
        %611 = vst.msk [vmem:[%s609 + $0x8] sm:$0xff] %vm606, 0.0
        %s612 = scalar_lea.vmem [#allocation2], 288
        %613 = vst.msk [vmem:[%s612] sm:$0xff] %vm606, 0.0
        %614 = vst.msk [vmem:[%s612 + $0x8] sm:$0xff] %vm606, 0.0
        %s615 = scalar_lea.vmem [#allocation2], 560
        %616 = vst.msk [vmem:[%s615] sm:$0xff] %vm606, 0.0
        %617 = vst.msk [vmem:[%s615 + $0x8] sm:$0xff] %vm606, 0.0
        %s618 = scalar_lea.vmem [#allocation2], 576
        %619 = vst.msk [vmem:[%s618] sm:$0xff] %vm606, 0.0
        %620 = vst.msk [vmem:[%s618 + $0x8] sm:$0xff] %vm606, 0.0
        %s621 = scalar_lea.vmem [#allocation2], 848
        %622 = vst.msk [vmem:[%s621] sm:$0xff] %vm606, 0.0
        %623 = vst.msk [vmem:[%s621 + $0x8] sm:$0xff] %vm606, 0.0
        %s624 = scalar_lea.vmem [#allocation2], 16
        %vm625 = vcmask 253952
        %626 = vst.msk [vmem:[%s624] sm:$0x1] %vm625, 0.0
        %627 = vst.msk [vmem:[%s624 + $0x10] sm:$0x1] %vm625, 0.0
        %628 = vst.msk [vmem:[%s624 + $0x20] sm:$0x1] %vm625, 0.0
        %629 = vst.msk [vmem:[%s624 + $0x30] sm:$0x1] %vm625, 0.0
        %630 = vst.msk [vmem:[%s624 + $0x40] sm:$0x1] %vm625, 0.0
        %631 = vst.msk [vmem:[%s624 + $0x50] sm:$0x1] %vm625, 0.0
        %632 = vst.msk [vmem:[%s624 + $0x60] sm:$0x1] %vm625, 0.0
        %633 = vst.msk [vmem:[%s624 + $0x70] sm:$0x1] %vm625, 0.0
        %634 = vst.msk [vmem:[%s624 + $0x80] sm:$0x1] %vm625, 0.0
        %635 = vst.msk [vmem:[%s624 + $0x90] sm:$0x1] %vm625, 0.0
        %636 = vst.msk [vmem:[%s624 + $0xa0] sm:$0x1] %vm625, 0.0
        %637 = vst.msk [vmem:[%s624 + $0xb0] sm:$0x1] %vm625, 0.0
        %638 = vst.msk [vmem:[%s624 + $0xc0] sm:$0x1] %vm625, 0.0
        %639 = vst.msk [vmem:[%s624 + $0xd0] sm:$0x1] %vm625, 0.0
        %640 = vst.msk [vmem:[%s624 + $0xe0] sm:$0x1] %vm625, 0.0
        %641 = vst.msk [vmem:[%s624 + $0xf0] sm:$0x1] %vm625, 0.0
        %s642 = scalar_lea.vmem [#allocation2], 592
        %643 = vst.msk [vmem:[%s642 + $0xf] sm:$0x1] %vm625, 0.0
        %644 = vst.msk [vmem:[%s642 + $0x1f] sm:$0x1] %vm625, 0.0
        %645 = vst.msk [vmem:[%s642 + $0x2f] sm:$0x1] %vm625, 0.0
        %646 = vst.msk [vmem:[%s642 + $0x3f] sm:$0x1] %vm625, 0.0
        %647 = vst.msk [vmem:[%s642 + $0x4f] sm:$0x1] %vm625, 0.0
        %648 = vst.msk [vmem:[%s642 + $0x5f] sm:$0x1] %vm625, 0.0
        %649 = vst.msk [vmem:[%s642 + $0x6f] sm:$0x1] %vm625, 0.0
        %650 = vst.msk [vmem:[%s642 + $0x7f] sm:$0x1] %vm625, 0.0
        %651 = vst.msk [vmem:[%s642 + $0x8f] sm:$0x1] %vm625, 0.0
        %652 = vst.msk [vmem:[%s642 + $0x9f] sm:$0x1] %vm625, 0.0
        %653 = vst.msk [vmem:[%s642 + $0xaf] sm:$0x1] %vm625, 0.0
        %654 = vst.msk [vmem:[%s642 + $0xbf] sm:$0x1] %vm625, 0.0
        %655 = vst.msk [vmem:[%s642 + $0xcf] sm:$0x1] %vm625, 0.0
        %656 = vst.msk [vmem:[%s642 + $0xdf] sm:$0x1] %vm625, 0.0
        %657 = vst.msk [vmem:[%s642 + $0xef] sm:$0x1] %vm625, 0.0
        %658 = vst.msk [vmem:[%s642 + $0xff] sm:$0x1] %vm625, 0.0
        %s659 = scalar_lea.vmem [#allocation2], 304
        %660 = vst.msk [vmem:[%s659] sm:$0xff] %vm606, %v574
        %661 = vst.msk [vmem:[%s659 + $0x8] sm:$0xff] %vm606, %v575
        %662 = vst.msk [vmem:[%s659 + $0x10] sm:$0xff] %vm606, %v576
        %663 = vst.msk [vmem:[%s659 + $0x18] sm:$0xff] %vm606, %v577
        %664 = vst.msk [vmem:[%s659 + $0x20] sm:$0xff] %vm606, %v578
        %665 = vst.msk [vmem:[%s659 + $0x28] sm:$0xff] %vm606, %v579
        %666 = vst.msk [vmem:[%s659 + $0x30] sm:$0xff] %vm606, %v580
        %667 = vst.msk [vmem:[%s659 + $0x38] sm:$0xff] %vm606, %v581
        %668 = vst.msk [vmem:[%s659 + $0x40] sm:$0xff] %vm606, %v582
        %669 = vst.msk [vmem:[%s659 + $0x48] sm:$0xff] %vm606, %v583
        %670 = vst.msk [vmem:[%s659 + $0x50] sm:$0xff] %vm606, %v584
        %671 = vst.msk [vmem:[%s659 + $0x58] sm:$0xff] %vm606, %v585
        %672 = vst.msk [vmem:[%s659 + $0x60] sm:$0xff] %vm606, %v586
        %673 = vst.msk [vmem:[%s659 + $0x68] sm:$0xff] %vm606, %v587
        %674 = vst.msk [vmem:[%s659 + $0x70] sm:$0xff] %vm606, %v588
        %675 = vst.msk [vmem:[%s659 + $0x78] sm:$0xff] %vm606, %v589
        %676 = vst.msk [vmem:[%s659 + $0x80] sm:$0xff] %vm606, %v590
        %677 = vst.msk [vmem:[%s659 + $0x88] sm:$0xff] %vm606, %v591
        %678 = vst.msk [vmem:[%s659 + $0x90] sm:$0xff] %vm606, %v592
        %679 = vst.msk [vmem:[%s659 + $0x98] sm:$0xff] %vm606, %v593
        %680 = vst.msk [vmem:[%s659 + $0xa0] sm:$0xff] %vm606, %v594
        %681 = vst.msk [vmem:[%s659 + $0xa8] sm:$0xff] %vm606, %v595
        %682 = vst.msk [vmem:[%s659 + $0xb0] sm:$0xff] %vm606, %v596
        %683 = vst.msk [vmem:[%s659 + $0xb8] sm:$0xff] %vm606, %v597
        %684 = vst.msk [vmem:[%s659 + $0xc0] sm:$0xff] %vm606, %v598
        %685 = vst.msk [vmem:[%s659 + $0xc8] sm:$0xff] %vm606, %v599
        %686 = vst.msk [vmem:[%s659 + $0xd0] sm:$0xff] %vm606, %v600
        %687 = vst.msk [vmem:[%s659 + $0xd8] sm:$0xff] %vm606, %v601
        %688 = vst.msk [vmem:[%s659 + $0xe0] sm:$0xff] %vm606, %v602
        %689 = vst.msk [vmem:[%s659 + $0xe8] sm:$0xff] %vm606, %v603
        %690 = vst.msk [vmem:[%s659 + $0xf0] sm:$0xff] %vm606, %v604
        %691 = vst.msk [vmem:[%s659 + $0xf8] sm:$0xff] %vm606, %v605
        %692 = vst.msk [vmem:[%s624 + $0x1] sm:$0xff] %vm606, %v574
        %vm693 = vcmask 260096
        %694 = vst.msk [vmem:[%s624 + $0x9] sm:$0x7f] %vm693, %v575
        %695 = vst.msk [vmem:[%s624 + $0x11] sm:$0xff] %vm606, %v576
        %696 = vst.msk [vmem:[%s624 + $0x19] sm:$0x7f] %vm693, %v577
        %697 = vst.msk [vmem:[%s624 + $0x21] sm:$0xff] %vm606, %v578
        %698 = vst.msk [vmem:[%s624 + $0x29] sm:$0x7f] %vm693, %v579
        %699 = vst.msk [vmem:[%s624 + $0x31] sm:$0xff] %vm606, %v580
        %700 = vst.msk [vmem:[%s624 + $0x39] sm:$0x7f] %vm693, %v581
        %701 = vst.msk [vmem:[%s624 + $0x41] sm:$0xff] %vm606, %v582
        %702 = vst.msk [vmem:[%s624 + $0x49] sm:$0x7f] %vm693, %v583
        %703 = vst.msk [vmem:[%s624 + $0x51] sm:$0xff] %vm606, %v584
        %704 = vst.msk [vmem:[%s624 + $0x59] sm:$0x7f] %vm693, %v585
        %705 = vst.msk [vmem:[%s624 + $0x61] sm:$0xff] %vm606, %v586
        %706 = vst.msk [vmem:[%s624 + $0x69] sm:$0x7f] %vm693, %v587
        %707 = vst.msk [vmem:[%s624 + $0x71] sm:$0xff] %vm606, %v588
        %708 = vst.msk [vmem:[%s624 + $0x79] sm:$0x7f] %vm693, %v589
        %709 = vst.msk [vmem:[%s624 + $0x81] sm:$0xff] %vm606, %v590
        %710 = vst.msk [vmem:[%s624 + $0x89] sm:$0x7f] %vm693, %v591
        %711 = vst.msk [vmem:[%s624 + $0x91] sm:$0xff] %vm606, %v592
        %712 = vst.msk [vmem:[%s624 + $0x99] sm:$0x7f] %vm693, %v593
        %713 = vst.msk [vmem:[%s624 + $0xa1] sm:$0xff] %vm606, %v594
        %714 = vst.msk [vmem:[%s624 + $0xa9] sm:$0x7f] %vm693, %v595
        %715 = vst.msk [vmem:[%s624 + $0xb1] sm:$0xff] %vm606, %v596
        %716 = vst.msk [vmem:[%s624 + $0xb9] sm:$0x7f] %vm693, %v597
        %717 = vst.msk [vmem:[%s624 + $0xc1] sm:$0xff] %vm606, %v598
        %718 = vst.msk [vmem:[%s624 + $0xc9] sm:$0x7f] %vm693, %v599
        %719 = vst.msk [vmem:[%s624 + $0xd1] sm:$0xff] %vm606, %v600
        %720 = vst.msk [vmem:[%s624 + $0xd9] sm:$0x7f] %vm693, %v601
        %721 = vst.msk [vmem:[%s624 + $0xe1] sm:$0xff] %vm606, %v602
        %722 = vst.msk [vmem:[%s624 + $0xe9] sm:$0x7f] %vm693, %v603
        %723 = vst.msk [vmem:[%s624 + $0xf1] sm:$0xff] %vm606, %v604
        %724 = vst.msk [vmem:[%s624 + $0xf9] sm:$0x7f] %vm693, %v605
        %vm725 = vcmask 261121
        %726 = vst.msk [vmem:[%s642 - $0x1] sm:$0xfe] %vm725, %v574
        %727 = vst.msk [vmem:[%s642 + $0x7] sm:$0xff] %vm606, %v575
        %728 = vst.msk [vmem:[%s642 + $0xf] sm:$0xfe] %vm725, %v576
        %729 = vst.msk [vmem:[%s642 + $0x17] sm:$0xff] %vm606, %v577
        %730 = vst.msk [vmem:[%s642 + $0x1f] sm:$0xfe] %vm725, %v578
        %731 = vst.msk [vmem:[%s642 + $0x27] sm:$0xff] %vm606, %v579
        %732 = vst.msk [vmem:[%s642 + $0x2f] sm:$0xfe] %vm725, %v580
        %733 = vst.msk [vmem:[%s642 + $0x37] sm:$0xff] %vm606, %v581
        %734 = vst.msk [vmem:[%s642 + $0x3f] sm:$0xfe] %vm725, %v582
        %735 = vst.msk [vmem:[%s642 + $0x47] sm:$0xff] %vm606, %v583
        %736 = vst.msk [vmem:[%s642 + $0x4f] sm:$0xfe] %vm725, %v584
        %737 = vst.msk [vmem:[%s642 + $0x57] sm:$0xff] %vm606, %v585
        %738 = vst.msk [vmem:[%s642 + $0x5f] sm:$0xfe] %vm725, %v586
        %739 = vst.msk [vmem:[%s642 + $0x67] sm:$0xff] %vm606, %v587
        %740 = vst.msk [vmem:[%s642 + $0x6f] sm:$0xfe] %vm725, %v588
        %741 = vst.msk [vmem:[%s642 + $0x77] sm:$0xff] %vm606, %v589
        %742 = vst.msk [vmem:[%s642 + $0x7f] sm:$0xfe] %vm725, %v590
        %743 = vst.msk [vmem:[%s642 + $0x87] sm:$0xff] %vm606, %v591
        %744 = vst.msk [vmem:[%s642 + $0x8f] sm:$0xfe] %vm725, %v592
        %745 = vst.msk [vmem:[%s642 + $0x97] sm:$0xff] %vm606, %v593
        %746 = vst.msk [vmem:[%s642 + $0x9f] sm:$0xfe] %vm725, %v594
        %747 = vst.msk [vmem:[%s642 + $0xa7] sm:$0xff] %vm606, %v595
        %748 = vst.msk [vmem:[%s642 + $0xaf] sm:$0xfe] %vm725, %v596
        %749 = vst.msk [vmem:[%s642 + $0xb7] sm:$0xff] %vm606, %v597
        %750 = vst.msk [vmem:[%s642 + $0xbf] sm:$0xfe] %vm725, %v598
        %751 = vst.msk [vmem:[%s642 + $0xc7] sm:$0xff] %vm606, %v599
        %752 = vst.msk [vmem:[%s642 + $0xcf] sm:$0xfe] %vm725, %v600
        %753 = vst.msk [vmem:[%s642 + $0xd7] sm:$0xff] %vm606, %v601
        %754 = vst.msk [vmem:[%s642 + $0xdf] sm:$0xfe] %vm725, %v602
        %755 = vst.msk [vmem:[%s642 + $0xe7] sm:$0xff] %vm606, %v603
        %756 = vst.msk [vmem:[%s642 + $0xef] sm:$0xfe] %vm725, %v604
        %757 = vst.msk [vmem:[%s642 + $0xf7] sm:$0xff] %vm606, %v605
        %v758 = vld [vmem:[#allocation2] sm:$0xff]
        %v759 = vld [vmem:[#allocation2 + $0x8] sm:$0xff]
        %v760 = vld [vmem:[#allocation2 + $0x10] sm:$0xff]
        %v761 = vld [vmem:[#allocation2 + $0x18] sm:$0xff]
        %v762 = vld [vmem:[#allocation2 + $0x20] sm:$0xff]
        %v763 = vld [vmem:[#allocation2 + $0x28] sm:$0xff]
        %v764 = vld [vmem:[#allocation2 + $0x30] sm:$0xff]
        %v765 = vld [vmem:[#allocation2 + $0x38] sm:$0xff]
        %v766 = vld [vmem:[#allocation2 + $0x40] sm:$0xff]
        %v767 = vld [vmem:[#allocation2 + $0x48] sm:$0xff]
        %v768 = vld [vmem:[#allocation2 + $0x50] sm:$0xff]
        %v769 = vld [vmem:[#allocation2 + $0x58] sm:$0xff]
        %v770 = vld [vmem:[#allocation2 + $0x60] sm:$0xff]
        %v771 = vld [vmem:[#allocation2 + $0x68] sm:$0xff]
        %v772 = vld [vmem:[#allocation2 + $0x70] sm:$0xff]
        %v773 = vld [vmem:[#allocation2 + $0x78] sm:$0xff]
        %v774 = vld [vmem:[#allocation2 + $0x80] sm:$0xff]
        %v775 = vld [vmem:[#allocation2 + $0x88] sm:$0xff]
        %v776 = vld [vmem:[#allocation2 + $0x90] sm:$0xff]
        %v777 = vld [vmem:[#allocation2 + $0x98] sm:$0xff]
        %v778 = vld [vmem:[#allocation2 + $0xa0] sm:$0xff]
        %v779 = vld [vmem:[#allocation2 + $0xa8] sm:$0xff]
        %v780 = vld [vmem:[#allocation2 + $0xb0] sm:$0xff]
        %v781 = vld [vmem:[#allocation2 + $0xb8] sm:$0xff]
        %v782 = vld [vmem:[#allocation2 + $0xc0] sm:$0xff]
        %v783 = vld [vmem:[#allocation2 + $0xc8] sm:$0xff]
        %v784 = vld [vmem:[#allocation2 + $0xd0] sm:$0xff]
        %v785 = vld [vmem:[#allocation2 + $0xd8] sm:$0xff]
        %v786 = vld [vmem:[#allocation2 + $0xe0] sm:$0xff]
        %v787 = vld [vmem:[#allocation2 + $0xe8] sm:$0xff]
        %v788 = vld [vmem:[#allocation2 + $0xf0] sm:$0xff]
        %v789 = vld [vmem:[#allocation2 + $0xf8] sm:$0xff]
        %v790 = vld [vmem:[%s5] sm:$0xff]
        %v791 = vld [vmem:[%s5 + $0x8] sm:$0xff]
        %v792 = vld [vmem:[%s5 + $0x10] sm:$0xff]
        %v793 = vld [vmem:[%s5 + $0x18] sm:$0xff]
        %v794 = vld [vmem:[%s612] sm:$0xff]
        %v795 = vld [vmem:[%s612 + $0x8] sm:$0xff]
        %v796 = vld [vmem:[%s612 + $0x10] sm:$0xff]
        %v797 = vld [vmem:[%s612 + $0x18] sm:$0xff]
        %v798 = vld [vmem:[%s612 + $0x20] sm:$0xff]
        %v799 = vld [vmem:[%s612 + $0x28] sm:$0xff]
        %v800 = vld [vmem:[%s612 + $0x30] sm:$0xff]
        %v801 = vld [vmem:[%s612 + $0x38] sm:$0xff]
        %v802 = vld [vmem:[%s612 + $0x40] sm:$0xff]
        %v803 = vld [vmem:[%s612 + $0x48] sm:$0xff]
        %v804 = vld [vmem:[%s612 + $0x50] sm:$0xff]
        %v805 = vld [vmem:[%s612 + $0x58] sm:$0xff]
        %v806 = vld [vmem:[%s612 + $0x60] sm:$0xff]
        %v807 = vld [vmem:[%s612 + $0x68] sm:$0xff]
        %v808 = vld [vmem:[%s612 + $0x70] sm:$0xff]
        %v809 = vld [vmem:[%s612 + $0x78] sm:$0xff]
        %v810 = vld [vmem:[%s612 + $0x80] sm:$0xff]
        %v811 = vld [vmem:[%s612 + $0x88] sm:$0xff]
        %v812 = vld [vmem:[%s612 + $0x90] sm:$0xff]
        %v813 = vld [vmem:[%s612 + $0x98] sm:$0xff]
        %v814 = vld [vmem:[%s612 + $0xa0] sm:$0xff]
        %v815 = vld [vmem:[%s612 + $0xa8] sm:$0xff]
        %v816 = vld [vmem:[%s612 + $0xb0] sm:$0xff]
        %v817 = vld [vmem:[%s612 + $0xb8] sm:$0xff]
        %v818 = vld [vmem:[%s612 + $0xc0] sm:$0xff]
        %v819 = vld [vmem:[%s612 + $0xc8] sm:$0xff]
        %v820 = vld [vmem:[%s612 + $0xd0] sm:$0xff]
        %v821 = vld [vmem:[%s612 + $0xd8] sm:$0xff]
        %v822 = vld [vmem:[%s612 + $0xe0] sm:$0xff]
        %v823 = vld [vmem:[%s612 + $0xe8] sm:$0xff]
        %v824 = vld [vmem:[%s612 + $0xf0] sm:$0xff]
        %v825 = vld [vmem:[%s612 + $0xf8] sm:$0xff]
        %s826 = scalar_lea.vmem %s5, 32
        %v827 = vld [vmem:[%s826] sm:$0xff]
        %v828 = vld [vmem:[%s826 + $0x8] sm:$0xff]
        %v829 = vld [vmem:[%s826 + $0x10] sm:$0xff]
        %v830 = vld [vmem:[%s826 + $0x18] sm:$0xff]
        %v832 = vsel %vm606, %v794, 0
        %v835 = vsel %vm606, %v795, 0
        %v838 = vsel %vm606, %v796, 0
        %v841 = vsel %vm606, %v797, 0
        %v844 = vsel %vm606, %v798, 0
        %v847 = vsel %vm606, %v799, 0
        %v850 = vsel %vm606, %v800, 0
        %v853 = vsel %vm606, %v801, 0
        %v856 = vsel %vm606, %v802, 0
        %v859 = vsel %vm606, %v803, 0
        %v862 = vsel %vm606, %v804, 0
        %v865 = vsel %vm606, %v805, 0
        %v868 = vsel %vm606, %v806, 0
        %v871 = vsel %vm606, %v807, 0
        %v874 = vsel %vm606, %v808, 0
        %v877 = vsel %vm606, %v809, 0
        %v880 = vsel %vm606, %v810, 0
        %v883 = vsel %vm606, %v811, 0
        %v886 = vsel %vm606, %v812, 0
        %v889 = vsel %vm606, %v813, 0
        %v892 = vsel %vm606, %v814, 0
        %v895 = vsel %vm606, %v815, 0
        %v898 = vsel %vm606, %v816, 0
        %v901 = vsel %vm606, %v817, 0
        %v904 = vsel %vm606, %v818, 0
        %v907 = vsel %vm606, %v819, 0
        %v910 = vsel %vm606, %v820, 0
        %v913 = vsel %vm606, %v821, 0
        %v916 = vsel %vm606, %v822, 0
        %v919 = vsel %vm606, %v823, 0
        %v922 = vsel %vm606, %v824, 0
        %v925 = vsel %vm606, %v825, 0
        %927 = vmatpush.msra.mxu0 0.0
        %928 = vmatpush.msra.mxu0 0.0
        %929 = vmatpush.msra.mxu0 0.0
        %930 = vmatpush.msra.mxu0 0.0
        %931 = vmatpush.msra.mxu0 0.0
        %932 = vmatpush.msra.mxu0 0.0
        %933 = vmatpush.msra.mxu0 0.0
        %934 = vmatpush.msra.mxu0 0.0
        %935 = vmatpush.msra.mxu0 0.0
        %936 = vmatpush.msra.mxu0 0.0
        %937 = vmatpush.msra.mxu0 0.0
        %938 = vmatpush.msra.mxu0 0.0
        %939 = vmatpush.msra.mxu0 %v830
        %940 = vmatpush.msra.mxu0 %v829
        %941 = vmatpush.msra.mxu0 %v828
        %942 = vmatpush.msra.mxu0 %v827
        %943 = vmatmul.f32.gmra.mxu0 %v832
        %v944 = vpop.f32.mrf.mxu0
        %v945 = vadd.f32 0.0, %v944
        %946 = vmatmul.f32.gmra.mxu0 %v835
        %v947 = vpop.f32.mrf.mxu0
        %v948 = vadd.f32 0.0, %v947
        %949 = vmatmul.f32.gmra.mxu0 %v838
        %v950 = vpop.f32.mrf.mxu0
        %v951 = vadd.f32 0.0, %v950
        %952 = vmatmul.f32.gmra.mxu0 %v841
        %v953 = vpop.f32.mrf.mxu0
        %v954 = vadd.f32 0.0, %v953
        %955 = vmatmul.f32.gmra.mxu0 %v844
        %v956 = vpop.f32.mrf.mxu0
        %v957 = vadd.f32 0.0, %v956
        %958 = vmatmul.f32.gmra.mxu0 %v847
        %v959 = vpop.f32.mrf.mxu0
        %v960 = vadd.f32 0.0, %v959
        %961 = vmatmul.f32.gmra.mxu0 %v850
        %v962 = vpop.f32.mrf.mxu0
        %v963 = vadd.f32 0.0, %v962
        %964 = vmatmul.f32.gmra.mxu0 %v853
        %v965 = vpop.f32.mrf.mxu0
        %v966 = vadd.f32 0.0, %v965
        %967 = vmatmul.f32.gmra.mxu0 %v856
        %v968 = vpop.f32.mrf.mxu0
        %v969 = vadd.f32 0.0, %v968
        %970 = vmatmul.f32.gmra.mxu0 %v859
        %v971 = vpop.f32.mrf.mxu0
        %v972 = vadd.f32 0.0, %v971
        %973 = vmatmul.f32.gmra.mxu0 %v862
        %v974 = vpop.f32.mrf.mxu0
        %v975 = vadd.f32 0.0, %v974
        %976 = vmatmul.f32.gmra.mxu0 %v865
        %v977 = vpop.f32.mrf.mxu0
        %v978 = vadd.f32 0.0, %v977
        %979 = vmatmul.f32.gmra.mxu0 %v868
        %v980 = vpop.f32.mrf.mxu0
        %v981 = vadd.f32 0.0, %v980
        %982 = vmatmul.f32.gmra.mxu0 %v871
        %v983 = vpop.f32.mrf.mxu0
        %v984 = vadd.f32 0.0, %v983
        %985 = vmatmul.f32.gmra.mxu0 %v874
        %v986 = vpop.f32.mrf.mxu0
        %v987 = vadd.f32 0.0, %v986
        %988 = vmatmul.f32.gmra.mxu0 %v877
        %v989 = vpop.f32.mrf.mxu0
        %v990 = vadd.f32 0.0, %v989
        %991 = vmatmul.f32.gmra.mxu0 %v880
        %v992 = vpop.f32.mrf.mxu0
        %v993 = vadd.f32 0.0, %v992
        %994 = vmatmul.f32.gmra.mxu0 %v883
        %v995 = vpop.f32.mrf.mxu0
        %v996 = vadd.f32 0.0, %v995
        %997 = vmatmul.f32.gmra.mxu0 %v886
        %v998 = vpop.f32.mrf.mxu0
        %v999 = vadd.f32 0.0, %v998
        %1000 = vmatmul.f32.gmra.mxu0 %v889
        %v1001 = vpop.f32.mrf.mxu0
        %v1002 = vadd.f32 0.0, %v1001
        %1003 = vmatmul.f32.gmra.mxu0 %v892
        %v1004 = vpop.f32.mrf.mxu0
        %v1005 = vadd.f32 0.0, %v1004
        %1006 = vmatmul.f32.gmra.mxu0 %v895
        %v1007 = vpop.f32.mrf.mxu0
        %v1008 = vadd.f32 0.0, %v1007
        %1009 = vmatmul.f32.gmra.mxu0 %v898
        %v1010 = vpop.f32.mrf.mxu0
        %v1011 = vadd.f32 0.0, %v1010
        %1012 = vmatmul.f32.gmra.mxu0 %v901
        %v1013 = vpop.f32.mrf.mxu0
        %v1014 = vadd.f32 0.0, %v1013
        %1015 = vmatmul.f32.gmra.mxu0 %v904
        %v1016 = vpop.f32.mrf.mxu0
        %v1017 = vadd.f32 0.0, %v1016
        %1018 = vmatmul.f32.gmra.mxu0 %v907
        %v1019 = vpop.f32.mrf.mxu0
        %v1020 = vadd.f32 0.0, %v1019
        %1021 = vmatmul.f32.gmra.mxu0 %v910
        %v1022 = vpop.f32.mrf.mxu0
        %v1023 = vadd.f32 0.0, %v1022
        %1024 = vmatmul.f32.gmra.mxu0 %v913
        %v1025 = vpop.f32.mrf.mxu0
        %v1026 = vadd.f32 0.0, %v1025
        %1027 = vmatmul.f32.gmra.mxu0 %v916
        %v1028 = vpop.f32.mrf.mxu0
        %v1029 = vadd.f32 0.0, %v1028
        %1030 = vmatmul.f32.gmra.mxu0 %v919
        %v1031 = vpop.f32.mrf.mxu0
        %v1032 = vadd.f32 0.0, %v1031
        %1033 = vmatmul.f32.gmra.mxu0 %v922
        %v1034 = vpop.f32.mrf.mxu0
        %v1035 = vadd.f32 0.0, %v1034
        %1036 = vmatmul.f32.gmra.mxu0 %v925
        %v1037 = vpop.f32.mrf.mxu0
        %v1038 = vadd.f32 0.0, %v1037
        %1039 = vdwg.mxu0
        %v1041 = vsel %vm606, %v758, 0
        %v1044 = vsel %vm606, %v759, 0
        %v1047 = vsel %vm606, %v760, 0
        %v1050 = vsel %vm606, %v761, 0
        %v1053 = vsel %vm606, %v762, 0
        %v1056 = vsel %vm606, %v763, 0
        %v1059 = vsel %vm606, %v764, 0
        %v1062 = vsel %vm606, %v765, 0
        %v1065 = vsel %vm606, %v766, 0
        %v1068 = vsel %vm606, %v767, 0
        %v1071 = vsel %vm606, %v768, 0
        %v1074 = vsel %vm606, %v769, 0
        %v1077 = vsel %vm606, %v770, 0
        %v1080 = vsel %vm606, %v771, 0
        %v1083 = vsel %vm606, %v772, 0
        %v1086 = vsel %vm606, %v773, 0
        %v1089 = vsel %vm606, %v774, 0
        %v1092 = vsel %vm606, %v775, 0
        %v1095 = vsel %vm606, %v776, 0
        %v1098 = vsel %vm606, %v777, 0
        %v1101 = vsel %vm606, %v778, 0
        %v1104 = vsel %vm606, %v779, 0
        %v1107 = vsel %vm606, %v780, 0
        %v1110 = vsel %vm606, %v781, 0
        %v1113 = vsel %vm606, %v782, 0
        %v1116 = vsel %vm606, %v783, 0
        %v1119 = vsel %vm606, %v784, 0
        %v1122 = vsel %vm606, %v785, 0
        %v1125 = vsel %vm606, %v786, 0
        %v1128 = vsel %vm606, %v787, 0
        %v1131 = vsel %vm606, %v788, 0
        %v1134 = vsel %vm606, %v789, 0
        %1136 = vmatpush.msra.mxu0 0.0
        %1137 = vmatpush.msra.mxu0 0.0
        %1138 = vmatpush.msra.mxu0 0.0
        %1139 = vmatpush.msra.mxu0 0.0
        %1140 = vmatpush.msra.mxu0 0.0
        %1141 = vmatpush.msra.mxu0 0.0
        %1142 = vmatpush.msra.mxu0 0.0
        %1143 = vmatpush.msra.mxu0 0.0
        %1144 = vmatpush.msra.mxu0 0.0
        %1145 = vmatpush.msra.mxu0 0.0
        %1146 = vmatpush.msra.mxu0 0.0
        %1147 = vmatpush.msra.mxu0 0.0
        %1148 = vmatpush.msra.mxu0 %v793
        %1149 = vmatpush.msra.mxu0 %v792
        %1150 = vmatpush.msra.mxu0 %v791
        %1151 = vmatpush.msra.mxu0 %v790
        %1152 = vmatmul.f32.gmra.mxu0 %v1041
        %v1153 = vpop.f32.mrf.mxu0
        %v1154 = vadd.f32 %v945, %v1153
        %1155 = vmatmul.f32.gmra.mxu0 %v1044
        %v1156 = vpop.f32.mrf.mxu0
        %v1157 = vadd.f32 %v948, %v1156
        %1158 = vmatmul.f32.gmra.mxu0 %v1047
        %v1159 = vpop.f32.mrf.mxu0
        %v1160 = vadd.f32 %v951, %v1159
        %1161 = vmatmul.f32.gmra.mxu0 %v1050
        %v1162 = vpop.f32.mrf.mxu0
        %v1163 = vadd.f32 %v954, %v1162
        %1164 = vmatmul.f32.gmra.mxu0 %v1053
        %v1165 = vpop.f32.mrf.mxu0
        %v1166 = vadd.f32 %v957, %v1165
        %1167 = vmatmul.f32.gmra.mxu0 %v1056
        %v1168 = vpop.f32.mrf.mxu0
        %v1169 = vadd.f32 %v960, %v1168
        %1170 = vmatmul.f32.gmra.mxu0 %v1059
        %v1171 = vpop.f32.mrf.mxu0
        %v1172 = vadd.f32 %v963, %v1171
        %1173 = vmatmul.f32.gmra.mxu0 %v1062
        %v1174 = vpop.f32.mrf.mxu0
        %v1175 = vadd.f32 %v966, %v1174
        %1176 = vmatmul.f32.gmra.mxu0 %v1065
        %v1177 = vpop.f32.mrf.mxu0
        %v1178 = vadd.f32 %v969, %v1177
        %1179 = vmatmul.f32.gmra.mxu0 %v1068
        %v1180 = vpop.f32.mrf.mxu0
        %v1181 = vadd.f32 %v972, %v1180
        %1182 = vmatmul.f32.gmra.mxu0 %v1071
        %v1183 = vpop.f32.mrf.mxu0
        %v1184 = vadd.f32 %v975, %v1183
        %1185 = vmatmul.f32.gmra.mxu0 %v1074
        %v1186 = vpop.f32.mrf.mxu0
        %v1187 = vadd.f32 %v978, %v1186
        %1188 = vmatmul.f32.gmra.mxu0 %v1077
        %v1189 = vpop.f32.mrf.mxu0
        %v1190 = vadd.f32 %v981, %v1189
        %1191 = vmatmul.f32.gmra.mxu0 %v1080
        %v1192 = vpop.f32.mrf.mxu0
        %v1193 = vadd.f32 %v984, %v1192
        %1194 = vmatmul.f32.gmra.mxu0 %v1083
        %v1195 = vpop.f32.mrf.mxu0
        %v1196 = vadd.f32 %v987, %v1195
        %1197 = vmatmul.f32.gmra.mxu0 %v1086
        %v1198 = vpop.f32.mrf.mxu0
        %v1199 = vadd.f32 %v990, %v1198
        %1200 = vmatmul.f32.gmra.mxu0 %v1089
        %v1201 = vpop.f32.mrf.mxu0
        %v1202 = vadd.f32 %v993, %v1201
        %1203 = vmatmul.f32.gmra.mxu0 %v1092
        %v1204 = vpop.f32.mrf.mxu0
        %v1205 = vadd.f32 %v996, %v1204
        %1206 = vmatmul.f32.gmra.mxu0 %v1095
        %v1207 = vpop.f32.mrf.mxu0
        %v1208 = vadd.f32 %v999, %v1207
        %1209 = vmatmul.f32.gmra.mxu0 %v1098
        %v1210 = vpop.f32.mrf.mxu0
        %v1211 = vadd.f32 %v1002, %v1210
        %1212 = vmatmul.f32.gmra.mxu0 %v1101
        %v1213 = vpop.f32.mrf.mxu0
        %v1214 = vadd.f32 %v1005, %v1213
        %1215 = vmatmul.f32.gmra.mxu0 %v1104
        %v1216 = vpop.f32.mrf.mxu0
        %v1217 = vadd.f32 %v1008, %v1216
        %1218 = vmatmul.f32.gmra.mxu0 %v1107
        %v1219 = vpop.f32.mrf.mxu0
        %v1220 = vadd.f32 %v1011, %v1219
        %1221 = vmatmul.f32.gmra.mxu0 %v1110
        %v1222 = vpop.f32.mrf.mxu0
        %v1223 = vadd.f32 %v1014, %v1222
        %1224 = vmatmul.f32.gmra.mxu0 %v1113
        %v1225 = vpop.f32.mrf.mxu0
        %v1226 = vadd.f32 %v1017, %v1225
        %1227 = vmatmul.f32.gmra.mxu0 %v1116
        %v1228 = vpop.f32.mrf.mxu0
        %v1229 = vadd.f32 %v1020, %v1228
        %1230 = vmatmul.f32.gmra.mxu0 %v1119
        %v1231 = vpop.f32.mrf.mxu0
        %v1232 = vadd.f32 %v1023, %v1231
        %1233 = vmatmul.f32.gmra.mxu0 %v1122
        %v1234 = vpop.f32.mrf.mxu0
        %v1235 = vadd.f32 %v1026, %v1234
        %1236 = vmatmul.f32.gmra.mxu0 %v1125
        %v1237 = vpop.f32.mrf.mxu0
        %v1238 = vadd.f32 %v1029, %v1237
        %1239 = vmatmul.f32.gmra.mxu0 %v1128
        %v1240 = vpop.f32.mrf.mxu0
        %v1241 = vadd.f32 %v1032, %v1240
        %1242 = vmatmul.f32.gmra.mxu0 %v1131
        %v1243 = vpop.f32.mrf.mxu0
        %v1244 = vadd.f32 %v1035, %v1243
        %1245 = vmatmul.f32.gmra.mxu0 %v1134
        %v1246 = vpop.f32.mrf.mxu0
        %v1247 = vadd.f32 %v1038, %v1246
        %1248 = vdwg.mxu0
        %v1249 = vld [vmem:[%s618] sm:$0xff]
        %v1250 = vld [vmem:[%s618 + $0x8] sm:$0xff]
        %v1251 = vld [vmem:[%s618 + $0x10] sm:$0xff]
        %v1252 = vld [vmem:[%s618 + $0x18] sm:$0xff]
        %v1253 = vld [vmem:[%s618 + $0x20] sm:$0xff]
        %v1254 = vld [vmem:[%s618 + $0x28] sm:$0xff]
        %v1255 = vld [vmem:[%s618 + $0x30] sm:$0xff]
        %v1256 = vld [vmem:[%s618 + $0x38] sm:$0xff]
        %v1257 = vld [vmem:[%s618 + $0x40] sm:$0xff]
        %v1258 = vld [vmem:[%s618 + $0x48] sm:$0xff]
        %v1259 = vld [vmem:[%s618 + $0x50] sm:$0xff]
        %v1260 = vld [vmem:[%s618 + $0x58] sm:$0xff]
        %v1261 = vld [vmem:[%s618 + $0x60] sm:$0xff]
        %v1262 = vld [vmem:[%s618 + $0x68] sm:$0xff]
        %v1263 = vld [vmem:[%s618 + $0x70] sm:$0xff]
        %v1264 = vld [vmem:[%s618 + $0x78] sm:$0xff]
        %v1265 = vld [vmem:[%s618 + $0x80] sm:$0xff]
        %v1266 = vld [vmem:[%s618 + $0x88] sm:$0xff]
        %v1267 = vld [vmem:[%s618 + $0x90] sm:$0xff]
        %v1268 = vld [vmem:[%s618 + $0x98] sm:$0xff]
        %v1269 = vld [vmem:[%s618 + $0xa0] sm:$0xff]
        %v1270 = vld [vmem:[%s618 + $0xa8] sm:$0xff]
        %v1271 = vld [vmem:[%s618 + $0xb0] sm:$0xff]
        %v1272 = vld [vmem:[%s618 + $0xb8] sm:$0xff]
        %v1273 = vld [vmem:[%s618 + $0xc0] sm:$0xff]
        %v1274 = vld [vmem:[%s618 + $0xc8] sm:$0xff]
        %v1275 = vld [vmem:[%s618 + $0xd0] sm:$0xff]
        %v1276 = vld [vmem:[%s618 + $0xd8] sm:$0xff]
        %v1277 = vld [vmem:[%s618 + $0xe0] sm:$0xff]
        %v1278 = vld [vmem:[%s618 + $0xe8] sm:$0xff]
        %v1279 = vld [vmem:[%s618 + $0xf0] sm:$0xff]
        %v1280 = vld [vmem:[%s618 + $0xf8] sm:$0xff]
        %s1281 = scalar_lea.vmem %s5, 64
        %v1282 = vld [vmem:[%s1281] sm:$0xff]
        %v1283 = vld [vmem:[%s1281 + $0x8] sm:$0xff]
        %v1284 = vld [vmem:[%s1281 + $0x10] sm:$0xff]
        %v1285 = vld [vmem:[%s1281 + $0x18] sm:$0xff]
        %v1287 = vsel %vm606, %v1249, 0
        %v1290 = vsel %vm606, %v1250, 0
        %v1293 = vsel %vm606, %v1251, 0
        %v1296 = vsel %vm606, %v1252, 0
        %v1299 = vsel %vm606, %v1253, 0
        %v1302 = vsel %vm606, %v1254, 0
        %v1305 = vsel %vm606, %v1255, 0
        %v1308 = vsel %vm606, %v1256, 0
        %v1311 = vsel %vm606, %v1257, 0
        %v1314 = vsel %vm606, %v1258, 0
        %v1317 = vsel %vm606, %v1259, 0
        %v1320 = vsel %vm606, %v1260, 0
        %v1323 = vsel %vm606, %v1261, 0
        %v1326 = vsel %vm606, %v1262, 0
        %v1329 = vsel %vm606, %v1263, 0
        %v1332 = vsel %vm606, %v1264, 0
        %v1335 = vsel %vm606, %v1265, 0
        %v1338 = vsel %vm606, %v1266, 0
        %v1341 = vsel %vm606, %v1267, 0
        %v1344 = vsel %vm606, %v1268, 0
        %v1347 = vsel %vm606, %v1269, 0
        %v1350 = vsel %vm606, %v1270, 0
        %v1353 = vsel %vm606, %v1271, 0
        %v1356 = vsel %vm606, %v1272, 0
        %v1359 = vsel %vm606, %v1273, 0
        %v1362 = vsel %vm606, %v1274, 0
        %v1365 = vsel %vm606, %v1275, 0
        %v1368 = vsel %vm606, %v1276, 0
        %v1371 = vsel %vm606, %v1277, 0
        %v1374 = vsel %vm606, %v1278, 0
        %v1377 = vsel %vm606, %v1279, 0
        %v1380 = vsel %vm606, %v1280, 0
        %1382 = vmatpush.msra.mxu0 0.0
        %1383 = vmatpush.msra.mxu0 0.0
        %1384 = vmatpush.msra.mxu0 0.0
        %1385 = vmatpush.msra.mxu0 0.0
        %1386 = vmatpush.msra.mxu0 0.0
        %1387 = vmatpush.msra.mxu0 0.0
        %1388 = vmatpush.msra.mxu0 0.0
        %1389 = vmatpush.msra.mxu0 0.0
        %1390 = vmatpush.msra.mxu0 0.0
        %1391 = vmatpush.msra.mxu0 0.0
        %1392 = vmatpush.msra.mxu0 0.0
        %1393 = vmatpush.msra.mxu0 0.0
        %1394 = vmatpush.msra.mxu0 %v1285
        %1395 = vmatpush.msra.mxu0 %v1284
        %1396 = vmatpush.msra.mxu0 %v1283
        %1397 = vmatpush.msra.mxu0 %v1282
        %1398 = vmatmul.f32.gmra.mxu0 %v1287
        %v1399 = vpop.f32.mrf.mxu0
        %v1400 = vadd.f32 0.0, %v1399
        %1401 = vmatmul.f32.gmra.mxu0 %v1290
        %v1402 = vpop.f32.mrf.mxu0
        %v1403 = vadd.f32 0.0, %v1402
        %1404 = vmatmul.f32.gmra.mxu0 %v1293
        %v1405 = vpop.f32.mrf.mxu0
        %v1406 = vadd.f32 0.0, %v1405
        %1407 = vmatmul.f32.gmra.mxu0 %v1296
        %v1408 = vpop.f32.mrf.mxu0
        %v1409 = vadd.f32 0.0, %v1408
        %1410 = vmatmul.f32.gmra.mxu0 %v1299
        %v1411 = vpop.f32.mrf.mxu0
        %v1412 = vadd.f32 0.0, %v1411
        %1413 = vmatmul.f32.gmra.mxu0 %v1302
        %v1414 = vpop.f32.mrf.mxu0
        %v1415 = vadd.f32 0.0, %v1414
        %1416 = vmatmul.f32.gmra.mxu0 %v1305
        %v1417 = vpop.f32.mrf.mxu0
        %v1418 = vadd.f32 0.0, %v1417
        %1419 = vmatmul.f32.gmra.mxu0 %v1308
        %v1420 = vpop.f32.mrf.mxu0
        %v1421 = vadd.f32 0.0, %v1420
        %1422 = vmatmul.f32.gmra.mxu0 %v1311
        %v1423 = vpop.f32.mrf.mxu0
        %v1424 = vadd.f32 0.0, %v1423
        %1425 = vmatmul.f32.gmra.mxu0 %v1314
        %v1426 = vpop.f32.mrf.mxu0
        %v1427 = vadd.f32 0.0, %v1426
        %1428 = vmatmul.f32.gmra.mxu0 %v1317
        %v1429 = vpop.f32.mrf.mxu0
        %v1430 = vadd.f32 0.0, %v1429
        %1431 = vmatmul.f32.gmra.mxu0 %v1320
        %v1432 = vpop.f32.mrf.mxu0
        %v1433 = vadd.f32 0.0, %v1432
        %1434 = vmatmul.f32.gmra.mxu0 %v1323
        %v1435 = vpop.f32.mrf.mxu0
        %v1436 = vadd.f32 0.0, %v1435
        %1437 = vmatmul.f32.gmra.mxu0 %v1326
        %v1438 = vpop.f32.mrf.mxu0
        %v1439 = vadd.f32 0.0, %v1438
        %1440 = vmatmul.f32.gmra.mxu0 %v1329
        %v1441 = vpop.f32.mrf.mxu0
        %v1442 = vadd.f32 0.0, %v1441
        %1443 = vmatmul.f32.gmra.mxu0 %v1332
        %v1444 = vpop.f32.mrf.mxu0
        %v1445 = vadd.f32 0.0, %v1444
        %1446 = vmatmul.f32.gmra.mxu0 %v1335
        %v1447 = vpop.f32.mrf.mxu0
        %v1448 = vadd.f32 0.0, %v1447
        %1449 = vmatmul.f32.gmra.mxu0 %v1338
        %v1450 = vpop.f32.mrf.mxu0
        %v1451 = vadd.f32 0.0, %v1450
        %1452 = vmatmul.f32.gmra.mxu0 %v1341
        %v1453 = vpop.f32.mrf.mxu0
        %v1454 = vadd.f32 0.0, %v1453
        %1455 = vmatmul.f32.gmra.mxu0 %v1344
        %v1456 = vpop.f32.mrf.mxu0
        %v1457 = vadd.f32 0.0, %v1456
        %1458 = vmatmul.f32.gmra.mxu0 %v1347
        %v1459 = vpop.f32.mrf.mxu0
        %v1460 = vadd.f32 0.0, %v1459
        %1461 = vmatmul.f32.gmra.mxu0 %v1350
        %v1462 = vpop.f32.mrf.mxu0
        %v1463 = vadd.f32 0.0, %v1462
        %1464 = vmatmul.f32.gmra.mxu0 %v1353
        %v1465 = vpop.f32.mrf.mxu0
        %v1466 = vadd.f32 0.0, %v1465
        %1467 = vmatmul.f32.gmra.mxu0 %v1356
        %v1468 = vpop.f32.mrf.mxu0
        %v1469 = vadd.f32 0.0, %v1468
        %1470 = vmatmul.f32.gmra.mxu0 %v1359
        %v1471 = vpop.f32.mrf.mxu0
        %v1472 = vadd.f32 0.0, %v1471
        %1473 = vmatmul.f32.gmra.mxu0 %v1362
        %v1474 = vpop.f32.mrf.mxu0
        %v1475 = vadd.f32 0.0, %v1474
        %1476 = vmatmul.f32.gmra.mxu0 %v1365
        %v1477 = vpop.f32.mrf.mxu0
        %v1478 = vadd.f32 0.0, %v1477
        %1479 = vmatmul.f32.gmra.mxu0 %v1368
        %v1480 = vpop.f32.mrf.mxu0
        %v1481 = vadd.f32 0.0, %v1480
        %1482 = vmatmul.f32.gmra.mxu0 %v1371
        %v1483 = vpop.f32.mrf.mxu0
        %v1484 = vadd.f32 0.0, %v1483
        %1485 = vmatmul.f32.gmra.mxu0 %v1374
        %v1486 = vpop.f32.mrf.mxu0
        %v1487 = vadd.f32 0.0, %v1486
        %1488 = vmatmul.f32.gmra.mxu0 %v1377
        %v1489 = vpop.f32.mrf.mxu0
        %v1490 = vadd.f32 0.0, %v1489
        %1491 = vmatmul.f32.gmra.mxu0 %v1380
        %v1492 = vpop.f32.mrf.mxu0
        %v1493 = vadd.f32 0.0, %v1492
        %1494 = vdwg.mxu0
        %v1495 = vadd.f32 %v1154, %v1400
        %v1496 = vadd.f32 %v1157, %v1403
        %v1497 = vadd.f32 %v1160, %v1406
        %v1498 = vadd.f32 %v1163, %v1409
        %v1499 = vadd.f32 %v1166, %v1412
        %v1500 = vadd.f32 %v1169, %v1415
        %v1501 = vadd.f32 %v1172, %v1418
        %v1502 = vadd.f32 %v1175, %v1421
        %v1503 = vadd.f32 %v1178, %v1424
        %v1504 = vadd.f32 %v1181, %v1427
        %v1505 = vadd.f32 %v1184, %v1430
        %v1506 = vadd.f32 %v1187, %v1433
        %v1507 = vadd.f32 %v1190, %v1436
        %v1508 = vadd.f32 %v1193, %v1439
        %v1509 = vadd.f32 %v1196, %v1442
        %v1510 = vadd.f32 %v1199, %v1445
        %v1511 = vadd.f32 %v1202, %v1448
        %v1512 = vadd.f32 %v1205, %v1451
        %v1513 = vadd.f32 %v1208, %v1454
        %v1514 = vadd.f32 %v1211, %v1457
        %v1515 = vadd.f32 %v1214, %v1460
        %v1516 = vadd.f32 %v1217, %v1463
        %v1517 = vadd.f32 %v1220, %v1466
        %v1518 = vadd.f32 %v1223, %v1469
        %v1519 = vadd.f32 %v1226, %v1472
        %v1520 = vadd.f32 %v1229, %v1475
        %v1521 = vadd.f32 %v1232, %v1478
        %v1522 = vadd.f32 %v1235, %v1481
        %v1523 = vadd.f32 %v1238, %v1484
        %v1524 = vadd.f32 %v1241, %v1487
        %v1525 = vadd.f32 %v1244, %v1490
        %v1526 = vadd.f32 %v1247, %v1493
        %v1527 = vld [vmem:[%s624] sm:$0xff]
        %v1528 = vld [vmem:[%s624 + $0x8] sm:$0xff]
        %v1529 = vld [vmem:[%s624 + $0x10] sm:$0xff]
        %v1530 = vld [vmem:[%s624 + $0x18] sm:$0xff]
        %v1531 = vld [vmem:[%s624 + $0x20] sm:$0xff]
        %v1532 = vld [vmem:[%s624 + $0x28] sm:$0xff]
        %v1533 = vld [vmem:[%s624 + $0x30] sm:$0xff]
        %v1534 = vld [vmem:[%s624 + $0x38] sm:$0xff]
        %v1535 = vld [vmem:[%s624 + $0x40] sm:$0xff]
        %v1536 = vld [vmem:[%s624 + $0x48] sm:$0xff]
        %v1537 = vld [vmem:[%s624 + $0x50] sm:$0xff]
        %v1538 = vld [vmem:[%s624 + $0x58] sm:$0xff]
        %v1539 = vld [vmem:[%s624 + $0x60] sm:$0xff]
        %v1540 = vld [vmem:[%s624 + $0x68] sm:$0xff]
        %v1541 = vld [vmem:[%s624 + $0x70] sm:$0xff]
        %v1542 = vld [vmem:[%s624 + $0x78] sm:$0xff]
        %v1543 = vld [vmem:[%s624 + $0x80] sm:$0xff]
        %v1544 = vld [vmem:[%s624 + $0x88] sm:$0xff]
        %v1545 = vld [vmem:[%s624 + $0x90] sm:$0xff]
        %v1546 = vld [vmem:[%s624 + $0x98] sm:$0xff]
        %v1547 = vld [vmem:[%s624 + $0xa0] sm:$0xff]
        %v1548 = vld [vmem:[%s624 + $0xa8] sm:$0xff]
        %v1549 = vld [vmem:[%s624 + $0xb0] sm:$0xff]
        %v1550 = vld [vmem:[%s624 + $0xb8] sm:$0xff]
        %v1551 = vld [vmem:[%s624 + $0xc0] sm:$0xff]
        %v1552 = vld [vmem:[%s624 + $0xc8] sm:$0xff]
        %v1553 = vld [vmem:[%s624 + $0xd0] sm:$0xff]
        %v1554 = vld [vmem:[%s624 + $0xd8] sm:$0xff]
        %v1555 = vld [vmem:[%s624 + $0xe0] sm:$0xff]
        %v1556 = vld [vmem:[%s624 + $0xe8] sm:$0xff]
        %v1557 = vld [vmem:[%s624 + $0xf0] sm:$0xff]
        %v1558 = vld [vmem:[%s624 + $0xf8] sm:$0xff]
        %s1559 = scalar_lea.vmem %s5, 96
        %v1560 = vld [vmem:[%s1559] sm:$0xff]
        %v1561 = vld [vmem:[%s1559 + $0x8] sm:$0xff]
        %v1562 = vld [vmem:[%s1559 + $0x10] sm:$0xff]
        %v1563 = vld [vmem:[%s1559 + $0x18] sm:$0xff]
        %v1565 = vsel %vm606, %v1527, 0
        %v1568 = vsel %vm606, %v1528, 0
        %v1571 = vsel %vm606, %v1529, 0
        %v1574 = vsel %vm606, %v1530, 0
        %v1577 = vsel %vm606, %v1531, 0
        %v1580 = vsel %vm606, %v1532, 0
        %v1583 = vsel %vm606, %v1533, 0
        %v1586 = vsel %vm606, %v1534, 0
        %v1589 = vsel %vm606, %v1535, 0
        %v1592 = vsel %vm606, %v1536, 0
        %v1595 = vsel %vm606, %v1537, 0
        %v1598 = vsel %vm606, %v1538, 0
        %v1601 = vsel %vm606, %v1539, 0
        %v1604 = vsel %vm606, %v1540, 0
        %v1607 = vsel %vm606, %v1541, 0
        %v1610 = vsel %vm606, %v1542, 0
        %v1613 = vsel %vm606, %v1543, 0
        %v1616 = vsel %vm606, %v1544, 0
        %v1619 = vsel %vm606, %v1545, 0
        %v1622 = vsel %vm606, %v1546, 0
        %v1625 = vsel %vm606, %v1547, 0
        %v1628 = vsel %vm606, %v1548, 0
        %v1631 = vsel %vm606, %v1549, 0
        %v1634 = vsel %vm606, %v1550, 0
        %v1637 = vsel %vm606, %v1551, 0
        %v1640 = vsel %vm606, %v1552, 0
        %v1643 = vsel %vm606, %v1553, 0
        %v1646 = vsel %vm606, %v1554, 0
        %v1649 = vsel %vm606, %v1555, 0
        %v1652 = vsel %vm606, %v1556, 0
        %v1655 = vsel %vm606, %v1557, 0
        %v1658 = vsel %vm606, %v1558, 0
        %1660 = vmatpush.msra.mxu0 0.0
        %1661 = vmatpush.msra.mxu0 0.0
        %1662 = vmatpush.msra.mxu0 0.0
        %1663 = vmatpush.msra.mxu0 0.0
        %1664 = vmatpush.msra.mxu0 0.0
        %1665 = vmatpush.msra.mxu0 0.0
        %1666 = vmatpush.msra.mxu0 0.0
        %1667 = vmatpush.msra.mxu0 0.0
        %1668 = vmatpush.msra.mxu0 0.0
        %1669 = vmatpush.msra.mxu0 0.0
        %1670 = vmatpush.msra.mxu0 0.0
        %1671 = vmatpush.msra.mxu0 0.0
        %1672 = vmatpush.msra.mxu0 %v1563
        %1673 = vmatpush.msra.mxu0 %v1562
        %1674 = vmatpush.msra.mxu0 %v1561
        %1675 = vmatpush.msra.mxu0 %v1560
        %1676 = vmatmul.f32.gmra.mxu0 %v1565
        %v1677 = vpop.f32.mrf.mxu0
        %v1678 = vadd.f32 0.0, %v1677
        %1679 = vmatmul.f32.gmra.mxu0 %v1568
        %v1680 = vpop.f32.mrf.mxu0
        %v1681 = vadd.f32 0.0, %v1680
        %1682 = vmatmul.f32.gmra.mxu0 %v1571
        %v1683 = vpop.f32.mrf.mxu0
        %v1684 = vadd.f32 0.0, %v1683
        %1685 = vmatmul.f32.gmra.mxu0 %v1574
        %v1686 = vpop.f32.mrf.mxu0
        %v1687 = vadd.f32 0.0, %v1686
        %1688 = vmatmul.f32.gmra.mxu0 %v1577
        %v1689 = vpop.f32.mrf.mxu0
        %v1690 = vadd.f32 0.0, %v1689
        %1691 = vmatmul.f32.gmra.mxu0 %v1580
        %v1692 = vpop.f32.mrf.mxu0
        %v1693 = vadd.f32 0.0, %v1692
        %1694 = vmatmul.f32.gmra.mxu0 %v1583
        %v1695 = vpop.f32.mrf.mxu0
        %v1696 = vadd.f32 0.0, %v1695
        %1697 = vmatmul.f32.gmra.mxu0 %v1586
        %v1698 = vpop.f32.mrf.mxu0
        %v1699 = vadd.f32 0.0, %v1698
        %1700 = vmatmul.f32.gmra.mxu0 %v1589
        %v1701 = vpop.f32.mrf.mxu0
        %v1702 = vadd.f32 0.0, %v1701
        %1703 = vmatmul.f32.gmra.mxu0 %v1592
        %v1704 = vpop.f32.mrf.mxu0
        %v1705 = vadd.f32 0.0, %v1704
        %1706 = vmatmul.f32.gmra.mxu0 %v1595
        %v1707 = vpop.f32.mrf.mxu0
        %v1708 = vadd.f32 0.0, %v1707
        %1709 = vmatmul.f32.gmra.mxu0 %v1598
        %v1710 = vpop.f32.mrf.mxu0
        %v1711 = vadd.f32 0.0, %v1710
        %1712 = vmatmul.f32.gmra.mxu0 %v1601
        %v1713 = vpop.f32.mrf.mxu0
        %v1714 = vadd.f32 0.0, %v1713
        %1715 = vmatmul.f32.gmra.mxu0 %v1604
        %v1716 = vpop.f32.mrf.mxu0
        %v1717 = vadd.f32 0.0, %v1716
        %1718 = vmatmul.f32.gmra.mxu0 %v1607
        %v1719 = vpop.f32.mrf.mxu0
        %v1720 = vadd.f32 0.0, %v1719
        %1721 = vmatmul.f32.gmra.mxu0 %v1610
        %v1722 = vpop.f32.mrf.mxu0
        %v1723 = vadd.f32 0.0, %v1722
        %1724 = vmatmul.f32.gmra.mxu0 %v1613
        %v1725 = vpop.f32.mrf.mxu0
        %v1726 = vadd.f32 0.0, %v1725
        %1727 = vmatmul.f32.gmra.mxu0 %v1616
        %v1728 = vpop.f32.mrf.mxu0
        %v1729 = vadd.f32 0.0, %v1728
        %1730 = vmatmul.f32.gmra.mxu0 %v1619
        %v1731 = vpop.f32.mrf.mxu0
        %v1732 = vadd.f32 0.0, %v1731
        %1733 = vmatmul.f32.gmra.mxu0 %v1622
        %v1734 = vpop.f32.mrf.mxu0
        %v1735 = vadd.f32 0.0, %v1734
        %1736 = vmatmul.f32.gmra.mxu0 %v1625
        %v1737 = vpop.f32.mrf.mxu0
        %v1738 = vadd.f32 0.0, %v1737
        %1739 = vmatmul.f32.gmra.mxu0 %v1628
        %v1740 = vpop.f32.mrf.mxu0
        %v1741 = vadd.f32 0.0, %v1740
        %1742 = vmatmul.f32.gmra.mxu0 %v1631
        %v1743 = vpop.f32.mrf.mxu0
        %v1744 = vadd.f32 0.0, %v1743
        %1745 = vmatmul.f32.gmra.mxu0 %v1634
        %v1746 = vpop.f32.mrf.mxu0
        %v1747 = vadd.f32 0.0, %v1746
        %1748 = vmatmul.f32.gmra.mxu0 %v1637
        %v1749 = vpop.f32.mrf.mxu0
        %v1750 = vadd.f32 0.0, %v1749
        %1751 = vmatmul.f32.gmra.mxu0 %v1640
        %v1752 = vpop.f32.mrf.mxu0
        %v1753 = vadd.f32 0.0, %v1752
        %1754 = vmatmul.f32.gmra.mxu0 %v1643
        %v1755 = vpop.f32.mrf.mxu0
        %v1756 = vadd.f32 0.0, %v1755
        %1757 = vmatmul.f32.gmra.mxu0 %v1646
        %v1758 = vpop.f32.mrf.mxu0
        %v1759 = vadd.f32 0.0, %v1758
        %1760 = vmatmul.f32.gmra.mxu0 %v1649
        %v1761 = vpop.f32.mrf.mxu0
        %v1762 = vadd.f32 0.0, %v1761
        %1763 = vmatmul.f32.gmra.mxu0 %v1652
        %v1764 = vpop.f32.mrf.mxu0
        %v1765 = vadd.f32 0.0, %v1764
        %1766 = vmatmul.f32.gmra.mxu0 %v1655
        %v1767 = vpop.f32.mrf.mxu0
        %v1768 = vadd.f32 0.0, %v1767
        %1769 = vmatmul.f32.gmra.mxu0 %v1658
        %v1770 = vpop.f32.mrf.mxu0
        %v1771 = vadd.f32 0.0, %v1770
        %1772 = vdwg.mxu0
        %v1773 = vadd.f32 %v1495, %v1678
        %v1774 = vadd.f32 %v1496, %v1681
        %v1775 = vadd.f32 %v1497, %v1684
        %v1776 = vadd.f32 %v1498, %v1687
        %v1777 = vadd.f32 %v1499, %v1690
        %v1778 = vadd.f32 %v1500, %v1693
        %v1779 = vadd.f32 %v1501, %v1696
        %v1780 = vadd.f32 %v1502, %v1699
        %v1781 = vadd.f32 %v1503, %v1702
        %v1782 = vadd.f32 %v1504, %v1705
        %v1783 = vadd.f32 %v1505, %v1708
        %v1784 = vadd.f32 %v1506, %v1711
        %v1785 = vadd.f32 %v1507, %v1714
        %v1786 = vadd.f32 %v1508, %v1717
        %v1787 = vadd.f32 %v1509, %v1720
        %v1788 = vadd.f32 %v1510, %v1723
        %v1789 = vadd.f32 %v1511, %v1726
        %v1790 = vadd.f32 %v1512, %v1729
        %v1791 = vadd.f32 %v1513, %v1732
        %v1792 = vadd.f32 %v1514, %v1735
        %v1793 = vadd.f32 %v1515, %v1738
        %v1794 = vadd.f32 %v1516, %v1741
        %v1795 = vadd.f32 %v1517, %v1744
        %v1796 = vadd.f32 %v1518, %v1747
        %v1797 = vadd.f32 %v1519, %v1750
        %v1798 = vadd.f32 %v1520, %v1753
        %v1799 = vadd.f32 %v1521, %v1756
        %v1800 = vadd.f32 %v1522, %v1759
        %v1801 = vadd.f32 %v1523, %v1762
        %v1802 = vadd.f32 %v1524, %v1765
        %v1803 = vadd.f32 %v1525, %v1768
        %v1804 = vadd.f32 %v1526, %v1771
        %v1805 = vld [vmem:[%s659] sm:$0xff]
        %v1806 = vld [vmem:[%s659 + $0x8] sm:$0xff]
        %v1807 = vld [vmem:[%s659 + $0x10] sm:$0xff]
        %v1808 = vld [vmem:[%s659 + $0x18] sm:$0xff]
        %v1809 = vld [vmem:[%s659 + $0x20] sm:$0xff]
        %v1810 = vld [vmem:[%s659 + $0x28] sm:$0xff]
        %v1811 = vld [vmem:[%s659 + $0x30] sm:$0xff]
        %v1812 = vld [vmem:[%s659 + $0x38] sm:$0xff]
        %v1813 = vld [vmem:[%s659 + $0x40] sm:$0xff]
        %v1814 = vld [vmem:[%s659 + $0x48] sm:$0xff]
        %v1815 = vld [vmem:[%s659 + $0x50] sm:$0xff]
        %v1816 = vld [vmem:[%s659 + $0x58] sm:$0xff]
        %v1817 = vld [vmem:[%s659 + $0x60] sm:$0xff]
        %v1818 = vld [vmem:[%s659 + $0x68] sm:$0xff]
        %v1819 = vld [vmem:[%s659 + $0x70] sm:$0xff]
        %v1820 = vld [vmem:[%s659 + $0x78] sm:$0xff]
        %v1821 = vld [vmem:[%s659 + $0x80] sm:$0xff]
        %v1822 = vld [vmem:[%s659 + $0x88] sm:$0xff]
        %v1823 = vld [vmem:[%s659 + $0x90] sm:$0xff]
        %v1824 = vld [vmem:[%s659 + $0x98] sm:$0xff]
        %v1825 = vld [vmem:[%s659 + $0xa0] sm:$0xff]
        %v1826 = vld [vmem:[%s659 + $0xa8] sm:$0xff]
        %v1827 = vld [vmem:[%s659 + $0xb0] sm:$0xff]
        %v1828 = vld [vmem:[%s659 + $0xb8] sm:$0xff]
        %v1829 = vld [vmem:[%s659 + $0xc0] sm:$0xff]
        %v1830 = vld [vmem:[%s659 + $0xc8] sm:$0xff]
        %v1831 = vld [vmem:[%s659 + $0xd0] sm:$0xff]
        %v1832 = vld [vmem:[%s659 + $0xd8] sm:$0xff]
        %v1833 = vld [vmem:[%s659 + $0xe0] sm:$0xff]
        %v1834 = vld [vmem:[%s659 + $0xe8] sm:$0xff]
        %v1835 = vld [vmem:[%s659 + $0xf0] sm:$0xff]
        %v1836 = vld [vmem:[%s659 + $0xf8] sm:$0xff]
        %s1837 = scalar_lea.vmem %s5, 128
        %v1838 = vld [vmem:[%s1837] sm:$0xff]
        %v1839 = vld [vmem:[%s1837 + $0x8] sm:$0xff]
        %v1840 = vld [vmem:[%s1837 + $0x10] sm:$0xff]
        %v1841 = vld [vmem:[%s1837 + $0x18] sm:$0xff]
        %v1843 = vsel %vm606, %v1805, 0
        %v1846 = vsel %vm606, %v1806, 0
        %v1849 = vsel %vm606, %v1807, 0
        %v1852 = vsel %vm606, %v1808, 0
        %v1855 = vsel %vm606, %v1809, 0
        %v1858 = vsel %vm606, %v1810, 0
        %v1861 = vsel %vm606, %v1811, 0
        %v1864 = vsel %vm606, %v1812, 0
        %v1867 = vsel %vm606, %v1813, 0
        %v1870 = vsel %vm606, %v1814, 0
        %v1873 = vsel %vm606, %v1815, 0
        %v1876 = vsel %vm606, %v1816, 0
        %v1879 = vsel %vm606, %v1817, 0
        %v1882 = vsel %vm606, %v1818, 0
        %v1885 = vsel %vm606, %v1819, 0
        %v1888 = vsel %vm606, %v1820, 0
        %v1891 = vsel %vm606, %v1821, 0
        %v1894 = vsel %vm606, %v1822, 0
        %v1897 = vsel %vm606, %v1823, 0
        %v1900 = vsel %vm606, %v1824, 0
        %v1903 = vsel %vm606, %v1825, 0
        %v1906 = vsel %vm606, %v1826, 0
        %v1909 = vsel %vm606, %v1827, 0
        %v1912 = vsel %vm606, %v1828, 0
        %v1915 = vsel %vm606, %v1829, 0
        %v1918 = vsel %vm606, %v1830, 0
        %v1921 = vsel %vm606, %v1831, 0
        %v1924 = vsel %vm606, %v1832, 0
        %v1927 = vsel %vm606, %v1833, 0
        %v1930 = vsel %vm606, %v1834, 0
        %v1933 = vsel %vm606, %v1835, 0
        %v1936 = vsel %vm606, %v1836, 0
        %1938 = vmatpush.msra.mxu0 0.0
        %1939 = vmatpush.msra.mxu0 0.0
        %1940 = vmatpush.msra.mxu0 0.0
        %1941 = vmatpush.msra.mxu0 0.0
        %1942 = vmatpush.msra.mxu0 0.0
        %1943 = vmatpush.msra.mxu0 0.0
        %1944 = vmatpush.msra.mxu0 0.0
        %1945 = vmatpush.msra.mxu0 0.0
        %1946 = vmatpush.msra.mxu0 0.0
        %1947 = vmatpush.msra.mxu0 0.0
        %1948 = vmatpush.msra.mxu0 0.0
        %1949 = vmatpush.msra.mxu0 0.0
        %1950 = vmatpush.msra.mxu0 %v1841
        %1951 = vmatpush.msra.mxu0 %v1840
        %1952 = vmatpush.msra.mxu0 %v1839
        %1953 = vmatpush.msra.mxu0 %v1838
        %1954 = vmatmul.f32.gmra.mxu0 %v1843
        %v1955 = vpop.f32.mrf.mxu0
        %v1956 = vadd.f32 0.0, %v1955
        %1957 = vmatmul.f32.gmra.mxu0 %v1846
        %v1958 = vpop.f32.mrf.mxu0
        %v1959 = vadd.f32 0.0, %v1958
        %1960 = vmatmul.f32.gmra.mxu0 %v1849
        %v1961 = vpop.f32.mrf.mxu0
        %v1962 = vadd.f32 0.0, %v1961
        %1963 = vmatmul.f32.gmra.mxu0 %v1852
        %v1964 = vpop.f32.mrf.mxu0
        %v1965 = vadd.f32 0.0, %v1964
        %1966 = vmatmul.f32.gmra.mxu0 %v1855
        %v1967 = vpop.f32.mrf.mxu0
        %v1968 = vadd.f32 0.0, %v1967
        %1969 = vmatmul.f32.gmra.mxu0 %v1858
        %v1970 = vpop.f32.mrf.mxu0
        %v1971 = vadd.f32 0.0, %v1970
        %1972 = vmatmul.f32.gmra.mxu0 %v1861
        %v1973 = vpop.f32.mrf.mxu0
        %v1974 = vadd.f32 0.0, %v1973
        %1975 = vmatmul.f32.gmra.mxu0 %v1864
        %v1976 = vpop.f32.mrf.mxu0
        %v1977 = vadd.f32 0.0, %v1976
        %1978 = vmatmul.f32.gmra.mxu0 %v1867
        %v1979 = vpop.f32.mrf.mxu0
        %v1980 = vadd.f32 0.0, %v1979
        %1981 = vmatmul.f32.gmra.mxu0 %v1870
        %v1982 = vpop.f32.mrf.mxu0
        %v1983 = vadd.f32 0.0, %v1982
        %1984 = vmatmul.f32.gmra.mxu0 %v1873
        %v1985 = vpop.f32.mrf.mxu0
        %v1986 = vadd.f32 0.0, %v1985
        %1987 = vmatmul.f32.gmra.mxu0 %v1876
        %v1988 = vpop.f32.mrf.mxu0
        %v1989 = vadd.f32 0.0, %v1988
        %1990 = vmatmul.f32.gmra.mxu0 %v1879
        %v1991 = vpop.f32.mrf.mxu0
        %v1992 = vadd.f32 0.0, %v1991
        %1993 = vmatmul.f32.gmra.mxu0 %v1882
        %v1994 = vpop.f32.mrf.mxu0
        %v1995 = vadd.f32 0.0, %v1994
        %1996 = vmatmul.f32.gmra.mxu0 %v1885
        %v1997 = vpop.f32.mrf.mxu0
        %v1998 = vadd.f32 0.0, %v1997
        %1999 = vmatmul.f32.gmra.mxu0 %v1888
        %v2000 = vpop.f32.mrf.mxu0
        %v2001 = vadd.f32 0.0, %v2000
        %2002 = vmatmul.f32.gmra.mxu0 %v1891
        %v2003 = vpop.f32.mrf.mxu0
        %v2004 = vadd.f32 0.0, %v2003
        %2005 = vmatmul.f32.gmra.mxu0 %v1894
        %v2006 = vpop.f32.mrf.mxu0
        %v2007 = vadd.f32 0.0, %v2006
        %2008 = vmatmul.f32.gmra.mxu0 %v1897
        %v2009 = vpop.f32.mrf.mxu0
        %v2010 = vadd.f32 0.0, %v2009
        %2011 = vmatmul.f32.gmra.mxu0 %v1900
        %v2012 = vpop.f32.mrf.mxu0
        %v2013 = vadd.f32 0.0, %v2012
        %2014 = vmatmul.f32.gmra.mxu0 %v1903
        %v2015 = vpop.f32.mrf.mxu0
        %v2016 = vadd.f32 0.0, %v2015
        %2017 = vmatmul.f32.gmra.mxu0 %v1906
        %v2018 = vpop.f32.mrf.mxu0
        %v2019 = vadd.f32 0.0, %v2018
        %2020 = vmatmul.f32.gmra.mxu0 %v1909
        %v2021 = vpop.f32.mrf.mxu0
        %v2022 = vadd.f32 0.0, %v2021
        %2023 = vmatmul.f32.gmra.mxu0 %v1912
        %v2024 = vpop.f32.mrf.mxu0
        %v2025 = vadd.f32 0.0, %v2024
        %2026 = vmatmul.f32.gmra.mxu0 %v1915
        %v2027 = vpop.f32.mrf.mxu0
        %v2028 = vadd.f32 0.0, %v2027
        %2029 = vmatmul.f32.gmra.mxu0 %v1918
        %v2030 = vpop.f32.mrf.mxu0
        %v2031 = vadd.f32 0.0, %v2030
        %2032 = vmatmul.f32.gmra.mxu0 %v1921
        %v2033 = vpop.f32.mrf.mxu0
        %v2034 = vadd.f32 0.0, %v2033
        %2035 = vmatmul.f32.gmra.mxu0 %v1924
        %v2036 = vpop.f32.mrf.mxu0
        %v2037 = vadd.f32 0.0, %v2036
        %2038 = vmatmul.f32.gmra.mxu0 %v1927
        %v2039 = vpop.f32.mrf.mxu0
        %v2040 = vadd.f32 0.0, %v2039
        %2041 = vmatmul.f32.gmra.mxu0 %v1930
        %v2042 = vpop.f32.mrf.mxu0
        %v2043 = vadd.f32 0.0, %v2042
        %2044 = vmatmul.f32.gmra.mxu0 %v1933
        %v2045 = vpop.f32.mrf.mxu0
        %v2046 = vadd.f32 0.0, %v2045
        %2047 = vmatmul.f32.gmra.mxu0 %v1936
        %v2048 = vpop.f32.mrf.mxu0
        %v2049 = vadd.f32 0.0, %v2048
        %2050 = vdwg.mxu0
        %v2051 = vadd.f32 %v1773, %v1956
        %v2052 = vadd.f32 %v1774, %v1959
        %v2053 = vadd.f32 %v1775, %v1962
        %v2054 = vadd.f32 %v1776, %v1965
        %v2055 = vadd.f32 %v1777, %v1968
        %v2056 = vadd.f32 %v1778, %v1971
        %v2057 = vadd.f32 %v1779, %v1974
        %v2058 = vadd.f32 %v1780, %v1977
        %v2059 = vadd.f32 %v1781, %v1980
        %v2060 = vadd.f32 %v1782, %v1983
        %v2061 = vadd.f32 %v1783, %v1986
        %v2062 = vadd.f32 %v1784, %v1989
        %v2063 = vadd.f32 %v1785, %v1992
        %v2064 = vadd.f32 %v1786, %v1995
        %v2065 = vadd.f32 %v1787, %v1998
        %v2066 = vadd.f32 %v1788, %v2001
        %v2067 = vadd.f32 %v1789, %v2004
        %v2068 = vadd.f32 %v1790, %v2007
        %v2069 = vadd.f32 %v1791, %v2010
        %v2070 = vadd.f32 %v1792, %v2013
        %v2071 = vadd.f32 %v1793, %v2016
        %v2072 = vadd.f32 %v1794, %v2019
        %v2073 = vadd.f32 %v1795, %v2022
        %v2074 = vadd.f32 %v1796, %v2025
        %v2075 = vadd.f32 %v1797, %v2028
        %v2076 = vadd.f32 %v1798, %v2031
        %v2077 = vadd.f32 %v1799, %v2034
        %v2078 = vadd.f32 %v1800, %v2037
        %v2079 = vadd.f32 %v1801, %v2040
        %v2080 = vadd.f32 %v1802, %v2043
        %v2081 = vadd.f32 %v1803, %v2046
        %v2082 = vadd.f32 %v1804, %v2049
        %v2083 = vld [vmem:[%s642] sm:$0xff]
        %v2084 = vld [vmem:[%s642 + $0x8] sm:$0xff]
        %v2085 = vld [vmem:[%s642 + $0x10] sm:$0xff]
        %v2086 = vld [vmem:[%s642 + $0x18] sm:$0xff]
        %v2087 = vld [vmem:[%s642 + $0x20] sm:$0xff]
        %v2088 = vld [vmem:[%s642 + $0x28] sm:$0xff]
        %v2089 = vld [vmem:[%s642 + $0x30] sm:$0xff]
        %v2090 = vld [vmem:[%s642 + $0x38] sm:$0xff]
        %v2091 = vld [vmem:[%s642 + $0x40] sm:$0xff]
        %v2092 = vld [vmem:[%s642 + $0x48] sm:$0xff]
        %v2093 = vld [vmem:[%s642 + $0x50] sm:$0xff]
        %v2094 = vld [vmem:[%s642 + $0x58] sm:$0xff]
        %v2095 = vld [vmem:[%s642 + $0x60] sm:$0xff]
        %v2096 = vld [vmem:[%s642 + $0x68] sm:$0xff]
        %v2097 = vld [vmem:[%s642 + $0x70] sm:$0xff]
        %v2098 = vld [vmem:[%s642 + $0x78] sm:$0xff]
        %v2099 = vld [vmem:[%s642 + $0x80] sm:$0xff]
        %v2100 = vld [vmem:[%s642 + $0x88] sm:$0xff]
        %v2101 = vld [vmem:[%s642 + $0x90] sm:$0xff]
        %v2102 = vld [vmem:[%s642 + $0x98] sm:$0xff]
        %v2103 = vld [vmem:[%s642 + $0xa0] sm:$0xff]
        %v2104 = vld [vmem:[%s642 + $0xa8] sm:$0xff]
        %v2105 = vld [vmem:[%s642 + $0xb0] sm:$0xff]
        %v2106 = vld [vmem:[%s642 + $0xb8] sm:$0xff]
        %v2107 = vld [vmem:[%s642 + $0xc0] sm:$0xff]
        %v2108 = vld [vmem:[%s642 + $0xc8] sm:$0xff]
        %v2109 = vld [vmem:[%s642 + $0xd0] sm:$0xff]
        %v2110 = vld [vmem:[%s642 + $0xd8] sm:$0xff]
        %v2111 = vld [vmem:[%s642 + $0xe0] sm:$0xff]
        %v2112 = vld [vmem:[%s642 + $0xe8] sm:$0xff]
        %v2113 = vld [vmem:[%s642 + $0xf0] sm:$0xff]
        %v2114 = vld [vmem:[%s642 + $0xf8] sm:$0xff]
        %s2115 = scalar_lea.vmem %s5, 160
        %v2116 = vld [vmem:[%s2115] sm:$0xff]
        %v2117 = vld [vmem:[%s2115 + $0x8] sm:$0xff]
        %v2118 = vld [vmem:[%s2115 + $0x10] sm:$0xff]
        %v2119 = vld [vmem:[%s2115 + $0x18] sm:$0xff]
        %v2121 = vsel %vm606, %v2083, 0
        %v2124 = vsel %vm606, %v2084, 0
        %v2127 = vsel %vm606, %v2085, 0
        %v2130 = vsel %vm606, %v2086, 0
        %v2133 = vsel %vm606, %v2087, 0
        %v2136 = vsel %vm606, %v2088, 0
        %v2139 = vsel %vm606, %v2089, 0
        %v2142 = vsel %vm606, %v2090, 0
        %v2145 = vsel %vm606, %v2091, 0
        %v2148 = vsel %vm606, %v2092, 0
        %v2151 = vsel %vm606, %v2093, 0
        %v2154 = vsel %vm606, %v2094, 0
        %v2157 = vsel %vm606, %v2095, 0
        %v2160 = vsel %vm606, %v2096, 0
        %v2163 = vsel %vm606, %v2097, 0
        %v2166 = vsel %vm606, %v2098, 0
        %v2169 = vsel %vm606, %v2099, 0
        %v2172 = vsel %vm606, %v2100, 0
        %v2175 = vsel %vm606, %v2101, 0
        %v2178 = vsel %vm606, %v2102, 0
        %v2181 = vsel %vm606, %v2103, 0
        %v2184 = vsel %vm606, %v2104, 0
        %v2187 = vsel %vm606, %v2105, 0
        %v2190 = vsel %vm606, %v2106, 0
        %v2193 = vsel %vm606, %v2107, 0
        %v2196 = vsel %vm606, %v2108, 0
        %v2199 = vsel %vm606, %v2109, 0
        %v2202 = vsel %vm606, %v2110, 0
        %v2205 = vsel %vm606, %v2111, 0
        %v2208 = vsel %vm606, %v2112, 0
        %v2211 = vsel %vm606, %v2113, 0
        %v2214 = vsel %vm606, %v2114, 0
        %2216 = vmatpush.msra.mxu0 0.0
        %2217 = vmatpush.msra.mxu0 0.0
        %2218 = vmatpush.msra.mxu0 0.0
        %2219 = vmatpush.msra.mxu0 0.0
        %2220 = vmatpush.msra.mxu0 0.0
        %2221 = vmatpush.msra.mxu0 0.0
        %2222 = vmatpush.msra.mxu0 0.0
        %2223 = vmatpush.msra.mxu0 0.0
        %2224 = vmatpush.msra.mxu0 0.0
        %2225 = vmatpush.msra.mxu0 0.0
        %2226 = vmatpush.msra.mxu0 0.0
        %2227 = vmatpush.msra.mxu0 0.0
        %2228 = vmatpush.msra.mxu0 %v2119
        %2229 = vmatpush.msra.mxu0 %v2118
        %2230 = vmatpush.msra.mxu0 %v2117
        %2231 = vmatpush.msra.mxu0 %v2116
        %2232 = vmatmul.f32.gmra.mxu0 %v2121
        %v2233 = vpop.f32.mrf.mxu0
        %v2234 = vadd.f32 0.0, %v2233
        %2235 = vmatmul.f32.gmra.mxu0 %v2124
        %v2236 = vpop.f32.mrf.mxu0
        %v2237 = vadd.f32 0.0, %v2236
        %2238 = vmatmul.f32.gmra.mxu0 %v2127
        %v2239 = vpop.f32.mrf.mxu0
        %v2240 = vadd.f32 0.0, %v2239
        %2241 = vmatmul.f32.gmra.mxu0 %v2130
        %v2242 = vpop.f32.mrf.mxu0
        %v2243 = vadd.f32 0.0, %v2242
        %2244 = vmatmul.f32.gmra.mxu0 %v2133
        %v2245 = vpop.f32.mrf.mxu0
        %v2246 = vadd.f32 0.0, %v2245
        %2247 = vmatmul.f32.gmra.mxu0 %v2136
        %v2248 = vpop.f32.mrf.mxu0
        %v2249 = vadd.f32 0.0, %v2248
        %2250 = vmatmul.f32.gmra.mxu0 %v2139
        %v2251 = vpop.f32.mrf.mxu0
        %v2252 = vadd.f32 0.0, %v2251
        %2253 = vmatmul.f32.gmra.mxu0 %v2142
        %v2254 = vpop.f32.mrf.mxu0
        %v2255 = vadd.f32 0.0, %v2254
        %2256 = vmatmul.f32.gmra.mxu0 %v2145
        %v2257 = vpop.f32.mrf.mxu0
        %v2258 = vadd.f32 0.0, %v2257
        %2259 = vmatmul.f32.gmra.mxu0 %v2148
        %v2260 = vpop.f32.mrf.mxu0
        %v2261 = vadd.f32 0.0, %v2260
        %2262 = vmatmul.f32.gmra.mxu0 %v2151
        %v2263 = vpop.f32.mrf.mxu0
        %v2264 = vadd.f32 0.0, %v2263
        %2265 = vmatmul.f32.gmra.mxu0 %v2154
        %v2266 = vpop.f32.mrf.mxu0
        %v2267 = vadd.f32 0.0, %v2266
        %2268 = vmatmul.f32.gmra.mxu0 %v2157
        %v2269 = vpop.f32.mrf.mxu0
        %v2270 = vadd.f32 0.0, %v2269
        %2271 = vmatmul.f32.gmra.mxu0 %v2160
        %v2272 = vpop.f32.mrf.mxu0
        %v2273 = vadd.f32 0.0, %v2272
        %2274 = vmatmul.f32.gmra.mxu0 %v2163
        %v2275 = vpop.f32.mrf.mxu0
        %v2276 = vadd.f32 0.0, %v2275
        %2277 = vmatmul.f32.gmra.mxu0 %v2166
        %v2278 = vpop.f32.mrf.mxu0
        %v2279 = vadd.f32 0.0, %v2278
        %2280 = vmatmul.f32.gmra.mxu0 %v2169
        %v2281 = vpop.f32.mrf.mxu0
        %v2282 = vadd.f32 0.0, %v2281
        %2283 = vmatmul.f32.gmra.mxu0 %v2172
        %v2284 = vpop.f32.mrf.mxu0
        %v2285 = vadd.f32 0.0, %v2284
        %2286 = vmatmul.f32.gmra.mxu0 %v2175
        %v2287 = vpop.f32.mrf.mxu0
        %v2288 = vadd.f32 0.0, %v2287
        %2289 = vmatmul.f32.gmra.mxu0 %v2178
        %v2290 = vpop.f32.mrf.mxu0
        %v2291 = vadd.f32 0.0, %v2290
        %2292 = vmatmul.f32.gmra.mxu0 %v2181
        %v2293 = vpop.f32.mrf.mxu0
        %v2294 = vadd.f32 0.0, %v2293
        %2295 = vmatmul.f32.gmra.mxu0 %v2184
        %v2296 = vpop.f32.mrf.mxu0
        %v2297 = vadd.f32 0.0, %v2296
        %2298 = vmatmul.f32.gmra.mxu0 %v2187
        %v2299 = vpop.f32.mrf.mxu0
        %v2300 = vadd.f32 0.0, %v2299
        %2301 = vmatmul.f32.gmra.mxu0 %v2190
        %v2302 = vpop.f32.mrf.mxu0
        %v2303 = vadd.f32 0.0, %v2302
        %2304 = vmatmul.f32.gmra.mxu0 %v2193
        %v2305 = vpop.f32.mrf.mxu0
        %v2306 = vadd.f32 0.0, %v2305
        %2307 = vmatmul.f32.gmra.mxu0 %v2196
        %v2308 = vpop.f32.mrf.mxu0
        %v2309 = vadd.f32 0.0, %v2308
        %2310 = vmatmul.f32.gmra.mxu0 %v2199
        %v2311 = vpop.f32.mrf.mxu0
        %v2312 = vadd.f32 0.0, %v2311
        %2313 = vmatmul.f32.gmra.mxu0 %v2202
        %v2314 = vpop.f32.mrf.mxu0
        %v2315 = vadd.f32 0.0, %v2314
        %2316 = vmatmul.f32.gmra.mxu0 %v2205
        %v2317 = vpop.f32.mrf.mxu0
        %v2318 = vadd.f32 0.0, %v2317
        %2319 = vmatmul.f32.gmra.mxu0 %v2208
        %v2320 = vpop.f32.mrf.mxu0
        %v2321 = vadd.f32 0.0, %v2320
        %2322 = vmatmul.f32.gmra.mxu0 %v2211
        %v2323 = vpop.f32.mrf.mxu0
        %v2324 = vadd.f32 0.0, %v2323
        %2325 = vmatmul.f32.gmra.mxu0 %v2214
        %v2326 = vpop.f32.mrf.mxu0
        %v2327 = vadd.f32 0.0, %v2326
        %2328 = vdwg.mxu0
        %v2329 = vadd.f32 %v2051, %v2234
        %v2330 = vadd.f32 %v2052, %v2237
        %v2331 = vadd.f32 %v2053, %v2240
        %v2332 = vadd.f32 %v2054, %v2243
        %v2333 = vadd.f32 %v2055, %v2246
        %v2334 = vadd.f32 %v2056, %v2249
        %v2335 = vadd.f32 %v2057, %v2252
        %v2336 = vadd.f32 %v2058, %v2255
        %v2337 = vadd.f32 %v2059, %v2258
        %v2338 = vadd.f32 %v2060, %v2261
        %v2339 = vadd.f32 %v2061, %v2264
        %v2340 = vadd.f32 %v2062, %v2267
        %v2341 = vadd.f32 %v2063, %v2270
        %v2342 = vadd.f32 %v2064, %v2273
        %v2343 = vadd.f32 %v2065, %v2276
        %v2344 = vadd.f32 %v2066, %v2279
        %v2345 = vadd.f32 %v2067, %v2282
        %v2346 = vadd.f32 %v2068, %v2285
        %v2347 = vadd.f32 %v2069, %v2288
        %v2348 = vadd.f32 %v2070, %v2291
        %v2349 = vadd.f32 %v2071, %v2294
        %v2350 = vadd.f32 %v2072, %v2297
        %v2351 = vadd.f32 %v2073, %v2300
        %v2352 = vadd.f32 %v2074, %v2303
        %v2353 = vadd.f32 %v2075, %v2306
        %v2354 = vadd.f32 %v2076, %v2309
        %v2355 = vadd.f32 %v2077, %v2312
        %v2356 = vadd.f32 %v2078, %v2315
        %v2357 = vadd.f32 %v2079, %v2318
        %v2358 = vadd.f32 %v2080, %v2321
        %v2359 = vadd.f32 %v2081, %v2324
        %v2360 = vadd.f32 %v2082, %v2327
        %s2361 = scalar_lea.vmem [#allocation2], 32
        %v2362 = vld [vmem:[%s2361] sm:$0xff]
        %v2363 = vld [vmem:[%s2361 + $0x8] sm:$0xff]
        %v2364 = vld [vmem:[%s2361 + $0x10] sm:$0xff]
        %v2365 = vld [vmem:[%s2361 + $0x18] sm:$0xff]
        %v2366 = vld [vmem:[%s2361 + $0x20] sm:$0xff]
        %v2367 = vld [vmem:[%s2361 + $0x28] sm:$0xff]
        %v2368 = vld [vmem:[%s2361 + $0x30] sm:$0xff]
        %v2369 = vld [vmem:[%s2361 + $0x38] sm:$0xff]
        %v2370 = vld [vmem:[%s2361 + $0x40] sm:$0xff]
        %v2371 = vld [vmem:[%s2361 + $0x48] sm:$0xff]
        %v2372 = vld [vmem:[%s2361 + $0x50] sm:$0xff]
        %v2373 = vld [vmem:[%s2361 + $0x58] sm:$0xff]
        %v2374 = vld [vmem:[%s2361 + $0x60] sm:$0xff]
        %v2375 = vld [vmem:[%s2361 + $0x68] sm:$0xff]
        %v2376 = vld [vmem:[%s2361 + $0x70] sm:$0xff]
        %v2377 = vld [vmem:[%s2361 + $0x78] sm:$0xff]
        %v2378 = vld [vmem:[%s2361 + $0x80] sm:$0xff]
        %v2379 = vld [vmem:[%s2361 + $0x88] sm:$0xff]
        %v2380 = vld [vmem:[%s2361 + $0x90] sm:$0xff]
        %v2381 = vld [vmem:[%s2361 + $0x98] sm:$0xff]
        %v2382 = vld [vmem:[%s2361 + $0xa0] sm:$0xff]
        %v2383 = vld [vmem:[%s2361 + $0xa8] sm:$0xff]
        %v2384 = vld [vmem:[%s2361 + $0xb0] sm:$0xff]
        %v2385 = vld [vmem:[%s2361 + $0xb8] sm:$0xff]
        %v2386 = vld [vmem:[%s2361 + $0xc0] sm:$0xff]
        %v2387 = vld [vmem:[%s2361 + $0xc8] sm:$0xff]
        %v2388 = vld [vmem:[%s2361 + $0xd0] sm:$0xff]
        %v2389 = vld [vmem:[%s2361 + $0xd8] sm:$0xff]
        %v2390 = vld [vmem:[%s2361 + $0xe0] sm:$0xff]
        %v2391 = vld [vmem:[%s2361 + $0xe8] sm:$0xff]
        %v2392 = vld [vmem:[%s2361 + $0xf0] sm:$0xff]
        %v2393 = vld [vmem:[%s2361 + $0xf8] sm:$0xff]
        %s2394 = scalar_lea.vmem %s5, 192
        %v2395 = vld [vmem:[%s2394] sm:$0xff]
        %v2396 = vld [vmem:[%s2394 + $0x8] sm:$0xff]
        %v2397 = vld [vmem:[%s2394 + $0x10] sm:$0xff]
        %v2398 = vld [vmem:[%s2394 + $0x18] sm:$0xff]
        %v2400 = vsel %vm606, %v2362, 0
        %v2403 = vsel %vm606, %v2363, 0
        %v2406 = vsel %vm606, %v2364, 0
        %v2409 = vsel %vm606, %v2365, 0
        %v2412 = vsel %vm606, %v2366, 0
        %v2415 = vsel %vm606, %v2367, 0
        %v2418 = vsel %vm606, %v2368, 0
        %v2421 = vsel %vm606, %v2369, 0
        %v2424 = vsel %vm606, %v2370, 0
        %v2427 = vsel %vm606, %v2371, 0
        %v2430 = vsel %vm606, %v2372, 0
        %v2433 = vsel %vm606, %v2373, 0
        %v2436 = vsel %vm606, %v2374, 0
        %v2439 = vsel %vm606, %v2375, 0
        %v2442 = vsel %vm606, %v2376, 0
        %v2445 = vsel %vm606, %v2377, 0
        %v2448 = vsel %vm606, %v2378, 0
        %v2451 = vsel %vm606, %v2379, 0
        %v2454 = vsel %vm606, %v2380, 0
        %v2457 = vsel %vm606, %v2381, 0
        %v2460 = vsel %vm606, %v2382, 0
        %v2463 = vsel %vm606, %v2383, 0
        %v2466 = vsel %vm606, %v2384, 0
        %v2469 = vsel %vm606, %v2385, 0
        %v2472 = vsel %vm606, %v2386, 0
        %v2475 = vsel %vm606, %v2387, 0
        %v2478 = vsel %vm606, %v2388, 0
        %v2481 = vsel %vm606, %v2389, 0
        %v2484 = vsel %vm606, %v2390, 0
        %v2487 = vsel %vm606, %v2391, 0
        %v2490 = vsel %vm606, %v2392, 0
        %v2493 = vsel %vm606, %v2393, 0
        %2495 = vmatpush.msra.mxu0 0.0
        %2496 = vmatpush.msra.mxu0 0.0
        %2497 = vmatpush.msra.mxu0 0.0
        %2498 = vmatpush.msra.mxu0 0.0
        %2499 = vmatpush.msra.mxu0 0.0
        %2500 = vmatpush.msra.mxu0 0.0
        %2501 = vmatpush.msra.mxu0 0.0
        %2502 = vmatpush.msra.mxu0 0.0
        %2503 = vmatpush.msra.mxu0 0.0
        %2504 = vmatpush.msra.mxu0 0.0
        %2505 = vmatpush.msra.mxu0 0.0
        %2506 = vmatpush.msra.mxu0 0.0
        %2507 = vmatpush.msra.mxu0 %v2398
        %2508 = vmatpush.msra.mxu0 %v2397
        %2509 = vmatpush.msra.mxu0 %v2396
        %2510 = vmatpush.msra.mxu0 %v2395
        %2511 = vmatmul.f32.gmra.mxu0 %v2400
        %v2512 = vpop.f32.mrf.mxu0
        %v2513 = vadd.f32 0.0, %v2512
        %2514 = vmatmul.f32.gmra.mxu0 %v2403
        %v2515 = vpop.f32.mrf.mxu0
        %v2516 = vadd.f32 0.0, %v2515
        %2517 = vmatmul.f32.gmra.mxu0 %v2406
        %v2518 = vpop.f32.mrf.mxu0
        %v2519 = vadd.f32 0.0, %v2518
        %2520 = vmatmul.f32.gmra.mxu0 %v2409
        %v2521 = vpop.f32.mrf.mxu0
        %v2522 = vadd.f32 0.0, %v2521
        %2523 = vmatmul.f32.gmra.mxu0 %v2412
        %v2524 = vpop.f32.mrf.mxu0
        %v2525 = vadd.f32 0.0, %v2524
        %2526 = vmatmul.f32.gmra.mxu0 %v2415
        %v2527 = vpop.f32.mrf.mxu0
        %v2528 = vadd.f32 0.0, %v2527
        %2529 = vmatmul.f32.gmra.mxu0 %v2418
        %v2530 = vpop.f32.mrf.mxu0
        %v2531 = vadd.f32 0.0, %v2530
        %2532 = vmatmul.f32.gmra.mxu0 %v2421
        %v2533 = vpop.f32.mrf.mxu0
        %v2534 = vadd.f32 0.0, %v2533
        %2535 = vmatmul.f32.gmra.mxu0 %v2424
        %v2536 = vpop.f32.mrf.mxu0
        %v2537 = vadd.f32 0.0, %v2536
        %2538 = vmatmul.f32.gmra.mxu0 %v2427
        %v2539 = vpop.f32.mrf.mxu0
        %v2540 = vadd.f32 0.0, %v2539
        %2541 = vmatmul.f32.gmra.mxu0 %v2430
        %v2542 = vpop.f32.mrf.mxu0
        %v2543 = vadd.f32 0.0, %v2542
        %2544 = vmatmul.f32.gmra.mxu0 %v2433
        %v2545 = vpop.f32.mrf.mxu0
        %v2546 = vadd.f32 0.0, %v2545
        %2547 = vmatmul.f32.gmra.mxu0 %v2436
        %v2548 = vpop.f32.mrf.mxu0
        %v2549 = vadd.f32 0.0, %v2548
        %2550 = vmatmul.f32.gmra.mxu0 %v2439
        %v2551 = vpop.f32.mrf.mxu0
        %v2552 = vadd.f32 0.0, %v2551
        %2553 = vmatmul.f32.gmra.mxu0 %v2442
        %v2554 = vpop.f32.mrf.mxu0
        %v2555 = vadd.f32 0.0, %v2554
        %2556 = vmatmul.f32.gmra.mxu0 %v2445
        %v2557 = vpop.f32.mrf.mxu0
        %v2558 = vadd.f32 0.0, %v2557
        %2559 = vmatmul.f32.gmra.mxu0 %v2448
        %v2560 = vpop.f32.mrf.mxu0
        %v2561 = vadd.f32 0.0, %v2560
        %2562 = vmatmul.f32.gmra.mxu0 %v2451
        %v2563 = vpop.f32.mrf.mxu0
        %v2564 = vadd.f32 0.0, %v2563
        %2565 = vmatmul.f32.gmra.mxu0 %v2454
        %v2566 = vpop.f32.mrf.mxu0
        %v2567 = vadd.f32 0.0, %v2566
        %2568 = vmatmul.f32.gmra.mxu0 %v2457
        %v2569 = vpop.f32.mrf.mxu0
        %v2570 = vadd.f32 0.0, %v2569
        %2571 = vmatmul.f32.gmra.mxu0 %v2460
        %v2572 = vpop.f32.mrf.mxu0
        %v2573 = vadd.f32 0.0, %v2572
        %2574 = vmatmul.f32.gmra.mxu0 %v2463
        %v2575 = vpop.f32.mrf.mxu0
        %v2576 = vadd.f32 0.0, %v2575
        %2577 = vmatmul.f32.gmra.mxu0 %v2466
        %v2578 = vpop.f32.mrf.mxu0
        %v2579 = vadd.f32 0.0, %v2578
        %2580 = vmatmul.f32.gmra.mxu0 %v2469
        %v2581 = vpop.f32.mrf.mxu0
        %v2582 = vadd.f32 0.0, %v2581
        %2583 = vmatmul.f32.gmra.mxu0 %v2472
        %v2584 = vpop.f32.mrf.mxu0
        %v2585 = vadd.f32 0.0, %v2584
        %2586 = vmatmul.f32.gmra.mxu0 %v2475
        %v2587 = vpop.f32.mrf.mxu0
        %v2588 = vadd.f32 0.0, %v2587
        %2589 = vmatmul.f32.gmra.mxu0 %v2478
        %v2590 = vpop.f32.mrf.mxu0
        %v2591 = vadd.f32 0.0, %v2590
        %2592 = vmatmul.f32.gmra.mxu0 %v2481
        %v2593 = vpop.f32.mrf.mxu0
        %v2594 = vadd.f32 0.0, %v2593
        %2595 = vmatmul.f32.gmra.mxu0 %v2484
        %v2596 = vpop.f32.mrf.mxu0
        %v2597 = vadd.f32 0.0, %v2596
        %2598 = vmatmul.f32.gmra.mxu0 %v2487
        %v2599 = vpop.f32.mrf.mxu0
        %v2600 = vadd.f32 0.0, %v2599
        %2601 = vmatmul.f32.gmra.mxu0 %v2490
        %v2602 = vpop.f32.mrf.mxu0
        %v2603 = vadd.f32 0.0, %v2602
        %2604 = vmatmul.f32.gmra.mxu0 %v2493
        %v2605 = vpop.f32.mrf.mxu0
        %v2606 = vadd.f32 0.0, %v2605
        %2607 = vdwg.mxu0
        %v2608 = vadd.f32 %v2329, %v2513
        %v2609 = vadd.f32 %v2330, %v2516
        %v2610 = vadd.f32 %v2331, %v2519
        %v2611 = vadd.f32 %v2332, %v2522
        %v2612 = vadd.f32 %v2333, %v2525
        %v2613 = vadd.f32 %v2334, %v2528
        %v2614 = vadd.f32 %v2335, %v2531
        %v2615 = vadd.f32 %v2336, %v2534
        %v2616 = vadd.f32 %v2337, %v2537
        %v2617 = vadd.f32 %v2338, %v2540
        %v2618 = vadd.f32 %v2339, %v2543
        %v2619 = vadd.f32 %v2340, %v2546
        %v2620 = vadd.f32 %v2341, %v2549
        %v2621 = vadd.f32 %v2342, %v2552
        %v2622 = vadd.f32 %v2343, %v2555
        %v2623 = vadd.f32 %v2344, %v2558
        %v2624 = vadd.f32 %v2345, %v2561
        %v2625 = vadd.f32 %v2346, %v2564
        %v2626 = vadd.f32 %v2347, %v2567
        %v2627 = vadd.f32 %v2348, %v2570
        %v2628 = vadd.f32 %v2349, %v2573
        %v2629 = vadd.f32 %v2350, %v2576
        %v2630 = vadd.f32 %v2351, %v2579
        %v2631 = vadd.f32 %v2352, %v2582
        %v2632 = vadd.f32 %v2353, %v2585
        %v2633 = vadd.f32 %v2354, %v2588
        %v2634 = vadd.f32 %v2355, %v2591
        %v2635 = vadd.f32 %v2356, %v2594
        %v2636 = vadd.f32 %v2357, %v2597
        %v2637 = vadd.f32 %v2358, %v2600
        %v2638 = vadd.f32 %v2359, %v2603
        %v2639 = vadd.f32 %v2360, %v2606
        %s2640 = scalar_lea.vmem [#allocation2], 320
        %v2641 = vld [vmem:[%s2640] sm:$0xff]
        %v2642 = vld [vmem:[%s2640 + $0x8] sm:$0xff]
        %v2643 = vld [vmem:[%s2640 + $0x10] sm:$0xff]
        %v2644 = vld [vmem:[%s2640 + $0x18] sm:$0xff]
        %v2645 = vld [vmem:[%s2640 + $0x20] sm:$0xff]
        %v2646 = vld [vmem:[%s2640 + $0x28] sm:$0xff]
        %v2647 = vld [vmem:[%s2640 + $0x30] sm:$0xff]
        %v2648 = vld [vmem:[%s2640 + $0x38] sm:$0xff]
        %v2649 = vld [vmem:[%s2640 + $0x40] sm:$0xff]
        %v2650 = vld [vmem:[%s2640 + $0x48] sm:$0xff]
        %v2651 = vld [vmem:[%s2640 + $0x50] sm:$0xff]
        %v2652 = vld [vmem:[%s2640 + $0x58] sm:$0xff]
        %v2653 = vld [vmem:[%s2640 + $0x60] sm:$0xff]
        %v2654 = vld [vmem:[%s2640 + $0x68] sm:$0xff]
        %v2655 = vld [vmem:[%s2640 + $0x70] sm:$0xff]
        %v2656 = vld [vmem:[%s2640 + $0x78] sm:$0xff]
        %v2657 = vld [vmem:[%s2640 + $0x80] sm:$0xff]
        %v2658 = vld [vmem:[%s2640 + $0x88] sm:$0xff]
        %v2659 = vld [vmem:[%s2640 + $0x90] sm:$0xff]
        %v2660 = vld [vmem:[%s2640 + $0x98] sm:$0xff]
        %v2661 = vld [vmem:[%s2640 + $0xa0] sm:$0xff]
        %v2662 = vld [vmem:[%s2640 + $0xa8] sm:$0xff]
        %v2663 = vld [vmem:[%s2640 + $0xb0] sm:$0xff]
        %v2664 = vld [vmem:[%s2640 + $0xb8] sm:$0xff]
        %v2665 = vld [vmem:[%s2640 + $0xc0] sm:$0xff]
        %v2666 = vld [vmem:[%s2640 + $0xc8] sm:$0xff]
        %v2667 = vld [vmem:[%s2640 + $0xd0] sm:$0xff]
        %v2668 = vld [vmem:[%s2640 + $0xd8] sm:$0xff]
        %v2669 = vld [vmem:[%s2640 + $0xe0] sm:$0xff]
        %v2670 = vld [vmem:[%s2640 + $0xe8] sm:$0xff]
        %v2671 = vld [vmem:[%s2640 + $0xf0] sm:$0xff]
        %v2672 = vld [vmem:[%s2640 + $0xf8] sm:$0xff]
        %s2673 = scalar_lea.vmem %s5, 224
        %v2674 = vld [vmem:[%s2673] sm:$0xff]
        %v2675 = vld [vmem:[%s2673 + $0x8] sm:$0xff]
        %v2676 = vld [vmem:[%s2673 + $0x10] sm:$0xff]
        %v2677 = vld [vmem:[%s2673 + $0x18] sm:$0xff]
        %v2679 = vsel %vm606, %v2641, 0
        %v2682 = vsel %vm606, %v2642, 0
        %v2685 = vsel %vm606, %v2643, 0
        %v2688 = vsel %vm606, %v2644, 0
        %v2691 = vsel %vm606, %v2645, 0
        %v2694 = vsel %vm606, %v2646, 0
        %v2697 = vsel %vm606, %v2647, 0
        %v2700 = vsel %vm606, %v2648, 0
        %v2703 = vsel %vm606, %v2649, 0
        %v2706 = vsel %vm606, %v2650, 0
        %v2709 = vsel %vm606, %v2651, 0
        %v2712 = vsel %vm606, %v2652, 0
        %v2715 = vsel %vm606, %v2653, 0
        %v2718 = vsel %vm606, %v2654, 0
        %v2721 = vsel %vm606, %v2655, 0
        %v2724 = vsel %vm606, %v2656, 0
        %v2727 = vsel %vm606, %v2657, 0
        %v2730 = vsel %vm606, %v2658, 0
        %v2733 = vsel %vm606, %v2659, 0
        %v2736 = vsel %vm606, %v2660, 0
        %v2739 = vsel %vm606, %v2661, 0
        %v2742 = vsel %vm606, %v2662, 0
        %v2745 = vsel %vm606, %v2663, 0
        %v2748 = vsel %vm606, %v2664, 0
        %v2751 = vsel %vm606, %v2665, 0
        %v2754 = vsel %vm606, %v2666, 0
        %v2757 = vsel %vm606, %v2667, 0
        %v2760 = vsel %vm606, %v2668, 0
        %v2763 = vsel %vm606, %v2669, 0
        %v2766 = vsel %vm606, %v2670, 0
        %v2769 = vsel %vm606, %v2671, 0
        %v2772 = vsel %vm606, %v2672, 0
        %2774 = vmatpush.msra.mxu0 0.0
        %2775 = vmatpush.msra.mxu0 0.0
        %2776 = vmatpush.msra.mxu0 0.0
        %2777 = vmatpush.msra.mxu0 0.0
        %2778 = vmatpush.msra.mxu0 0.0
        %2779 = vmatpush.msra.mxu0 0.0
        %2780 = vmatpush.msra.mxu0 0.0
        %2781 = vmatpush.msra.mxu0 0.0
        %2782 = vmatpush.msra.mxu0 0.0
        %2783 = vmatpush.msra.mxu0 0.0
        %2784 = vmatpush.msra.mxu0 0.0
        %2785 = vmatpush.msra.mxu0 0.0
        %2786 = vmatpush.msra.mxu0 %v2677
        %2787 = vmatpush.msra.mxu0 %v2676
        %2788 = vmatpush.msra.mxu0 %v2675
        %2789 = vmatpush.msra.mxu0 %v2674
        %2790 = vmatmul.f32.gmra.mxu0 %v2679
        %v2791 = vpop.f32.mrf.mxu0
        %v2792 = vadd.f32 0.0, %v2791
        %2793 = vmatmul.f32.gmra.mxu0 %v2682
        %v2794 = vpop.f32.mrf.mxu0
        %v2795 = vadd.f32 0.0, %v2794
        %2796 = vmatmul.f32.gmra.mxu0 %v2685
        %v2797 = vpop.f32.mrf.mxu0
        %v2798 = vadd.f32 0.0, %v2797
        %2799 = vmatmul.f32.gmra.mxu0 %v2688
        %v2800 = vpop.f32.mrf.mxu0
        %v2801 = vadd.f32 0.0, %v2800
        %2802 = vmatmul.f32.gmra.mxu0 %v2691
        %v2803 = vpop.f32.mrf.mxu0
        %v2804 = vadd.f32 0.0, %v2803
        %2805 = vmatmul.f32.gmra.mxu0 %v2694
        %v2806 = vpop.f32.mrf.mxu0
        %v2807 = vadd.f32 0.0, %v2806
        %2808 = vmatmul.f32.gmra.mxu0 %v2697
        %v2809 = vpop.f32.mrf.mxu0
        %v2810 = vadd.f32 0.0, %v2809
        %2811 = vmatmul.f32.gmra.mxu0 %v2700
        %v2812 = vpop.f32.mrf.mxu0
        %v2813 = vadd.f32 0.0, %v2812
        %2814 = vmatmul.f32.gmra.mxu0 %v2703
        %v2815 = vpop.f32.mrf.mxu0
        %v2816 = vadd.f32 0.0, %v2815
        %2817 = vmatmul.f32.gmra.mxu0 %v2706
        %v2818 = vpop.f32.mrf.mxu0
        %v2819 = vadd.f32 0.0, %v2818
        %2820 = vmatmul.f32.gmra.mxu0 %v2709
        %v2821 = vpop.f32.mrf.mxu0
        %v2822 = vadd.f32 0.0, %v2821
        %2823 = vmatmul.f32.gmra.mxu0 %v2712
        %v2824 = vpop.f32.mrf.mxu0
        %v2825 = vadd.f32 0.0, %v2824
        %2826 = vmatmul.f32.gmra.mxu0 %v2715
        %v2827 = vpop.f32.mrf.mxu0
        %v2828 = vadd.f32 0.0, %v2827
        %2829 = vmatmul.f32.gmra.mxu0 %v2718
        %v2830 = vpop.f32.mrf.mxu0
        %v2831 = vadd.f32 0.0, %v2830
        %2832 = vmatmul.f32.gmra.mxu0 %v2721
        %v2833 = vpop.f32.mrf.mxu0
        %v2834 = vadd.f32 0.0, %v2833
        %2835 = vmatmul.f32.gmra.mxu0 %v2724
        %v2836 = vpop.f32.mrf.mxu0
        %v2837 = vadd.f32 0.0, %v2836
        %2838 = vmatmul.f32.gmra.mxu0 %v2727
        %v2839 = vpop.f32.mrf.mxu0
        %v2840 = vadd.f32 0.0, %v2839
        %2841 = vmatmul.f32.gmra.mxu0 %v2730
        %v2842 = vpop.f32.mrf.mxu0
        %v2843 = vadd.f32 0.0, %v2842
        %2844 = vmatmul.f32.gmra.mxu0 %v2733
        %v2845 = vpop.f32.mrf.mxu0
        %v2846 = vadd.f32 0.0, %v2845
        %2847 = vmatmul.f32.gmra.mxu0 %v2736
        %v2848 = vpop.f32.mrf.mxu0
        %v2849 = vadd.f32 0.0, %v2848
        %2850 = vmatmul.f32.gmra.mxu0 %v2739
        %v2851 = vpop.f32.mrf.mxu0
        %v2852 = vadd.f32 0.0, %v2851
        %2853 = vmatmul.f32.gmra.mxu0 %v2742
        %v2854 = vpop.f32.mrf.mxu0
        %v2855 = vadd.f32 0.0, %v2854
        %2856 = vmatmul.f32.gmra.mxu0 %v2745
        %v2857 = vpop.f32.mrf.mxu0
        %v2858 = vadd.f32 0.0, %v2857
        %2859 = vmatmul.f32.gmra.mxu0 %v2748
        %v2860 = vpop.f32.mrf.mxu0
        %v2861 = vadd.f32 0.0, %v2860
        %2862 = vmatmul.f32.gmra.mxu0 %v2751
        %v2863 = vpop.f32.mrf.mxu0
        %v2864 = vadd.f32 0.0, %v2863
        %2865 = vmatmul.f32.gmra.mxu0 %v2754
        %v2866 = vpop.f32.mrf.mxu0
        %v2867 = vadd.f32 0.0, %v2866
        %2868 = vmatmul.f32.gmra.mxu0 %v2757
        %v2869 = vpop.f32.mrf.mxu0
        %v2870 = vadd.f32 0.0, %v2869
        %2871 = vmatmul.f32.gmra.mxu0 %v2760
        %v2872 = vpop.f32.mrf.mxu0
        %v2873 = vadd.f32 0.0, %v2872
        %2874 = vmatmul.f32.gmra.mxu0 %v2763
        %v2875 = vpop.f32.mrf.mxu0
        %v2876 = vadd.f32 0.0, %v2875
        %2877 = vmatmul.f32.gmra.mxu0 %v2766
        %v2878 = vpop.f32.mrf.mxu0
        %v2879 = vadd.f32 0.0, %v2878
        %2880 = vmatmul.f32.gmra.mxu0 %v2769
        %v2881 = vpop.f32.mrf.mxu0
        %v2882 = vadd.f32 0.0, %v2881
        %2883 = vmatmul.f32.gmra.mxu0 %v2772
        %v2884 = vpop.f32.mrf.mxu0
        %v2885 = vadd.f32 0.0, %v2884
        %2886 = vdwg.mxu0
        %v2887 = vadd.f32 %v2608, %v2792
        %v2888 = vadd.f32 %v2609, %v2795
        %v2889 = vadd.f32 %v2610, %v2798
        %v2890 = vadd.f32 %v2611, %v2801
        %v2891 = vadd.f32 %v2612, %v2804
        %v2892 = vadd.f32 %v2613, %v2807
        %v2893 = vadd.f32 %v2614, %v2810
        %v2894 = vadd.f32 %v2615, %v2813
        %v2895 = vadd.f32 %v2616, %v2816
        %v2896 = vadd.f32 %v2617, %v2819
        %v2897 = vadd.f32 %v2618, %v2822
        %v2898 = vadd.f32 %v2619, %v2825
        %v2899 = vadd.f32 %v2620, %v2828
        %v2900 = vadd.f32 %v2621, %v2831
        %v2901 = vadd.f32 %v2622, %v2834
        %v2902 = vadd.f32 %v2623, %v2837
        %v2903 = vadd.f32 %v2624, %v2840
        %v2904 = vadd.f32 %v2625, %v2843
        %v2905 = vadd.f32 %v2626, %v2846
        %v2906 = vadd.f32 %v2627, %v2849
        %v2907 = vadd.f32 %v2628, %v2852
        %v2908 = vadd.f32 %v2629, %v2855
        %v2909 = vadd.f32 %v2630, %v2858
        %v2910 = vadd.f32 %v2631, %v2861
        %v2911 = vadd.f32 %v2632, %v2864
        %v2912 = vadd.f32 %v2633, %v2867
        %v2913 = vadd.f32 %v2634, %v2870
        %v2914 = vadd.f32 %v2635, %v2873
        %v2915 = vadd.f32 %v2636, %v2876
        %v2916 = vadd.f32 %v2637, %v2879
        %v2917 = vadd.f32 %v2638, %v2882
        %v2918 = vadd.f32 %v2639, %v2885
        %s2919 = scalar_lea.vmem [#allocation2], 608
        %v2920 = vld [vmem:[%s2919] sm:$0xff]
        %v2921 = vld [vmem:[%s2919 + $0x8] sm:$0xff]
        %v2922 = vld [vmem:[%s2919 + $0x10] sm:$0xff]
        %v2923 = vld [vmem:[%s2919 + $0x18] sm:$0xff]
        %v2924 = vld [vmem:[%s2919 + $0x20] sm:$0xff]
        %v2925 = vld [vmem:[%s2919 + $0x28] sm:$0xff]
        %v2926 = vld [vmem:[%s2919 + $0x30] sm:$0xff]
        %v2927 = vld [vmem:[%s2919 + $0x38] sm:$0xff]
        %v2928 = vld [vmem:[%s2919 + $0x40] sm:$0xff]
        %v2929 = vld [vmem:[%s2919 + $0x48] sm:$0xff]
        %v2930 = vld [vmem:[%s2919 + $0x50] sm:$0xff]
        %v2931 = vld [vmem:[%s2919 + $0x58] sm:$0xff]
        %v2932 = vld [vmem:[%s2919 + $0x60] sm:$0xff]
        %v2933 = vld [vmem:[%s2919 + $0x68] sm:$0xff]
        %v2934 = vld [vmem:[%s2919 + $0x70] sm:$0xff]
        %v2935 = vld [vmem:[%s2919 + $0x78] sm:$0xff]
        %v2936 = vld [vmem:[%s2919 + $0x80] sm:$0xff]
        %v2937 = vld [vmem:[%s2919 + $0x88] sm:$0xff]
        %v2938 = vld [vmem:[%s2919 + $0x90] sm:$0xff]
        %v2939 = vld [vmem:[%s2919 + $0x98] sm:$0xff]
        %v2940 = vld [vmem:[%s2919 + $0xa0] sm:$0xff]
        %v2941 = vld [vmem:[%s2919 + $0xa8] sm:$0xff]
        %v2942 = vld [vmem:[%s2919 + $0xb0] sm:$0xff]
        %v2943 = vld [vmem:[%s2919 + $0xb8] sm:$0xff]
        %v2944 = vld [vmem:[%s2919 + $0xc0] sm:$0xff]
        %v2945 = vld [vmem:[%s2919 + $0xc8] sm:$0xff]
        %v2946 = vld [vmem:[%s2919 + $0xd0] sm:$0xff]
        %v2947 = vld [vmem:[%s2919 + $0xd8] sm:$0xff]
        %v2948 = vld [vmem:[%s2919 + $0xe0] sm:$0xff]
        %v2949 = vld [vmem:[%s2919 + $0xe8] sm:$0xff]
        %v2950 = vld [vmem:[%s2919 + $0xf0] sm:$0xff]
        %v2951 = vld [vmem:[%s2919 + $0xf8] sm:$0xff]
        %s2952 = scalar_lea.vmem %s5, 256
        %v2953 = vld [vmem:[%s2952] sm:$0xff]
        %v2954 = vld [vmem:[%s2952 + $0x8] sm:$0xff]
        %v2955 = vld [vmem:[%s2952 + $0x10] sm:$0xff]
        %v2956 = vld [vmem:[%s2952 + $0x18] sm:$0xff]
        %v2958 = vsel %vm606, %v2920, 0
        %v2961 = vsel %vm606, %v2921, 0
        %v2964 = vsel %vm606, %v2922, 0
        %v2967 = vsel %vm606, %v2923, 0
        %v2970 = vsel %vm606, %v2924, 0
        %v2973 = vsel %vm606, %v2925, 0
        %v2976 = vsel %vm606, %v2926, 0
        %v2979 = vsel %vm606, %v2927, 0
        %v2982 = vsel %vm606, %v2928, 0
        %v2985 = vsel %vm606, %v2929, 0
        %v2988 = vsel %vm606, %v2930, 0
        %v2991 = vsel %vm606, %v2931, 0
        %v2994 = vsel %vm606, %v2932, 0
        %v2997 = vsel %vm606, %v2933, 0
        %v3000 = vsel %vm606, %v2934, 0
        %v3003 = vsel %vm606, %v2935, 0
        %v3006 = vsel %vm606, %v2936, 0
        %v3009 = vsel %vm606, %v2937, 0
        %v3012 = vsel %vm606, %v2938, 0
        %v3015 = vsel %vm606, %v2939, 0
        %v3018 = vsel %vm606, %v2940, 0
        %v3021 = vsel %vm606, %v2941, 0
        %v3024 = vsel %vm606, %v2942, 0
        %v3027 = vsel %vm606, %v2943, 0
        %v3030 = vsel %vm606, %v2944, 0
        %v3033 = vsel %vm606, %v2945, 0
        %v3036 = vsel %vm606, %v2946, 0
        %v3039 = vsel %vm606, %v2947, 0
        %v3042 = vsel %vm606, %v2948, 0
        %v3045 = vsel %vm606, %v2949, 0
        %v3048 = vsel %vm606, %v2950, 0
        %v3051 = vsel %vm606, %v2951, 0
        %3053 = vmatpush.msra.mxu0 0.0
        %3054 = vmatpush.msra.mxu0 0.0
        %3055 = vmatpush.msra.mxu0 0.0
        %3056 = vmatpush.msra.mxu0 0.0
        %3057 = vmatpush.msra.mxu0 0.0
        %3058 = vmatpush.msra.mxu0 0.0
        %3059 = vmatpush.msra.mxu0 0.0
        %3060 = vmatpush.msra.mxu0 0.0
        %3061 = vmatpush.msra.mxu0 0.0
        %3062 = vmatpush.msra.mxu0 0.0
        %3063 = vmatpush.msra.mxu0 0.0
        %3064 = vmatpush.msra.mxu0 0.0
        %3065 = vmatpush.msra.mxu0 %v2956
        %3066 = vmatpush.msra.mxu0 %v2955
        %3067 = vmatpush.msra.mxu0 %v2954
        %3068 = vmatpush.msra.mxu0 %v2953
        %3069 = vmatmul.f32.gmra.mxu0 %v2958
        %v3070 = vpop.f32.mrf.mxu0
        %v3071 = vadd.f32 0.0, %v3070
        %3072 = vmatmul.f32.gmra.mxu0 %v2961
        %v3073 = vpop.f32.mrf.mxu0
        %v3074 = vadd.f32 0.0, %v3073
        %3075 = vmatmul.f32.gmra.mxu0 %v2964
        %v3076 = vpop.f32.mrf.mxu0
        %v3077 = vadd.f32 0.0, %v3076
        %3078 = vmatmul.f32.gmra.mxu0 %v2967
        %v3079 = vpop.f32.mrf.mxu0
        %v3080 = vadd.f32 0.0, %v3079
        %3081 = vmatmul.f32.gmra.mxu0 %v2970
        %v3082 = vpop.f32.mrf.mxu0
        %v3083 = vadd.f32 0.0, %v3082
        %3084 = vmatmul.f32.gmra.mxu0 %v2973
        %v3085 = vpop.f32.mrf.mxu0
        %v3086 = vadd.f32 0.0, %v3085
        %3087 = vmatmul.f32.gmra.mxu0 %v2976
        %v3088 = vpop.f32.mrf.mxu0
        %v3089 = vadd.f32 0.0, %v3088
        %3090 = vmatmul.f32.gmra.mxu0 %v2979
        %v3091 = vpop.f32.mrf.mxu0
        %v3092 = vadd.f32 0.0, %v3091
        %3093 = vmatmul.f32.gmra.mxu0 %v2982
        %v3094 = vpop.f32.mrf.mxu0
        %v3095 = vadd.f32 0.0, %v3094
        %3096 = vmatmul.f32.gmra.mxu0 %v2985
        %v3097 = vpop.f32.mrf.mxu0
        %v3098 = vadd.f32 0.0, %v3097
        %3099 = vmatmul.f32.gmra.mxu0 %v2988
        %v3100 = vpop.f32.mrf.mxu0
        %v3101 = vadd.f32 0.0, %v3100
        %3102 = vmatmul.f32.gmra.mxu0 %v2991
        %v3103 = vpop.f32.mrf.mxu0
        %v3104 = vadd.f32 0.0, %v3103
        %3105 = vmatmul.f32.gmra.mxu0 %v2994
        %v3106 = vpop.f32.mrf.mxu0
        %v3107 = vadd.f32 0.0, %v3106
        %3108 = vmatmul.f32.gmra.mxu0 %v2997
        %v3109 = vpop.f32.mrf.mxu0
        %v3110 = vadd.f32 0.0, %v3109
        %3111 = vmatmul.f32.gmra.mxu0 %v3000
        %v3112 = vpop.f32.mrf.mxu0
        %v3113 = vadd.f32 0.0, %v3112
        %3114 = vmatmul.f32.gmra.mxu0 %v3003
        %v3115 = vpop.f32.mrf.mxu0
        %v3116 = vadd.f32 0.0, %v3115
        %3117 = vmatmul.f32.gmra.mxu0 %v3006
        %v3118 = vpop.f32.mrf.mxu0
        %v3119 = vadd.f32 0.0, %v3118
        %3120 = vmatmul.f32.gmra.mxu0 %v3009
        %v3121 = vpop.f32.mrf.mxu0
        %v3122 = vadd.f32 0.0, %v3121
        %3123 = vmatmul.f32.gmra.mxu0 %v3012
        %v3124 = vpop.f32.mrf.mxu0
        %v3125 = vadd.f32 0.0, %v3124
        %3126 = vmatmul.f32.gmra.mxu0 %v3015
        %v3127 = vpop.f32.mrf.mxu0
        %v3128 = vadd.f32 0.0, %v3127
        %3129 = vmatmul.f32.gmra.mxu0 %v3018
        %v3130 = vpop.f32.mrf.mxu0
        %v3131 = vadd.f32 0.0, %v3130
        %3132 = vmatmul.f32.gmra.mxu0 %v3021
        %v3133 = vpop.f32.mrf.mxu0
        %v3134 = vadd.f32 0.0, %v3133
        %3135 = vmatmul.f32.gmra.mxu0 %v3024
        %v3136 = vpop.f32.mrf.mxu0
        %v3137 = vadd.f32 0.0, %v3136
        %3138 = vmatmul.f32.gmra.mxu0 %v3027
        %v3139 = vpop.f32.mrf.mxu0
        %v3140 = vadd.f32 0.0, %v3139
        %3141 = vmatmul.f32.gmra.mxu0 %v3030
        %v3142 = vpop.f32.mrf.mxu0
        %v3143 = vadd.f32 0.0, %v3142
        %3144 = vmatmul.f32.gmra.mxu0 %v3033
        %v3145 = vpop.f32.mrf.mxu0
        %v3146 = vadd.f32 0.0, %v3145
        %3147 = vmatmul.f32.gmra.mxu0 %v3036
        %v3148 = vpop.f32.mrf.mxu0
        %v3149 = vadd.f32 0.0, %v3148
        %3150 = vmatmul.f32.gmra.mxu0 %v3039
        %v3151 = vpop.f32.mrf.mxu0
        %v3152 = vadd.f32 0.0, %v3151
        %3153 = vmatmul.f32.gmra.mxu0 %v3042
        %v3154 = vpop.f32.mrf.mxu0
        %v3155 = vadd.f32 0.0, %v3154
        %3156 = vmatmul.f32.gmra.mxu0 %v3045
        %v3157 = vpop.f32.mrf.mxu0
        %v3158 = vadd.f32 0.0, %v3157
        %3159 = vmatmul.f32.gmra.mxu0 %v3048
        %v3160 = vpop.f32.mrf.mxu0
        %v3161 = vadd.f32 0.0, %v3160
        %3162 = vmatmul.f32.gmra.mxu0 %v3051
        %v3163 = vpop.f32.mrf.mxu0
        %v3164 = vadd.f32 0.0, %v3163
        %3165 = vdwg.mxu0
        %v3166 = vadd.f32 %v2887, %v3071
        %v3167 = vadd.f32 %v2888, %v3074
        %v3168 = vadd.f32 %v2889, %v3077
        %v3169 = vadd.f32 %v2890, %v3080
        %v3170 = vadd.f32 %v2891, %v3083
        %v3171 = vadd.f32 %v2892, %v3086
        %v3172 = vadd.f32 %v2893, %v3089
        %v3173 = vadd.f32 %v2894, %v3092
        %v3174 = vadd.f32 %v2895, %v3095
        %v3175 = vadd.f32 %v2896, %v3098
        %v3176 = vadd.f32 %v2897, %v3101
        %v3177 = vadd.f32 %v2898, %v3104
        %v3178 = vadd.f32 %v2899, %v3107
        %v3179 = vadd.f32 %v2900, %v3110
        %v3180 = vadd.f32 %v2901, %v3113
        %v3181 = vadd.f32 %v2902, %v3116
        %v3182 = vadd.f32 %v2903, %v3119
        %v3183 = vadd.f32 %v2904, %v3122
        %v3184 = vadd.f32 %v2905, %v3125
        %v3185 = vadd.f32 %v2906, %v3128
        %v3186 = vadd.f32 %v2907, %v3131
        %v3187 = vadd.f32 %v2908, %v3134
        %v3188 = vadd.f32 %v2909, %v3137
        %v3189 = vadd.f32 %v2910, %v3140
        %v3190 = vadd.f32 %v2911, %v3143
        %v3191 = vadd.f32 %v2912, %v3146
        %v3192 = vadd.f32 %v2913, %v3149
        %v3193 = vadd.f32 %v2914, %v3152
        %v3194 = vadd.f32 %v2915, %v3155
        %v3195 = vadd.f32 %v2916, %v3158
        %v3196 = vadd.f32 %v2917, %v3161
        %v3197 = vadd.f32 %v2918, %v3164
        %3198 = vxpose.xlu0.b32.start [1/16] %v3166, 128
        %3199 = vxpose.xlu0.b32.cont [2/16] %v3167, 128
        %3200 = vxpose.xlu0.b32.cont [3/16] %v3168, 128
        %3201 = vxpose.xlu0.b32.cont [4/16] %v3169, 128
        %3202 = vxpose.xlu0.b32.cont [5/16] %v3170, 128
        %3203 = vxpose.xlu0.b32.cont [6/16] %v3171, 128
        %3204 = vxpose.xlu0.b32.cont [7/16] %v3172, 128
        %3205 = vxpose.xlu0.b32.cont [8/16] %v3173, 128
        %3206 = vxpose.xlu0.b32.cont [9/16] %v3174, 128
        %3207 = vxpose.xlu0.b32.cont [10/16] %v3175, 128
        %3208 = vxpose.xlu0.b32.cont [11/16] %v3176, 128
        %3209 = vxpose.xlu0.b32.cont [12/16] %v3177, 128
        %3210 = vxpose.xlu0.b32.cont [13/16] %v3178, 128
        %3211 = vxpose.xlu0.b32.cont [14/16] %v3179, 128
        %3212 = vxpose.xlu0.b32.cont [15/16] %v3180, 128
        %3213 = vxpose.xlu0.b32.end [16/16] %v3181, 128
        %v3214 = vpop.trf.xlu0
        %v3215 = vpop.trf.xlu0
        %v3216 = vpop.trf.xlu0
        %v3217 = vpop.trf.xlu0
        %v3218 = vpop.trf.xlu0
        %v3219 = vpop.trf.xlu0
        %v3220 = vpop.trf.xlu0
        %v3221 = vpop.trf.xlu0
        %v3222 = vpop.trf.xlu0
        %v3223 = vpop.trf.xlu0
        %v3224 = vpop.trf.xlu0
        %v3225 = vpop.trf.xlu0
        %v3226 = vpop.trf.xlu0
        %v3227 = vpop.trf.xlu0
        %v3228 = vpop.trf.xlu0
        %v3229 = vpop.trf.xlu0
        %3230 = vxpose.xlu0.b32.start [1/16] %v3182, 128
        %3231 = vxpose.xlu0.b32.cont [2/16] %v3183, 128
        %3232 = vxpose.xlu0.b32.cont [3/16] %v3184, 128
        %3233 = vxpose.xlu0.b32.cont [4/16] %v3185, 128
        %3234 = vxpose.xlu0.b32.cont [5/16] %v3186, 128
        %3235 = vxpose.xlu0.b32.cont [6/16] %v3187, 128
        %3236 = vxpose.xlu0.b32.cont [7/16] %v3188, 128
        %3237 = vxpose.xlu0.b32.cont [8/16] %v3189, 128
        %3238 = vxpose.xlu0.b32.cont [9/16] %v3190, 128
        %3239 = vxpose.xlu0.b32.cont [10/16] %v3191, 128
        %3240 = vxpose.xlu0.b32.cont [11/16] %v3192, 128
        %3241 = vxpose.xlu0.b32.cont [12/16] %v3193, 128
        %3242 = vxpose.xlu0.b32.cont [13/16] %v3194, 128
        %3243 = vxpose.xlu0.b32.cont [14/16] %v3195, 128
        %3244 = vxpose.xlu0.b32.cont [15/16] %v3196, 128
        %3245 = vxpose.xlu0.b32.end [16/16] %v3197, 128
        %v3246 = vpop.trf.xlu0
        %v3247 = vpop.trf.xlu0
        %v3248 = vpop.trf.xlu0
        %v3249 = vpop.trf.xlu0
        %v3250 = vpop.trf.xlu0
        %v3251 = vpop.trf.xlu0
        %v3252 = vpop.trf.xlu0
        %v3253 = vpop.trf.xlu0
        %v3254 = vpop.trf.xlu0
        %v3255 = vpop.trf.xlu0
        %v3256 = vpop.trf.xlu0
        %v3257 = vpop.trf.xlu0
        %v3258 = vpop.trf.xlu0
        %v3259 = vpop.trf.xlu0
        %v3260 = vpop.trf.xlu0
        %v3261 = vpop.trf.xlu0
        %3262 = vst [vmem:[%s244 + $0x20] sm:$0xff] %v3214
        %3263 = vst [vmem:[%s244 + $0x28] sm:$0xff] %v3246
        %s3264 = sand.u32 %s159, 1
        %s3265 = scalar_lea.sflag [#allocation4], %s3264
        %s3266 = sand.u32 %s159, 1
        %s3267 = smul.addr %s3266, 48
        %s3268 = scalar_lea.vmem [#allocation3], %s3267
        // Predicated region
        $region45: #{tpu_custom_call.1} parent=43 // pred_check
          %p3269 = pneg %p169
        $region46: #{tpu_custom_call.1} parent=43 // pred_check_branch
          %3271 = sbr.rel (%p3269) target = $region48
        $region47: #{tpu_custom_call.1} parent=43 // pred_region
          %3273 = vsyncadd %s3265, 0
          %s3274 = smul.addr %s20, 6
          %s3275 = smul.addr %s3274, 8
          %s3276 = scalar_lea.hbm %s6, %s3275
          %s3277 = sshll.u32 %s3268, 4
          %s3278 = int_to_ptr.vmem [resolvable:$true] %s3277
          %s3279 = sshll.u32 %s3276, 4
          %s3280 = int_to_ptr.hbm [resolvable:$true] %s3279
          %3285 = dma.vmem_to_hbm [thread:$0]  %s3278, 768, %s3280, %s3265, 256, 256, 16
        $region48: #{tpu_custom_call.1} parent=43 // pred_fallthru
          _
      $region44: #{tpu_custom_call.1} parent=5 // pred_fallthru
        _
      %p3286 = scmp.le.s32.totalorder 2, %s15
      // Predicated region
      $region49: #{tpu_custom_call.1} parent=5 // pred_check
        %p3287 = pneg %p3286
      $region50: #{tpu_custom_call.1} parent=5 // pred_check_branch
        %3289 = sbr.rel (%p3287) target = $region52
      $region51: #{tpu_custom_call.1} parent=5 // pred_region
        %s3290 = ssub.s32 %s15, 2
        // Predicated region
        $region53: #{tpu_custom_call.1} parent=51 // pred_check
          %p3291 = pneg %p175
        $region54: #{tpu_custom_call.1} parent=51 // pred_check_branch
          %3293 = sbr.rel (%p3291) target = $region56
        $region55: #{tpu_custom_call.1} parent=51 // pred_region
          %s3294 = sand.u32 %s160, 1
          %s3295 = scalar_lea.sflag [#allocation4], %s3294
          %s3296 = sand.u32 %s160, 1
          %s3297 = smul.addr %s3296, 48
          %s3298 = scalar_lea.vmem [#allocation3], %s3297
          %3300 = dma.done %s3295, 768
        $region56: #{tpu_custom_call.1} parent=51 // pred_fallthru
          _
      $region52: #{tpu_custom_call.1} parent=5 // pred_fallthru
        _
    $region6: #{tpu_custom_call.1} parent=1 // loop_footer
      %s19 = sadd.s32 1, %s15
    $region7: #{tpu_custom_call.1} parent=1 // loop_footer_branch
      %14 = sbr.rel target = $region3
    $region8: #{tpu_custom_call.1} parent=1 // loop_exit
      _
    %3301 = vsyncpa [#allocation4], 1
    %s3302 = scalar_lea.sflag [#allocation4], 1
    %3303 = vsyncpa %s3302, 1

</llo_original>
